<compile_context>
chip_gen: v7x
topology: tpu7x:2x2x1
jax: 0.10.0
libtpu: 0.0.40
codegen_flags: <defaults>
</compile_context>

<pallas_src>
import jax
import jax.numpy as jnp
from jax.experimental import pallas as pl
from jax.experimental.pallas import tpu as pltpu

K = 8      # Conv1d kernel size
PAD = 4    # Conv1d padding (= K // 2)


# ----------------------------------------------------------------------------
# One fused Conv1d + BatchNorm(eval) + ReLU + MaxPool1d stage (in-kernel)
# ----------------------------------------------------------------------------
def _conv_bn_relu_pool(h, w_ref, scale_ref, shift_ref, y_sc):
    """h:         (L_in, C_in)     f32 value, channels-last
       w_ref:     (K*C_in, C_out)  bf16 ref, im2col-flattened (tap-major rows)
       scale_ref: (1, C_out)       f32, gamma / sqrt(running_var + eps)
       shift_ref: (1, C_out)       f32, beta - running_mean * scale
       y_sc:      (L_out, C_out)   f32 VMEM scratch (pre-pool activations)
       returns    (P, C_out)       f32, P = (L_out + 1)//2  (L_out = L_in + 1, odd)
    """
    L_in, C_in = h.shape
    L_out = L_in + 2 * PAD - K + 1          # = L_in + 1 (odd)
    P = (L_out + 1) // 2
    C_out = w_ref.shape[1]

    # Zero-pad the conv halo in VMEM (no wrapper-side jnp.pad / HBM copy).
    zeros = jnp.zeros((PAD, C_in), jnp.float32)
    h_pad = jnp.concatenate([zeros, h, zeros], axis=0)          # (L_in + 2*PAD, C_in)

    # im2col: one (L_out, K*C_in) x (K*C_in, C_out) MXU matmul (bf16 in, f32 acc).
    x_unf = jnp.concatenate([h_pad[j:j + L_out, :] for j in range(K)], axis=1)
    y = jnp.dot(x_unf.astype(jnp.bfloat16), w_ref[...],
                preferred_element_type=jnp.float32)             # (L_out, C_out)

    # BatchNorm (inference affine) + ReLU in f32.
    y = jnp.maximum(y * scale_ref[...] + shift_ref[...], 0.0)

    # MaxPool1d(k=2, s=2, pad=1): pooled[i] = max(y[2i-1], y[2i]); the -inf pad
    # at i=0 never wins because y >= 0.  Two stride-2 loads + one max (VPU).
    y_sc[...] = y
    even = y_sc[pl.ds(0, P, 2), :]                   # y[0], y[2], ..., y[2P-2]
    odd = y_sc[pl.ds(1, P - 1, 2), :]                # y[1], y[3], ..., y[2P-3]
    odd = jnp.concatenate([jnp.zeros((1, C_out), jnp.float32), odd], axis=0)
    return jnp.maximum(even, odd)


# ----------------------------------------------------------------------------
# Fully fused kernels (one batch element per grid step, "parallel" batch axis)
# ----------------------------------------------------------------------------
def _encoder_mlp_kernel(x_ref,
                        w1_ref, s1_ref, t1_ref,
                        w2_ref, s2_ref, t2_ref,
                        w3_ref, s3_ref, t3_ref,
                        wl_ref, bl_ref,
                        out_ref,
                        y1_sc, y2_sc, y3_sc):
    h = x_ref[...].astype(jnp.float32)                          # (L, C_in)
    h = _conv_bn_relu_pool(h, w1_ref, s1_ref, t1_ref, y1_sc)    # (P1, 32)
    h = _conv_bn_relu_pool(h, w2_ref, s2_ref, t2_ref, y2_sc)    # (P2, 64)
    h = _conv_bn_relu_pool(h, w3_ref, s3_ref, t3_ref, y3_sc)    # (P3, 128)

    # L-major flatten: place the P3 rows (each a full 128-lane group) side by
    # side along lanes.  torch's channel-major view(N,-1) ordering is folded
    # into the pre-permuted linear weight on the host.
    P3 = h.shape[0]
    feat = jnp.concatenate([h[l:l + 1, :] for l in range(P3)], axis=1)  # (1, P3*C3)
    out_ref[...] = (jnp.dot(feat.astype(jnp.bfloat16), wl_ref[...],
                            preferred_element_type=jnp.float32) + bl_ref[...])


def _encoder_feat_kernel(x_ref,
                         w1_ref, s1_ref, t1_ref,
                         w2_ref, s2_ref, t2_ref,
                         w3_ref, s3_ref, t3_ref,
                         out_ref,
                         y1_sc, y2_sc, y3_sc):
    # nn.Identity() head: emit channels-last conv features; wrapper re-orders.
    h = x_ref[...].astype(jnp.float32)
    h = _conv_bn_relu_pool(h, w1_ref, s1_ref, t1_ref, y1_sc)
    h = _conv_bn_relu_pool(h, w2_ref, s2_ref, t2_ref, y2_sc)
    h = _conv_bn_relu_pool(h, w3_ref, s3_ref, t3_ref, y3_sc)
    out_ref[...] = h                                             # (P3, C3)


# ----------------------------------------------------------------------------
# Wrapper (matches EpilepsyCnnEncoder.forward, eval mode)
# ----------------------------------------------------------------------------
def epilepsy_cnn_encoder(x_ncl, conv_params, W=None, b=None, eps=1e-5):
    """x_ncl: (N, C_in, L) as the torch module.  conv_params: 3 dicts with
    'w' (Cout, Cin, 8), 'gamma', 'beta', 'mean', 'var'.  W:(dim,3072)/b or
    None for the dim == 24*128 nn.Identity() case."""
    assert len(conv_params) == 3
    N, C_in, L = x_ncl.shape
    x_nlc = jnp.transpose(x_ncl, (0, 2, 1)).astype(jnp.float32)   # (N, L, C_in)

    in_specs = [pl.BlockSpec((None, L, C_in), lambda n: (n, 0, 0))]
    operands = [x_nlc]
    scratch_shapes = []

    L_cur = L
    for p in conv_params:
        C_out, C_in_s, K_s = p['w'].shape
        assert K_s == K
        L_out = L_cur + 2 * PAD - K + 1
        assert L_out % 2 == 1, "kernel assumes odd conv output length"
        P = (L_out + 1) // 2

        # im2col-flattened weight: rows ordered (tap j, channel ci) -> j*Cin+ci.
        w_flat = jnp.transpose(p['w'].astype(jnp.float32), (2, 1, 0)) \
                   .reshape(K * C_in_s, C_out).astype(jnp.bfloat16)
        inv_std = 1.0 / jnp.sqrt(p['var'].astype(jnp.float32) + eps)
        scale = (p['gamma'] * inv_std).reshape(1, C_out).astype(jnp.float32)
        shift = (p['beta'] - p['mean'] * p['gamma'] * inv_std) \
                  .reshape(1, C_out).astype(jnp.float32)

        operands += [w_flat, scale, shift]
        in_specs += [pl.BlockSpec((K * C_in_s, C_out), lambda n: (0, 0)),
                     pl.BlockSpec((1, C_out), lambda n: (0, 0)),
                     pl.BlockSpec((1, C_out), lambda n: (0, 0))]
        scratch_shapes.append(pltpu.VMEM((L_out, C_out), jnp.float32))
        L_cur = P

    P3, C3 = L_cur, conv_params[-1]['w'].shape[0]
    F = P3 * C3

    if W is None:                       # dim == 24 * 128 -> nn.Identity()
        out = pl.pallas_call(
            _encoder_feat_kernel,
            out_shape=jax.ShapeDtypeStruct((N, P3, C3), jnp.float32),
            grid_spec=pltpu.PrefetchScalarGridSpec(
                num_scalar_prefetch=0,
                grid=(N,),
                in_specs=in_specs,
                out_specs=pl.BlockSpec((None, P3, C3), lambda n: (n, 0, 0)),
                scratch_shapes=scratch_shapes),
            compiler_params=pltpu.CompilerParams(
                dimension_semantics=("parallel",)),
        )(*operands)
        # torch's out.view(N, -1) flattens channel-major.
        return jnp.transpose(out, (0, 2, 1)).reshape(N, -1)

    dim = W.shape[0]
    assert W.shape[1] == F
    # Fold torch's channel-major flatten into the weight:
    #   W_perm[l*C3 + c, d] = W[d, c*P3 + l]
    W_perm = jnp.transpose(W.astype(jnp.float32).reshape(dim, C3, P3), (2, 1, 0)) \
               .reshape(F, dim).astype(jnp.bfloat16)
    b_row = b.reshape(1, dim).astype(jnp.float32)
    operands += [W_perm, b_row]
    in_specs += [pl.BlockSpec((F, dim), lambda n: (0, 0)),
                 pl.BlockSpec((1, dim), lambda n: (0, 0))]

    out = pl.pallas_call(
        _encoder_mlp_kernel,
        out_shape=jax.ShapeDtypeStruct((N, 1, dim), jnp.float32),
        grid_spec=pltpu.PrefetchScalarGridSpec(
            num_scalar_prefetch=0,
            grid=(N,),
            in_specs=in_specs,
            out_specs=pl.BlockSpec((None, 1, dim), lambda n: (n, 0, 0)),
            scratch_shapes=scratch_shapes),
        compiler_params=pltpu.CompilerParams(
            dimension_semantics=("parallel",)),
    )(*operands)
    return out.reshape(N, dim)


# ----------------------------------------------------------------------------
# Pure-JAX reference (correctness check only)
# ----------------------------------------------------------------------------
def reference_forward(x_ncl, conv_params, W, b, eps=1e-5):
    hp = jax.lax.Precision.HIGHEST
    h = x_ncl.astype(jnp.float32)
    for p in conv_params:
        h = jax.lax.conv_general_dilated(
            h, p['w'].astype(jnp.float32), window_strides=(1,), padding=[(4, 4)],
            dimension_numbers=('NCH', 'OIH', 'NCH'), precision=hp)
        inv_std = 1.0 / jnp.sqrt(p['var'] + eps)
        scale = (p['gamma'] * inv_std)[None, :, None]
        shift = (p['beta'] - p['mean'] * p['gamma'] * inv_std)[None, :, None]
        h = jnp.maximum(h * scale + shift, 0.0)
        h = jax.lax.reduce_window(h, jnp.float32(-jnp.inf), jax.lax.max,
                                  (1, 1, 2), (1, 1, 2),
                                  [(0, 0), (0, 0), (1, 1)])
    feat = h.reshape(h.shape[0], -1)
    if W is None:
        return feat
    return jnp.dot(feat, W.T, precision=hp) + b[None, :]


if __name__ == "__main__":
    # L=178 (standard epilepsy EEG window) -> flatten = 24 * 128 = 3072,
    # as required by nn.Linear(3072, dim).
    N, C_in, L, dim = 2, 1, 178, 128

    key = jax.random.PRNGKey(0)
    k_x, kk = jax.random.split(key)
    x = jax.random.normal(k_x, (N, C_in, L), jnp.float32)

    conv_params = []
    for (cin, cout) in [(C_in, 32), (32, 64), (64, 128)]:
        kk, kw, kg, kb, km, kv = jax.random.split(kk, 6)
        conv_params.append(dict(
            w=jax.random.normal(kw, (cout, cin, 8), jnp.float32) / jnp.sqrt(cin * 8.0),
            gamma=1.0 + 0.1 * jax.random.normal(kg, (cout,), jnp.float32),
            beta=0.1 * jax.random.normal(kb, (cout,), jnp.float32),
            mean=0.1 * jax.random.normal(km, (cout,), jnp.float32),
            var=0.5 + jax.random.uniform(kv, (cout,), jnp.float32),
        ))
    kk, kw, kb = jax.random.split(kk, 3)
    W = jax.random.normal(kw, (dim, 3072), jnp.float32) / jnp.sqrt(3072.0)
    b = 0.01 * jax.random.normal(kb, (dim,), jnp.float32)

    out = jax.block_until_ready(epilepsy_cnn_encoder(x, conv_params, W, b))
    assert out.shape == (N, dim), out.shape

    ref = reference_forward(x, conv_params, W, b)
    rel_err = float(jnp.max(jnp.abs(out - ref)) / (jnp.max(jnp.abs(ref)) + 1e-6))
    assert rel_err < 5e-2, f"mismatch vs reference: rel_err={rel_err}"

    print("KERNEL_OK")
</pallas_src>

<mosaic_0001>
module attributes {stable_mosaic.version = 11 : i64} {
  func.func @_encoder_mlp_kernel(%arg0: i32, %arg1: memref<1x178x1xf32, #tpu.memory_space<vmem>>, %arg2: memref<8x32xbf16, #tpu.memory_space<vmem>>, %arg3: memref<1x32xf32, #tpu.memory_space<vmem>>, %arg4: memref<1x32xf32, #tpu.memory_space<vmem>>, %arg5: memref<256x64xbf16, #tpu.memory_space<vmem>>, %arg6: memref<1x64xf32, #tpu.memory_space<vmem>>, %arg7: memref<1x64xf32, #tpu.memory_space<vmem>>, %arg8: memref<512x128xbf16, #tpu.memory_space<vmem>>, %arg9: memref<1x128xf32, #tpu.memory_space<vmem>>, %arg10: memref<1x128xf32, #tpu.memory_space<vmem>>, %arg11: memref<3072x128xbf16, #tpu.memory_space<vmem>>, %arg12: memref<1x128xf32, #tpu.memory_space<vmem>>, %arg13: memref<1x1x128xf32, #tpu.memory_space<vmem>>, %arg14: memref<179x32xf32, #tpu.memory_space<vmem>>, %arg15: memref<91x64xf32, #tpu.memory_space<vmem>>, %arg16: memref<47x128xf32, #tpu.memory_space<vmem>>) attributes {dimension_semantics = [#tpu.dimension_semantics<parallel>], iteration_bounds = array<i64: 2>, scalar_prefetch = 0 : i64, scratch_operands = 3 : i64, tpu.core_type = #tpu.core_type<tc>, window_params = [{transform_indices = @transform_0, window_bounds = array<i64: 1, 178, 1>}, {pipeline_mode = #tpu.pipeline_mode<synchronous>, transform_indices = @transform_1, window_bounds = array<i64: 8, 32>}, {pipeline_mode = #tpu.pipeline_mode<synchronous>, transform_indices = @transform_2, window_bounds = array<i64: 1, 32>}, {pipeline_mode = #tpu.pipeline_mode<synchronous>, transform_indices = @transform_3, window_bounds = array<i64: 1, 32>}, {pipeline_mode = #tpu.pipeline_mode<synchronous>, transform_indices = @transform_4, window_bounds = array<i64: 256, 64>}, {pipeline_mode = #tpu.pipeline_mode<synchronous>, transform_indices = @transform_5, window_bounds = array<i64: 1, 64>}, {pipeline_mode = #tpu.pipeline_mode<synchronous>, transform_indices = @transform_6, window_bounds = array<i64: 1, 64>}, {pipeline_mode = #tpu.pipeline_mode<synchronous>, transform_indices = @transform_7, window_bounds = array<i64: 512, 128>}, {pipeline_mode = #tpu.pipeline_mode<synchronous>, transform_indices = @transform_8, window_bounds = array<i64: 1, 128>}, {pipeline_mode = #tpu.pipeline_mode<synchronous>, transform_indices = @transform_9, window_bounds = array<i64: 1, 128>}, {pipeline_mode = #tpu.pipeline_mode<synchronous>, transform_indices = @transform_10, window_bounds = array<i64: 3072, 128>}, {pipeline_mode = #tpu.pipeline_mode<synchronous>, transform_indices = @transform_11, window_bounds = array<i64: 1, 128>}, {transform_indices = @transform_12, window_bounds = array<i64: 1, 1, 128>}]} {
    %c0 = arith.constant 0 : index
    %c0_0 = arith.constant 0 : index
    %c0_1 = arith.constant 0 : index
    %0 = vector.load %arg1[%c0, %c0_0, %c0_1] : memref<1x178x1xf32, #tpu.memory_space<vmem>>, vector<1x178x1xf32>
    %1 = vector.shape_cast %0 : vector<1x178x1xf32> to vector<178x1xf32>
    %cst = arith.constant 0.000000e+00 : f32
    %2 = vector.broadcast %cst : f32 to vector<4x1xf32>
    %3 = tpu.concatenate %2, %1, %2 in 0 : vector<4x1xf32>, vector<178x1xf32>, vector<4x1xf32> -> vector<186x1xf32>
    %4 = vector.extract_strided_slice %3 {offsets = [0, 0], sizes = [179, 1], strides = [1, 1]} : vector<186x1xf32> to vector<179x1xf32>
    %5 = vector.extract_strided_slice %3 {offsets = [1, 0], sizes = [179, 1], strides = [1, 1]} : vector<186x1xf32> to vector<179x1xf32>
    %6 = vector.extract_strided_slice %3 {offsets = [2, 0], sizes = [179, 1], strides = [1, 1]} : vector<186x1xf32> to vector<179x1xf32>
    %7 = vector.extract_strided_slice %3 {offsets = [3, 0], sizes = [179, 1], strides = [1, 1]} : vector<186x1xf32> to vector<179x1xf32>
    %8 = vector.extract_strided_slice %3 {offsets = [4, 0], sizes = [179, 1], strides = [1, 1]} : vector<186x1xf32> to vector<179x1xf32>
    %9 = vector.extract_strided_slice %3 {offsets = [5, 0], sizes = [179, 1], strides = [1, 1]} : vector<186x1xf32> to vector<179x1xf32>
    %10 = vector.extract_strided_slice %3 {offsets = [6, 0], sizes = [179, 1], strides = [1, 1]} : vector<186x1xf32> to vector<179x1xf32>
    %11 = vector.extract_strided_slice %3 {offsets = [7, 0], sizes = [179, 1], strides = [1, 1]} : vector<186x1xf32> to vector<179x1xf32>
    %12 = tpu.concatenate %4, %5, %6, %7, %8, %9, %10, %11 in 1 : vector<179x1xf32>, vector<179x1xf32>, vector<179x1xf32>, vector<179x1xf32>, vector<179x1xf32>, vector<179x1xf32>, vector<179x1xf32>, vector<179x1xf32> -> vector<179x8xf32>
    %13 = arith.truncf %12 : vector<179x8xf32> to vector<179x8xbf16>
    %c0_2 = arith.constant 0 : index
    %c0_3 = arith.constant 0 : index
    %14 = vector.load %arg2[%c0_2, %c0_3] : memref<8x32xbf16, #tpu.memory_space<vmem>>, vector<8x32xbf16>
    %cst_4 = arith.constant dense<0.000000e+00> : vector<179x32xf32>
    %15 = tpu.matmul %13, %14, %cst_4 {dimension_numbers = #tpu.dot_dimension_numbers<[1], [0], [0], [1], [0, 0, 1, 1], [], []>} : vector<179x8xbf16>, vector<8x32xbf16>, vector<179x32xf32> -> vector<179x32xf32>
    %c0_5 = arith.constant 0 : index
    %c0_6 = arith.constant 0 : index
    %16 = vector.load %arg3[%c0_5, %c0_6] : memref<1x32xf32, #tpu.memory_space<vmem>>, vector<1x32xf32>
    %17 = vector.broadcast %16 : vector<1x32xf32> to vector<179x32xf32>
    %18 = arith.mulf %15, %17 : vector<179x32xf32>
    %c0_7 = arith.constant 0 : index
    %c0_8 = arith.constant 0 : index
    %19 = vector.load %arg4[%c0_7, %c0_8] : memref<1x32xf32, #tpu.memory_space<vmem>>, vector<1x32xf32>
    %20 = vector.broadcast %19 : vector<1x32xf32> to vector<179x32xf32>
    %21 = arith.addf %18, %20 : vector<179x32xf32>
    %cst_9 = arith.constant 0.000000e+00 : f32
    %22 = vector.broadcast %cst_9 : f32 to vector<179x32xf32>
    %23 = arith.maximumf %21, %22 : vector<179x32xf32>
    %c0_10 = arith.constant 0 : index
    %c0_11 = arith.constant 0 : index
    %24 = vector.load %arg14[%c0_10, %c0_11] : memref<179x32xf32, #tpu.memory_space<vmem>>, vector<179x32xf32>
    tpu.vector_store %arg14[%c0_10, %c0_11], %23 {strides = array<i32>} : memref<179x32xf32, #tpu.memory_space<vmem>>, vector<179x32xf32>,
    %c0_12 = arith.constant 0 : index
    %c0_13 = arith.constant 0 : index
    %25 = tpu.strided_load %arg14[%c0_12, %c0_13] {strides = array<i32: 2, 1>} : memref<179x32xf32, #tpu.memory_space<vmem>>, vector<90x32xf32>
    %c1 = arith.constant 1 : index
    %c0_14 = arith.constant 0 : index
    %26 = tpu.strided_load %arg14[%c1, %c0_14] {strides = array<i32: 2, 1>} : memref<179x32xf32, #tpu.memory_space<vmem>>, vector<89x32xf32>
    %cst_15 = arith.constant 0.000000e+00 : f32
    %27 = vector.broadcast %cst_15 : f32 to vector<1x32xf32>
    %28 = tpu.concatenate %27, %26 in 0 : vector<1x32xf32>, vector<89x32xf32> -> vector<90x32xf32>
    %29 = arith.maximumf %25, %28 : vector<90x32xf32>
    %cst_16 = arith.constant 0.000000e+00 : f32
    %30 = vector.broadcast %cst_16 : f32 to vector<4x32xf32>
    %31 = tpu.concatenate %30, %29, %30 in 0 : vector<4x32xf32>, vector<90x32xf32>, vector<4x32xf32> -> vector<98x32xf32>
    %32 = vector.extract_strided_slice %31 {offsets = [0, 0], sizes = [91, 32], strides = [1, 1]} : vector<98x32xf32> to vector<91x32xf32>
    %33 = vector.extract_strided_slice %31 {offsets = [1, 0], sizes = [91, 32], strides = [1, 1]} : vector<98x32xf32> to vector<91x32xf32>
    %34 = vector.extract_strided_slice %31 {offsets = [2, 0], sizes = [91, 32], strides = [1, 1]} : vector<98x32xf32> to vector<91x32xf32>
    %35 = vector.extract_strided_slice %31 {offsets = [3, 0], sizes = [91, 32], strides = [1, 1]} : vector<98x32xf32> to vector<91x32xf32>
    %36 = vector.extract_strided_slice %31 {offsets = [4, 0], sizes = [91, 32], strides = [1, 1]} : vector<98x32xf32> to vector<91x32xf32>
    %37 = vector.extract_strided_slice %31 {offsets = [5, 0], sizes = [91, 32], strides = [1, 1]} : vector<98x32xf32> to vector<91x32xf32>
    %38 = vector.extract_strided_slice %31 {offsets = [6, 0], sizes = [91, 32], strides = [1, 1]} : vector<98x32xf32> to vector<91x32xf32>
    %39 = vector.extract_strided_slice %31 {offsets = [7, 0], sizes = [91, 32], strides = [1, 1]} : vector<98x32xf32> to vector<91x32xf32>
    %40 = tpu.concatenate %32, %33, %34, %35, %36, %37, %38, %39 in 1 : vector<91x32xf32>, vector<91x32xf32>, vector<91x32xf32>, vector<91x32xf32>, vector<91x32xf32>, vector<91x32xf32>, vector<91x32xf32>, vector<91x32xf32> -> vector<91x256xf32>
    %41 = arith.truncf %40 : vector<91x256xf32> to vector<91x256xbf16>
    %c0_17 = arith.constant 0 : index
    %c0_18 = arith.constant 0 : index
    %42 = vector.load %arg5[%c0_17, %c0_18] : memref<256x64xbf16, #tpu.memory_space<vmem>>, vector<256x64xbf16>
    %cst_19 = arith.constant dense<0.000000e+00> : vector<91x64xf32>
    %43 = tpu.matmul %41, %42, %cst_19 {dimension_numbers = #tpu.dot_dimension_numbers<[1], [0], [0], [1], [0, 0, 1, 1], [], []>} : vector<91x256xbf16>, vector<256x64xbf16>, vector<91x64xf32> -> vector<91x64xf32>
    %c0_20 = arith.constant 0 : index
    %c0_21 = arith.constant 0 : index
    %44 = vector.load %arg6[%c0_20, %c0_21] : memref<1x64xf32, #tpu.memory_space<vmem>>, vector<1x64xf32>
    %45 = vector.broadcast %44 : vector<1x64xf32> to vector<91x64xf32>
    %46 = arith.mulf %43, %45 : vector<91x64xf32>
    %c0_22 = arith.constant 0 : index
    %c0_23 = arith.constant 0 : index
    %47 = vector.load %arg7[%c0_22, %c0_23] : memref<1x64xf32, #tpu.memory_space<vmem>>, vector<1x64xf32>
    %48 = vector.broadcast %47 : vector<1x64xf32> to vector<91x64xf32>
    %49 = arith.addf %46, %48 : vector<91x64xf32>
    %cst_24 = arith.constant 0.000000e+00 : f32
    %50 = vector.broadcast %cst_24 : f32 to vector<91x64xf32>
    %51 = arith.maximumf %49, %50 : vector<91x64xf32>
    %c0_25 = arith.constant 0 : index
    %c0_26 = arith.constant 0 : index
    %52 = vector.load %arg15[%c0_25, %c0_26] : memref<91x64xf32, #tpu.memory_space<vmem>>, vector<91x64xf32>
    tpu.vector_store %arg15[%c0_25, %c0_26], %51 {strides = array<i32>} : memref<91x64xf32, #tpu.memory_space<vmem>>, vector<91x64xf32>,
    %c0_27 = arith.constant 0 : index
    %c0_28 = arith.constant 0 : index
    %53 = tpu.strided_load %arg15[%c0_27, %c0_28] {strides = array<i32: 2, 1>} : memref<91x64xf32, #tpu.memory_space<vmem>>, vector<46x64xf32>
    %c1_29 = arith.constant 1 : index
    %c0_30 = arith.constant 0 : index
    %54 = tpu.strided_load %arg15[%c1_29, %c0_30] {strides = array<i32: 2, 1>} : memref<91x64xf32, #tpu.memory_space<vmem>>, vector<45x64xf32>
    %cst_31 = arith.constant 0.000000e+00 : f32
    %55 = vector.broadcast %cst_31 : f32 to vector<1x64xf32>
    %56 = tpu.concatenate %55, %54 in 0 : vector<1x64xf32>, vector<45x64xf32> -> vector<46x64xf32>
    %57 = arith.maximumf %53, %56 : vector<46x64xf32>
    %cst_32 = arith.constant 0.000000e+00 : f32
    %58 = vector.broadcast %cst_32 : f32 to vector<4x64xf32>
    %59 = tpu.concatenate %58, %57, %58 in 0 : vector<4x64xf32>, vector<46x64xf32>, vector<4x64xf32> -> vector<54x64xf32>
    %60 = vector.extract_strided_slice %59 {offsets = [0, 0], sizes = [47, 64], strides = [1, 1]} : vector<54x64xf32> to vector<47x64xf32>
    %61 = vector.extract_strided_slice %59 {offsets = [1, 0], sizes = [47, 64], strides = [1, 1]} : vector<54x64xf32> to vector<47x64xf32>
    %62 = vector.extract_strided_slice %59 {offsets = [2, 0], sizes = [47, 64], strides = [1, 1]} : vector<54x64xf32> to vector<47x64xf32>
    %63 = vector.extract_strided_slice %59 {offsets = [3, 0], sizes = [47, 64], strides = [1, 1]} : vector<54x64xf32> to vector<47x64xf32>
    %64 = vector.extract_strided_slice %59 {offsets = [4, 0], sizes = [47, 64], strides = [1, 1]} : vector<54x64xf32> to vector<47x64xf32>
    %65 = vector.extract_strided_slice %59 {offsets = [5, 0], sizes = [47, 64], strides = [1, 1]} : vector<54x64xf32> to vector<47x64xf32>
    %66 = vector.extract_strided_slice %59 {offsets = [6, 0], sizes = [47, 64], strides = [1, 1]} : vector<54x64xf32> to vector<47x64xf32>
    %67 = vector.extract_strided_slice %59 {offsets = [7, 0], sizes = [47, 64], strides = [1, 1]} : vector<54x64xf32> to vector<47x64xf32>
    %68 = tpu.concatenate %60, %61, %62, %63, %64, %65, %66, %67 in 1 : vector<47x64xf32>, vector<47x64xf32>, vector<47x64xf32>, vector<47x64xf32>, vector<47x64xf32>, vector<47x64xf32>, vector<47x64xf32>, vector<47x64xf32> -> vector<47x512xf32>
    %69 = arith.truncf %68 : vector<47x512xf32> to vector<47x512xbf16>
    %c0_33 = arith.constant 0 : index
    %c0_34 = arith.constant 0 : index
    %70 = vector.load %arg8[%c0_33, %c0_34] : memref<512x128xbf16, #tpu.memory_space<vmem>>, vector<512x128xbf16>
    %cst_35 = arith.constant dense<0.000000e+00> : vector<47x128xf32>
    %71 = tpu.matmul %69, %70, %cst_35 {dimension_numbers = #tpu.dot_dimension_numbers<[1], [0], [0], [1], [0, 0, 1, 1], [], []>} : vector<47x512xbf16>, vector<512x128xbf16>, vector<47x128xf32> -> vector<47x128xf32>
    %c0_36 = arith.constant 0 : index
    %c0_37 = arith.constant 0 : index
    %72 = vector.load %arg9[%c0_36, %c0_37] : memref<1x128xf32, #tpu.memory_space<vmem>>, vector<1x128xf32>
    %73 = vector.broadcast %72 : vector<1x128xf32> to vector<47x128xf32>
    %74 = arith.mulf %71, %73 : vector<47x128xf32>
    %c0_38 = arith.constant 0 : index
    %c0_39 = arith.constant 0 : index
    %75 = vector.load %arg10[%c0_38, %c0_39] : memref<1x128xf32, #tpu.memory_space<vmem>>, vector<1x128xf32>
    %76 = vector.broadcast %75 : vector<1x128xf32> to vector<47x128xf32>
    %77 = arith.addf %74, %76 : vector<47x128xf32>
    %cst_40 = arith.constant 0.000000e+00 : f32
    %78 = vector.broadcast %cst_40 : f32 to vector<47x128xf32>
    %79 = arith.maximumf %77, %78 : vector<47x128xf32>
    %c0_41 = arith.constant 0 : index
    %c0_42 = arith.constant 0 : index
    %80 = vector.load %arg16[%c0_41, %c0_42] : memref<47x128xf32, #tpu.memory_space<vmem>>, vector<47x128xf32>
    tpu.vector_store %arg16[%c0_41, %c0_42], %79 {strides = array<i32>} : memref<47x128xf32, #tpu.memory_space<vmem>>, vector<47x128xf32>,
    %c0_43 = arith.constant 0 : index
    %c0_44 = arith.constant 0 : index
    %81 = tpu.strided_load %arg16[%c0_43, %c0_44] {strides = array<i32: 2, 1>} : memref<47x128xf32, #tpu.memory_space<vmem>>, vector<24x128xf32>
    %c1_45 = arith.constant 1 : index
    %c0_46 = arith.constant 0 : index
    %82 = tpu.strided_load %arg16[%c1_45, %c0_46] {strides = array<i32: 2, 1>} : memref<47x128xf32, #tpu.memory_space<vmem>>, vector<23x128xf32>
    %cst_47 = arith.constant 0.000000e+00 : f32
    %83 = vector.broadcast %cst_47 : f32 to vector<1x128xf32>
    %84 = tpu.concatenate %83, %82 in 0 : vector<1x128xf32>, vector<23x128xf32> -> vector<24x128xf32>
    %85 = arith.maximumf %81, %84 : vector<24x128xf32>
    %86 = vector.extract_strided_slice %85 {offsets = [0, 0], sizes = [1, 128], strides = [1, 1]} : vector<24x128xf32> to vector<1x128xf32>
    %87 = vector.extract_strided_slice %85 {offsets = [1, 0], sizes = [1, 128], strides = [1, 1]} : vector<24x128xf32> to vector<1x128xf32>
    %88 = vector.extract_strided_slice %85 {offsets = [2, 0], sizes = [1, 128], strides = [1, 1]} : vector<24x128xf32> to vector<1x128xf32>
    %89 = vector.extract_strided_slice %85 {offsets = [3, 0], sizes = [1, 128], strides = [1, 1]} : vector<24x128xf32> to vector<1x128xf32>
    %90 = vector.extract_strided_slice %85 {offsets = [4, 0], sizes = [1, 128], strides = [1, 1]} : vector<24x128xf32> to vector<1x128xf32>
    %91 = vector.extract_strided_slice %85 {offsets = [5, 0], sizes = [1, 128], strides = [1, 1]} : vector<24x128xf32> to vector<1x128xf32>
    %92 = vector.extract_strided_slice %85 {offsets = [6, 0], sizes = [1, 128], strides = [1, 1]} : vector<24x128xf32> to vector<1x128xf32>
    %93 = vector.extract_strided_slice %85 {offsets = [7, 0], sizes = [1, 128], strides = [1, 1]} : vector<24x128xf32> to vector<1x128xf32>
    %94 = vector.extract_strided_slice %85 {offsets = [8, 0], sizes = [1, 128], strides = [1, 1]} : vector<24x128xf32> to vector<1x128xf32>
    %95 = vector.extract_strided_slice %85 {offsets = [9, 0], sizes = [1, 128], strides = [1, 1]} : vector<24x128xf32> to vector<1x128xf32>
    %96 = vector.extract_strided_slice %85 {offsets = [10, 0], sizes = [1, 128], strides = [1, 1]} : vector<24x128xf32> to vector<1x128xf32>
    %97 = vector.extract_strided_slice %85 {offsets = [11, 0], sizes = [1, 128], strides = [1, 1]} : vector<24x128xf32> to vector<1x128xf32>
    %98 = vector.extract_strided_slice %85 {offsets = [12, 0], sizes = [1, 128], strides = [1, 1]} : vector<24x128xf32> to vector<1x128xf32>
    %99 = vector.extract_strided_slice %85 {offsets = [13, 0], sizes = [1, 128], strides = [1, 1]} : vector<24x128xf32> to vector<1x128xf32>
    %100 = vector.extract_strided_slice %85 {offsets = [14, 0], sizes = [1, 128], strides = [1, 1]} : vector<24x128xf32> to vector<1x128xf32>
    %101 = vector.extract_strided_slice %85 {offsets = [15, 0], sizes = [1, 128], strides = [1, 1]} : vector<24x128xf32> to vector<1x128xf32>
    %102 = vector.extract_strided_slice %85 {offsets = [16, 0], sizes = [1, 128], strides = [1, 1]} : vector<24x128xf32> to vector<1x128xf32>
    %103 = vector.extract_strided_slice %85 {offsets = [17, 0], sizes = [1, 128], strides = [1, 1]} : vector<24x128xf32> to vector<1x128xf32>
    %104 = vector.extract_strided_slice %85 {offsets = [18, 0], sizes = [1, 128], strides = [1, 1]} : vector<24x128xf32> to vector<1x128xf32>
    %105 = vector.extract_strided_slice %85 {offsets = [19, 0], sizes = [1, 128], strides = [1, 1]} : vector<24x128xf32> to vector<1x128xf32>
    %106 = vector.extract_strided_slice %85 {offsets = [20, 0], sizes = [1, 128], strides = [1, 1]} : vector<24x128xf32> to vector<1x128xf32>
    %107 = vector.extract_strided_slice %85 {offsets = [21, 0], sizes = [1, 128], strides = [1, 1]} : vector<24x128xf32> to vector<1x128xf32>
    %108 = vector.extract_strided_slice %85 {offsets = [22, 0], sizes = [1, 128], strides = [1, 1]} : vector<24x128xf32> to vector<1x128xf32>
    %109 = vector.extract_strided_slice %85 {offsets = [23, 0], sizes = [1, 128], strides = [1, 1]} : vector<24x128xf32> to vector<1x128xf32>
    %110 = tpu.concatenate %86, %87, %88, %89, %90, %91, %92, %93, %94, %95, %96, %97, %98, %99, %100, %101 in 1 : vector<1x128xf32>, vector<1x128xf32>, vector<1x128xf32>, vector<1x128xf32>, vector<1x128xf32>, vector<1x128xf32>, vector<1x128xf32>, vector<1x128xf32>, vector<1x128xf32>, vector<1x128xf32>, vector<1x128xf32>, vector<1x128xf32>, vector<1x128xf32>, vector<1x128xf32>, vector<1x128xf32>, vector<1x128xf32> -> vector<1x2048xf32>
    %111 = tpu.concatenate %102, %103, %104, %105, %106, %107, %108, %109 in 1 : vector<1x128xf32>, vector<1x128xf32>, vector<1x128xf32>, vector<1x128xf32>, vector<1x128xf32>, vector<1x128xf32>, vector<1x128xf32>, vector<1x128xf32> -> vector<1x1024xf32>
    %112 = tpu.concatenate %110, %111 in 1 : vector<1x2048xf32>, vector<1x1024xf32> -> vector<1x3072xf32>
    %113 = arith.truncf %112 : vector<1x3072xf32> to vector<1x3072xbf16>
    %c0_48 = arith.constant 0 : index
    %c0_49 = arith.constant 0 : index
    %114 = vector.load %arg11[%c0_48, %c0_49] : memref<3072x128xbf16, #tpu.memory_space<vmem>>, vector<3072x128xbf16>
    %cst_50 = arith.constant dense<0.000000e+00> : vector<1x128xf32>
    %115 = tpu.matmul %113, %114, %cst_50 {dimension_numbers = #tpu.dot_dimension_numbers<[1], [0], [0], [1], [0, 0, 1, 1], [], []>} : vector<1x3072xbf16>, vector<3072x128xbf16>, vector<1x128xf32> -> vector<1x128xf32>
    %c0_51 = arith.constant 0 : index
    %c0_52 = arith.constant 0 : index
    %116 = vector.load %arg12[%c0_51, %c0_52] : memref<1x128xf32, #tpu.memory_space<vmem>>, vector<1x128xf32>
    %117 = arith.addf %115, %116 : vector<1x128xf32>
    %c0_53 = arith.constant 0 : index
    %c0_54 = arith.constant 0 : index
    %c0_55 = arith.constant 0 : index
    %118 = vector.load %arg13[%c0_53, %c0_54, %c0_55] : memref<1x1x128xf32, #tpu.memory_space<vmem>>, vector<1x1x128xf32>
    %119 = vector.shape_cast %118 : vector<1x1x128xf32> to vector<1x128xf32>
    %120 = vector.shape_cast %117 : vector<1x128xf32> to vector<1x1x128xf32>
    tpu.vector_store %arg13[%c0_53, %c0_54, %c0_55], %120 {strides = array<i32>} : memref<1x1x128xf32, #tpu.memory_space<vmem>>, vector<1x1x128xf32>,
    return
  }
  func.func @transform_0(%arg0: i32) -> (i32, i32, i32) {
    %c0_i32 = arith.constant 0 : i32
    %c0_i32_0 = arith.constant 0 : i32
    %c0_i32_1 = arith.constant 0 : i32
    return %arg0, %c0_i32, %c0_i32_0 : i32, i32, i32
  }
  func.func @transform_1(%arg0: i32) -> (i32, i32) {
    %c0_i32 = arith.constant 0 : i32
    %c0_i32_0 = arith.constant 0 : i32
    %c0_i32_1 = arith.constant 0 : i32
    return %c0_i32, %c0_i32_0 : i32, i32
  }
  func.func @transform_2(%arg0: i32) -> (i32, i32) {
    %c0_i32 = arith.constant 0 : i32
    %c0_i32_0 = arith.constant 0 : i32
    %c0_i32_1 = arith.constant 0 : i32
    return %c0_i32, %c0_i32_0 : i32, i32
  }
  func.func @transform_3(%arg0: i32) -> (i32, i32) {
    %c0_i32 = arith.constant 0 : i32
    %c0_i32_0 = arith.constant 0 : i32
    %c0_i32_1 = arith.constant 0 : i32
    return %c0_i32, %c0_i32_0 : i32, i32
  }
  func.func @transform_4(%arg0: i32) -> (i32, i32) {
    %c0_i32 = arith.constant 0 : i32
    %c0_i32_0 = arith.constant 0 : i32
    %c0_i32_1 = arith.constant 0 : i32
    return %c0_i32, %c0_i32_0 : i32, i32
  }
  func.func @transform_5(%arg0: i32) -> (i32, i32) {
    %c0_i32 = arith.constant 0 : i32
    %c0_i32_0 = arith.constant 0 : i32
    %c0_i32_1 = arith.constant 0 : i32
    return %c0_i32, %c0_i32_0 : i32, i32
  }
  func.func @transform_6(%arg0: i32) -> (i32, i32) {
    %c0_i32 = arith.constant 0 : i32
    %c0_i32_0 = arith.constant 0 : i32
    %c0_i32_1 = arith.constant 0 : i32
    return %c0_i32, %c0_i32_0 : i32, i32
  }
  func.func @transform_7(%arg0: i32) -> (i32, i32) {
    %c0_i32 = arith.constant 0 : i32
    %c0_i32_0 = arith.constant 0 : i32
    %c0_i32_1 = arith.constant 0 : i32
    return %c0_i32, %c0_i32_0 : i32, i32
  }
  func.func @transform_8(%arg0: i32) -> (i32, i32) {
    %c0_i32 = arith.constant 0 : i32
    %c0_i32_0 = arith.constant 0 : i32
    %c0_i32_1 = arith.constant 0 : i32
    return %c0_i32, %c0_i32_0 : i32, i32
  }
  func.func @transform_9(%arg0: i32) -> (i32, i32) {
    %c0_i32 = arith.constant 0 : i32
    %c0_i32_0 = arith.constant 0 : i32
    %c0_i32_1 = arith.constant 0 : i32
    return %c0_i32, %c0_i32_0 : i32, i32
  }
  func.func @transform_10(%arg0: i32) -> (i32, i32) {
    %c0_i32 = arith.constant 0 : i32
    %c0_i32_0 = arith.constant 0 : i32
    %c0_i32_1 = arith.constant 0 : i32
    return %c0_i32, %c0_i32_0 : i32, i32
  }
  func.func @transform_11(%arg0: i32) -> (i32, i32) {
    %c0_i32 = arith.constant 0 : i32
    %c0_i32_0 = arith.constant 0 : i32
    %c0_i32_1 = arith.constant 0 : i32
    return %c0_i32, %c0_i32_0 : i32, i32
  }
  func.func @transform_12(%arg0: i32) -> (i32, i32, i32) {
    %c0_i32 = arith.constant 0 : i32
    %c0_i32_0 = arith.constant 0 : i32
    %c0_i32_1 = arith.constant 0 : i32
    return %arg0, %c0_i32, %c0_i32_0 : i32, i32, i32
  }
}

</mosaic_0001>

<llo_original>
// kernel: tpu_custom_call.1
$region0: #{tpu_custom_call.1}
  #allocation0 [shape = 'u32[]', space=smem, size = 0x4, offset = 0x4, fixed_abs, tag = 'smem constant byte address 0x4 - core index']
  #allocation1 [shape = 'u32[144,128]{1,0:T(1,128)}', space=vmem, size = 0x12000, scoped, tag = 'internal scratch']
  #allocation2 [shape = 'f32[179,32]{1,0:T(8,128)}', space=vmem, size = 0x17000, scoped, tag = 'scratch operand']
  #allocation3 [shape = 'f32[91,64]{1,0:T(8,128)}', space=vmem, size = 0xc000, scoped, tag = 'scratch operand']
  #allocation4 [shape = 'f32[47,128]{1,0:T(8,128)}', space=vmem, size = 0x6000, scoped, tag = 'scratch operand']
  %s0 = inlined_call_operand.vmem [shape: f32[2,178,1], index: 0, kind: input, shape index: {}]
  %s1 = inlined_call_operand.vmem [shape: bf16[8,32], index: 1, kind: input, shape index: {}]
  %s2 = inlined_call_operand.vmem [shape: f32[1,32], index: 2, kind: input, shape index: {}]
  %s3 = inlined_call_operand.vmem [shape: f32[1,32], index: 3, kind: input, shape index: {}]
  %s4 = inlined_call_operand.vmem [shape: bf16[256,64], index: 4, kind: input, shape index: {}]
  %s5 = inlined_call_operand.vmem [shape: f32[1,64], index: 5, kind: input, shape index: {}]
  %s6 = inlined_call_operand.vmem [shape: f32[1,64], index: 6, kind: input, shape index: {}]
  %s7 = inlined_call_operand.vmem [shape: bf16[512,128], index: 7, kind: input, shape index: {}]
  %s8 = inlined_call_operand.vmem [shape: f32[1,128], index: 8, kind: input, shape index: {}]
  %s9 = inlined_call_operand.vmem [shape: f32[1,128], index: 9, kind: input, shape index: {}]
  %s10 = inlined_call_operand.hbm [shape: bf16[3072,128], index: 10, kind: input, shape index: {}]
  %s11 = inlined_call_operand.vmem [shape: f32[1,128], index: 11, kind: input, shape index: {}]
  %s12 = inlined_call_operand.hbm [shape: f32[2,1,128], index: 12, kind: output, shape index: {}]
  %s13 = sld [smem:[#allocation0]]
  $region85: #{tpu_custom_call.1} parent=0
    _
  %s15 = ssub.s32 1, %s13
  %s16 = scalar_select 0, %s15, %s13
  $region1: #{tpu_custom_call.1} parent=0
    #allocation5 [shape = 'u8[786432]{0}', space=vmem, size = 0xc0000, scoped, tag = 'input window, operand 10, single buffered']
    #allocation6 [shape = 's32[2]{0}', space=sflag, size = 0x8, scoped, tag = 'scoped memory for tpu_custom_call.1']
    #allocation7 [shape = 's32[2]{0}', space=sflag, size = 0x8, scoped, tag = 'scoped memory for tpu_custom_call.1']
    #allocation8 [shape = 'u8[1024]{0}', space=vmem, size = 0x400, scoped, tag = 'output window, operand 0']
    %17 = vsyncpa [#allocation6], 0
    %18 = vsyncpa [#allocation7], 0
    %s19 = scalar_lea.sflag [#allocation7], 1
    %20 = vsyncpa %s19, 0
    loop: start=0, step=1, limit=4
    $region2: #{tpu_custom_call.1} parent=1 // loop_pre_header
      _
    $region3: #{tpu_custom_call.1} parent=1 // loop_header
      %s22 = sphi 0, %s26
      %p23 = scmp.ge.s32.totalorder %s22, 4
      %s32 = sphi 0, %s34
      %s35 = sphi 0, %s32
      %s36 = sphi 0, %s35
      %s52 = sphi 0, %s36
      %s56 = sphi 0, %s56
      %s58 = sphi 0, %s56
      %s59 = sphi 0, %s58
      %s73 = sphi 0, %s59
      %s77 = sphi 0, %s77
      %s79 = sphi 0, %s77
      %s80 = sphi 0, %s79
      %s94 = sphi 0, %s80
      %s98 = sphi 0, %s98
      %s100 = sphi 0, %s98
      %s101 = sphi 0, %s100
      %s115 = sphi 0, %s101
      %s119 = sphi 0, %s119
      %s121 = sphi 0, %s119
      %s122 = sphi 0, %s121
      %s136 = sphi 0, %s122
      %s140 = sphi 0, %s140
      %s142 = sphi 0, %s140
      %s143 = sphi 0, %s142
      %s157 = sphi 0, %s143
      %s161 = sphi 0, %s161
      %s163 = sphi 0, %s161
      %s164 = sphi 0, %s163
      %s178 = sphi 0, %s164
      %s182 = sphi 0, %s182
      %s184 = sphi 0, %s182
      %s185 = sphi 0, %s184
      %s199 = sphi 0, %s185
      %s203 = sphi 0, %s203
      %s205 = sphi 0, %s203
      %s206 = sphi 0, %s205
      %s220 = sphi 0, %s206
      %s224 = sphi 0, %s224
      %s226 = sphi 0, %s224
      %s227 = sphi 0, %s226
      %s241 = sphi 0, %s227
      %s245 = sphi 0, %s245
      %s247 = sphi 0, %s245
      %s248 = sphi 0, %s247
      %s262 = sphi 0, %s248
      %s266 = sphi 0, %s266
      %s268 = sphi 0, %s266
      %s269 = sphi 0, %s268
      %s283 = sphi 0, %s269
      %s289 = sphi 0, %s291
      %s292 = sphi 0, %s289
      %s293 = sphi 0, %s292
      %s309 = sphi 0, %s293
    $region4: #{tpu_custom_call.1} parent=1 // loop_header_branch
      %25 = sbr.rel (%p23) target = $region8
    $region5: #{tpu_custom_call.1} parent=1 // loop_body
      %s27 = ssub.s32 %s22, 1
      %s28 = ssub.s32 %s22, 2
      %s29 = sadd.s32 %s22, 1
      %s30 = ssub.s32 %s22, %s29
      %p31 = scmp.eq.s32.totalorder %s30, 0
      %s33 = sadd.s32 %s32, 1
      %s34 = scalar_select %p31, %s32, %s33
      %p37 = pneg %p31
      %p38 = scmp.eq.s32.totalorder %s22, 1
      %p39 = por %p37, %p38
      %p40 = scmp.ne.s32.totalorder %s32, %s35
      %p41 = scmp.eq.s32.totalorder %s22, 0
      %p42 = por %p40, %p41
      %p43 = scmp.ne.s32.totalorder %s32, %s35
      %p44 = scmp.eq.s32.totalorder %s27, 1
      %p45 = por %p43, %p44
      %p46 = scmp.ne.s32.totalorder %s35, %s36
      %p47 = scmp.eq.s32.totalorder %s27, 0
      %p48 = por %p46, %p47
      %p49 = scmp.ne.s32.totalorder %s35, %s36
      %p50 = scmp.eq.s32.totalorder %s28, 1
      %p51 = por %p49, %p50
      %p53 = scmp.ne.s32.totalorder %s36, %s52
      %p54 = scmp.eq.s32.totalorder %s28, 0
      %p55 = por %p53, %p54
      %s57 = sadd.s32 %s56, 1
      %p60 = scmp.eq.s32.totalorder %s22, 1
      %p61 = scmp.ne.s32.totalorder %s56, %s58
      %p62 = scmp.eq.s32.totalorder %s22, 0
      %p63 = por %p61, %p62
      %p64 = scmp.ne.s32.totalorder %s56, %s58
      %p65 = scmp.eq.s32.totalorder %s27, 1
      %p66 = por %p64, %p65
      %p67 = scmp.ne.s32.totalorder %s58, %s59
      %p68 = scmp.eq.s32.totalorder %s27, 0
      %p69 = por %p67, %p68
      %p70 = scmp.ne.s32.totalorder %s58, %s59
      %p71 = scmp.eq.s32.totalorder %s28, 1
      %p72 = por %p70, %p71
      %p74 = scmp.ne.s32.totalorder %s59, %s73
      %p75 = scmp.eq.s32.totalorder %s28, 0
      %p76 = por %p74, %p75
      %s78 = sadd.s32 %s77, 1
      %p81 = scmp.eq.s32.totalorder %s22, 1
      %p82 = scmp.ne.s32.totalorder %s77, %s79
      %p83 = scmp.eq.s32.totalorder %s22, 0
      %p84 = por %p82, %p83
      %p85 = scmp.ne.s32.totalorder %s77, %s79
      %p86 = scmp.eq.s32.totalorder %s27, 1
      %p87 = por %p85, %p86
      %p88 = scmp.ne.s32.totalorder %s79, %s80
      %p89 = scmp.eq.s32.totalorder %s27, 0
      %p90 = por %p88, %p89
      %p91 = scmp.ne.s32.totalorder %s79, %s80
      %p92 = scmp.eq.s32.totalorder %s28, 1
      %p93 = por %p91, %p92
      %p95 = scmp.ne.s32.totalorder %s80, %s94
      %p96 = scmp.eq.s32.totalorder %s28, 0
      %p97 = por %p95, %p96
      %s99 = sadd.s32 %s98, 1
      %p102 = scmp.eq.s32.totalorder %s22, 1
      %p103 = scmp.ne.s32.totalorder %s98, %s100
      %p104 = scmp.eq.s32.totalorder %s22, 0
      %p105 = por %p103, %p104
      %p106 = scmp.ne.s32.totalorder %s98, %s100
      %p107 = scmp.eq.s32.totalorder %s27, 1
      %p108 = por %p106, %p107
      %p109 = scmp.ne.s32.totalorder %s100, %s101
      %p110 = scmp.eq.s32.totalorder %s27, 0
      %p111 = por %p109, %p110
      %p112 = scmp.ne.s32.totalorder %s100, %s101
      %p113 = scmp.eq.s32.totalorder %s28, 1
      %p114 = por %p112, %p113
      %p116 = scmp.ne.s32.totalorder %s101, %s115
      %p117 = scmp.eq.s32.totalorder %s28, 0
      %p118 = por %p116, %p117
      %s120 = sadd.s32 %s119, 1
      %p123 = scmp.eq.s32.totalorder %s22, 1
      %p124 = scmp.ne.s32.totalorder %s119, %s121
      %p125 = scmp.eq.s32.totalorder %s22, 0
      %p126 = por %p124, %p125
      %p127 = scmp.ne.s32.totalorder %s119, %s121
      %p128 = scmp.eq.s32.totalorder %s27, 1
      %p129 = por %p127, %p128
      %p130 = scmp.ne.s32.totalorder %s121, %s122
      %p131 = scmp.eq.s32.totalorder %s27, 0
      %p132 = por %p130, %p131
      %p133 = scmp.ne.s32.totalorder %s121, %s122
      %p134 = scmp.eq.s32.totalorder %s28, 1
      %p135 = por %p133, %p134
      %p137 = scmp.ne.s32.totalorder %s122, %s136
      %p138 = scmp.eq.s32.totalorder %s28, 0
      %p139 = por %p137, %p138
      %s141 = sadd.s32 %s140, 1
      %p144 = scmp.eq.s32.totalorder %s22, 1
      %p145 = scmp.ne.s32.totalorder %s140, %s142
      %p146 = scmp.eq.s32.totalorder %s22, 0
      %p147 = por %p145, %p146
      %p148 = scmp.ne.s32.totalorder %s140, %s142
      %p149 = scmp.eq.s32.totalorder %s27, 1
      %p150 = por %p148, %p149
      %p151 = scmp.ne.s32.totalorder %s142, %s143
      %p152 = scmp.eq.s32.totalorder %s27, 0
      %p153 = por %p151, %p152
      %p154 = scmp.ne.s32.totalorder %s142, %s143
      %p155 = scmp.eq.s32.totalorder %s28, 1
      %p156 = por %p154, %p155
      %p158 = scmp.ne.s32.totalorder %s143, %s157
      %p159 = scmp.eq.s32.totalorder %s28, 0
      %p160 = por %p158, %p159
      %s162 = sadd.s32 %s161, 1
      %p165 = scmp.eq.s32.totalorder %s22, 1
      %p166 = scmp.ne.s32.totalorder %s161, %s163
      %p167 = scmp.eq.s32.totalorder %s22, 0
      %p168 = por %p166, %p167
      %p169 = scmp.ne.s32.totalorder %s161, %s163
      %p170 = scmp.eq.s32.totalorder %s27, 1
      %p171 = por %p169, %p170
      %p172 = scmp.ne.s32.totalorder %s163, %s164
      %p173 = scmp.eq.s32.totalorder %s27, 0
      %p174 = por %p172, %p173
      %p175 = scmp.ne.s32.totalorder %s163, %s164
      %p176 = scmp.eq.s32.totalorder %s28, 1
      %p177 = por %p175, %p176
      %p179 = scmp.ne.s32.totalorder %s164, %s178
      %p180 = scmp.eq.s32.totalorder %s28, 0
      %p181 = por %p179, %p180
      %s183 = sadd.s32 %s182, 1
      %p186 = scmp.eq.s32.totalorder %s22, 1
      %p187 = scmp.ne.s32.totalorder %s182, %s184
      %p188 = scmp.eq.s32.totalorder %s22, 0
      %p189 = por %p187, %p188
      %p190 = scmp.ne.s32.totalorder %s182, %s184
      %p191 = scmp.eq.s32.totalorder %s27, 1
      %p192 = por %p190, %p191
      %p193 = scmp.ne.s32.totalorder %s184, %s185
      %p194 = scmp.eq.s32.totalorder %s27, 0
      %p195 = por %p193, %p194
      %p196 = scmp.ne.s32.totalorder %s184, %s185
      %p197 = scmp.eq.s32.totalorder %s28, 1
      %p198 = por %p196, %p197
      %p200 = scmp.ne.s32.totalorder %s185, %s199
      %p201 = scmp.eq.s32.totalorder %s28, 0
      %p202 = por %p200, %p201
      %s204 = sadd.s32 %s203, 1
      %p207 = scmp.eq.s32.totalorder %s22, 1
      %p208 = scmp.ne.s32.totalorder %s203, %s205
      %p209 = scmp.eq.s32.totalorder %s22, 0
      %p210 = por %p208, %p209
      %p211 = scmp.ne.s32.totalorder %s203, %s205
      %p212 = scmp.eq.s32.totalorder %s27, 1
      %p213 = por %p211, %p212
      %p214 = scmp.ne.s32.totalorder %s205, %s206
      %p215 = scmp.eq.s32.totalorder %s27, 0
      %p216 = por %p214, %p215
      %p217 = scmp.ne.s32.totalorder %s205, %s206
      %p218 = scmp.eq.s32.totalorder %s28, 1
      %p219 = por %p217, %p218
      %p221 = scmp.ne.s32.totalorder %s206, %s220
      %p222 = scmp.eq.s32.totalorder %s28, 0
      %p223 = por %p221, %p222
      %s225 = sadd.s32 %s224, 1
      %p228 = scmp.eq.s32.totalorder %s22, 1
      %p229 = scmp.ne.s32.totalorder %s224, %s226
      %p230 = scmp.eq.s32.totalorder %s22, 0
      %p231 = por %p229, %p230
      %p232 = scmp.ne.s32.totalorder %s224, %s226
      %p233 = scmp.eq.s32.totalorder %s27, 1
      %p234 = por %p232, %p233
      %p235 = scmp.ne.s32.totalorder %s226, %s227
      %p236 = scmp.eq.s32.totalorder %s27, 0
      %p237 = por %p235, %p236
      %p238 = scmp.ne.s32.totalorder %s226, %s227
      %p239 = scmp.eq.s32.totalorder %s28, 1
      %p240 = por %p238, %p239
      %p242 = scmp.ne.s32.totalorder %s227, %s241
      %p243 = scmp.eq.s32.totalorder %s28, 0
      %p244 = por %p242, %p243
      %s246 = sadd.s32 %s245, 1
      %p249 = scmp.eq.s32.totalorder %s22, 1
      %p250 = scmp.ne.s32.totalorder %s245, %s247
      %p251 = scmp.eq.s32.totalorder %s22, 0
      %p252 = por %p250, %p251
      %p253 = scmp.ne.s32.totalorder %s245, %s247
      %p254 = scmp.eq.s32.totalorder %s27, 1
      %p255 = por %p253, %p254
      %p256 = scmp.ne.s32.totalorder %s247, %s248
      %p257 = scmp.eq.s32.totalorder %s27, 0
      %p258 = por %p256, %p257
      %p259 = scmp.ne.s32.totalorder %s247, %s248
      %p260 = scmp.eq.s32.totalorder %s28, 1
      %p261 = por %p259, %p260
      %p263 = scmp.ne.s32.totalorder %s248, %s262
      %p264 = scmp.eq.s32.totalorder %s28, 0
      %p265 = por %p263, %p264
      %s267 = sadd.s32 %s266, 1
      %p270 = scmp.eq.s32.totalorder %s22, 1
      %p271 = scmp.ne.s32.totalorder %s266, %s268
      %p272 = scmp.eq.s32.totalorder %s22, 0
      %p273 = por %p271, %p272
      %p274 = scmp.ne.s32.totalorder %s266, %s268
      %p275 = scmp.eq.s32.totalorder %s27, 1
      %p276 = por %p274, %p275
      %p277 = scmp.ne.s32.totalorder %s268, %s269
      %p278 = scmp.eq.s32.totalorder %s27, 0
      %p279 = por %p277, %p278
      %p280 = scmp.ne.s32.totalorder %s268, %s269
      %p281 = scmp.eq.s32.totalorder %s28, 1
      %p282 = por %p280, %p281
      %p284 = scmp.ne.s32.totalorder %s269, %s283
      %p285 = scmp.eq.s32.totalorder %s28, 0
      %p286 = por %p284, %p285
      %s287 = ssub.s32 %s22, %s29
      %p288 = scmp.eq.s32.totalorder %s287, 0
      %s290 = sadd.s32 %s289, 1
      %s291 = scalar_select %p288, %s289, %s290
      %p294 = pneg %p288
      %p295 = scmp.eq.s32.totalorder %s22, 1
      %p296 = por %p294, %p295
      %p297 = scmp.ne.s32.totalorder %s289, %s292
      %p298 = scmp.eq.s32.totalorder %s22, 0
      %p299 = por %p297, %p298
      %p300 = scmp.ne.s32.totalorder %s289, %s292
      %p301 = scmp.eq.s32.totalorder %s27, 1
      %p302 = por %p300, %p301
      %p303 = scmp.ne.s32.totalorder %s292, %s293
      %p304 = scmp.eq.s32.totalorder %s27, 0
      %p305 = por %p303, %p304
      %p306 = scmp.ne.s32.totalorder %s292, %s293
      %p307 = scmp.eq.s32.totalorder %s28, 1
      %p308 = por %p306, %p307
      %p310 = scmp.ne.s32.totalorder %s293, %s309
      %p311 = scmp.eq.s32.totalorder %s28, 0
      %p312 = por %p310, %p311
      %p313 = scmp.le.s32.totalorder 1, %s22
      %p314 = scmp.lt.s32.totalorder %s22, 3
      %p315 = pnand %p313, %p314
      %p316 = pneg %p315
      // Predicated region
      $region9: #{tpu_custom_call.1} parent=5 // pred_check
        _
      $region10: #{tpu_custom_call.1} parent=5 // pred_check_branch
        %318 = sbr.rel (%p315) target = $region12
      $region11: #{tpu_custom_call.1} parent=5 // pred_region
        %s319 = ssub.s32 %s22, 1
        // Predicated region
        $region13: #{tpu_custom_call.1} parent=11 // pred_check
          %p320 = pneg %p69
        $region14: #{tpu_custom_call.1} parent=11 // pred_check_branch
          %322 = sbr.rel (%p320) target = $region16
        $region15: #{tpu_custom_call.1} parent=11 // pred_region
          _
        $region16: #{tpu_custom_call.1} parent=11 // pred_fallthru
          _
        // Predicated region
        $region17: #{tpu_custom_call.1} parent=11 // pred_check
          %p323 = pneg %p90
        $region18: #{tpu_custom_call.1} parent=11 // pred_check_branch
          %325 = sbr.rel (%p323) target = $region20
        $region19: #{tpu_custom_call.1} parent=11 // pred_region
          _
        $region20: #{tpu_custom_call.1} parent=11 // pred_fallthru
          _
        // Predicated region
        $region21: #{tpu_custom_call.1} parent=11 // pred_check
          %p326 = pneg %p111
        $region22: #{tpu_custom_call.1} parent=11 // pred_check_branch
          %328 = sbr.rel (%p326) target = $region24
        $region23: #{tpu_custom_call.1} parent=11 // pred_region
          _
        $region24: #{tpu_custom_call.1} parent=11 // pred_fallthru
          _
        // Predicated region
        $region25: #{tpu_custom_call.1} parent=11 // pred_check
          %p329 = pneg %p132
        $region26: #{tpu_custom_call.1} parent=11 // pred_check_branch
          %331 = sbr.rel (%p329) target = $region28
        $region27: #{tpu_custom_call.1} parent=11 // pred_region
          _
        $region28: #{tpu_custom_call.1} parent=11 // pred_fallthru
          _
        // Predicated region
        $region29: #{tpu_custom_call.1} parent=11 // pred_check
          %p332 = pneg %p153
        $region30: #{tpu_custom_call.1} parent=11 // pred_check_branch
          %334 = sbr.rel (%p332) target = $region32
        $region31: #{tpu_custom_call.1} parent=11 // pred_region
          _
        $region32: #{tpu_custom_call.1} parent=11 // pred_fallthru
          _
        // Predicated region
        $region33: #{tpu_custom_call.1} parent=11 // pred_check
          %p335 = pneg %p174
        $region34: #{tpu_custom_call.1} parent=11 // pred_check_branch
          %337 = sbr.rel (%p335) target = $region36
        $region35: #{tpu_custom_call.1} parent=11 // pred_region
          _
        $region36: #{tpu_custom_call.1} parent=11 // pred_fallthru
          _
        // Predicated region
        $region37: #{tpu_custom_call.1} parent=11 // pred_check
          %p338 = pneg %p195
        $region38: #{tpu_custom_call.1} parent=11 // pred_check_branch
          %340 = sbr.rel (%p338) target = $region40
        $region39: #{tpu_custom_call.1} parent=11 // pred_region
          _
        $region40: #{tpu_custom_call.1} parent=11 // pred_fallthru
          _
        // Predicated region
        $region41: #{tpu_custom_call.1} parent=11 // pred_check
          %p341 = pneg %p216
        $region42: #{tpu_custom_call.1} parent=11 // pred_check_branch
          %343 = sbr.rel (%p341) target = $region44
        $region43: #{tpu_custom_call.1} parent=11 // pred_region
          _
        $region44: #{tpu_custom_call.1} parent=11 // pred_fallthru
          _
        // Predicated region
        $region45: #{tpu_custom_call.1} parent=11 // pred_check
          %p344 = pneg %p237
        $region46: #{tpu_custom_call.1} parent=11 // pred_check_branch
          %346 = sbr.rel (%p344) target = $region48
        $region47: #{tpu_custom_call.1} parent=11 // pred_region
          _
        $region48: #{tpu_custom_call.1} parent=11 // pred_fallthru
          _
        // Predicated region
        $region49: #{tpu_custom_call.1} parent=11 // pred_check
          %p347 = pneg %p258
        $region50: #{tpu_custom_call.1} parent=11 // pred_check_branch
          %349 = sbr.rel (%p347) target = $region52
        $region51: #{tpu_custom_call.1} parent=11 // pred_region
          %s351 = ssub.s32 24576, 24576
          %352 = vsyncadd [#allocation6], %s351
          %s353 = sshll.u32 [#allocation5], 4
          %s354 = int_to_ptr.vmem [resolvable:$true] %s353
          %359 = dma.hbm_to_vmem [thread:$0]  %s10, 24576, %s354, [#allocation6], 64, 64, 4
        $region52: #{tpu_custom_call.1} parent=11 // pred_fallthru
          _
        // Predicated region
        $region53: #{tpu_custom_call.1} parent=11 // pred_check
          %p360 = pneg %p279
        $region54: #{tpu_custom_call.1} parent=11 // pred_check_branch
          %362 = sbr.rel (%p360) target = $region56
        $region55: #{tpu_custom_call.1} parent=11 // pred_region
          _
        $region56: #{tpu_custom_call.1} parent=11 // pred_fallthru
          _
      $region12: #{tpu_custom_call.1} parent=5 // pred_fallthru
        _
      %p363 = scmp.lt.s32.totalorder %s22, 2
      // Predicated region
      $region57: #{tpu_custom_call.1} parent=5 // pred_check
        %p364 = pneg %p363
      $region58: #{tpu_custom_call.1} parent=5 // pred_check_branch
        %366 = sbr.rel (%p364) target = $region60
      $region59: #{tpu_custom_call.1} parent=5 // pred_region
        // Predicated region
        $region61: #{tpu_custom_call.1} parent=59 // pred_check
          %p367 = pneg %p42
        $region62: #{tpu_custom_call.1} parent=59 // pred_check_branch
          %369 = sbr.rel (%p367) target = $region64
        $region63: #{tpu_custom_call.1} parent=59 // pred_region
          %p370 = scmp.lt.s32.totalorder %s22, 1
          %s371 = scalar_select %p370, %s22, 1
          %s372 = smul.addr %s371, 23
          %s373 = smul.addr %s372, 8
          %s374 = scalar_lea.vmem %s0, %s373
        $region64: #{tpu_custom_call.1} parent=59 // pred_fallthru
          _
      $region60: #{tpu_custom_call.1} parent=5 // pred_fallthru
        _
      %p375 = scmp.le.s32.totalorder 1, %s22
      %p376 = scmp.lt.s32.totalorder %s22, 3
      %p377 = pnand %p375, %p376
      %p378 = pneg %p377
      // Predicated region
      $region65: #{tpu_custom_call.1} parent=5 // pred_check
        _
      $region66: #{tpu_custom_call.1} parent=5 // pred_check_branch
        %380 = sbr.rel (%p377) target = $region68
      $region67: #{tpu_custom_call.1} parent=5 // pred_region
        %s381 = ssub.s32 %s22, 1
        // Predicated region
        $region69: #{tpu_custom_call.1} parent=67 // pred_check
          %p382 = pneg %p258
        $region70: #{tpu_custom_call.1} parent=67 // pred_check_branch
          %384 = sbr.rel (%p382) target = $region72
        $region71: #{tpu_custom_call.1} parent=67 // pred_region
          %385 = dma.done [#allocation6], 24576
        $region72: #{tpu_custom_call.1} parent=67 // pred_fallthru
          _
        %p386 = scmp.lt.s32.totalorder %s27, 1
        %s387 = scalar_select %p386, %s27, 1
        %s388 = smul.addr %s387, 23
        %s389 = smul.addr %s388, 8
        %s390 = scalar_lea.vmem %s0, %s389
        %p391 = pneg %p48
        %p392 = pneg %p45
        %p393 = pneg %p69
        %p394 = pneg %p66
        %p395 = pneg %p90
        %p396 = pneg %p87
        %p397 = pneg %p111
        %p398 = pneg %p108
        %p399 = pneg %p132
        %p400 = pneg %p129
        %p401 = pneg %p153
        %p402 = pneg %p150
        %p403 = pneg %p174
        %p404 = pneg %p171
        %p405 = pneg %p195
        %p406 = pneg %p192
        %p407 = pneg %p216
        %p408 = pneg %p213
        %p409 = pneg %p237
        %p410 = pneg %p234
        %p411 = pneg %p258
        %p412 = pneg %p255
        %p413 = pneg %p279
        %p414 = pneg %p276
        %p415 = pneg %p305
        %p416 = pneg %p302
        %s417 = sand.u32 %s292, 1
        %s418 = scalar_lea.sflag [#allocation7], %s417
        %s419 = sand.u32 %s292, 1
        %s420 = scalar_lea.vmem [#allocation8], %s419
        %p421 = scmp.lt.s32.totalorder %s27, 1
        %s422 = scalar_select %p421, %s27, 1
        %s423 = smul.addr %s422, 23
        %s424 = smul.addr %s423, 8
        %s425 = scalar_lea.vmem %s0, %s424
        %v427 = vld [vmem:[%s425] sm:$0xff]
        %v428 = vld [vmem:[%s425 + $0x8] sm:$0xff]
        %v429 = vld [vmem:[%s425 + $0x10] sm:$0xff]
        %v430 = vld [vmem:[%s425 + $0x18] sm:$0xff]
        %v431 = vld [vmem:[%s425 + $0x20] sm:$0xff]
        %v432 = vld [vmem:[%s425 + $0x28] sm:$0xff]
        %v433 = vld [vmem:[%s425 + $0x30] sm:$0xff]
        %v434 = vld [vmem:[%s425 + $0x38] sm:$0xff]
        %v435 = vld [vmem:[%s425 + $0x40] sm:$0xff]
        %v436 = vld [vmem:[%s425 + $0x48] sm:$0xff]
        %v437 = vld [vmem:[%s425 + $0x50] sm:$0xff]
        %v438 = vld [vmem:[%s425 + $0x58] sm:$0xff]
        %v439 = vld [vmem:[%s425 + $0x60] sm:$0xff]
        %v440 = vld [vmem:[%s425 + $0x68] sm:$0xff]
        %v441 = vld [vmem:[%s425 + $0x70] sm:$0xff]
        %v442 = vld [vmem:[%s425 + $0x78] sm:$0xff]
        %v443 = vld [vmem:[%s425 + $0x80] sm:$0xff]
        %v444 = vld [vmem:[%s425 + $0x88] sm:$0xff]
        %v445 = vld [vmem:[%s425 + $0x90] sm:$0xff]
        %v446 = vld [vmem:[%s425 + $0x98] sm:$0xff]
        %v447 = vld [vmem:[%s425 + $0xa0] sm:$0xff]
        %v448 = vld [vmem:[%s425 + $0xa8] sm:$0xff]
        %v449 = vld [vmem:[%s425 + $0xb0] sm:$0x3]
        %vm473 = vcmask 1043456
        %v474 = vrot.slane %v427, 4
        %v475 = vrot.slane %v428, 4
        %v476 = vsel %vm473, %v474, %v475
        %v477 = vrot.slane %v429, 4
        %v478 = vsel %vm473, %v475, %v477
        %v479 = vrot.slane %v430, 4
        %v480 = vsel %vm473, %v477, %v479
        %v481 = vrot.slane %v431, 4
        %v482 = vsel %vm473, %v479, %v481
        %v483 = vrot.slane %v432, 4
        %v484 = vsel %vm473, %v481, %v483
        %v485 = vrot.slane %v433, 4
        %v486 = vsel %vm473, %v483, %v485
        %v487 = vrot.slane %v434, 4
        %v488 = vsel %vm473, %v485, %v487
        %v489 = vrot.slane %v435, 4
        %v490 = vsel %vm473, %v487, %v489
        %v491 = vrot.slane %v436, 4
        %v492 = vsel %vm473, %v489, %v491
        %v493 = vrot.slane %v437, 4
        %v494 = vsel %vm473, %v491, %v493
        %v495 = vrot.slane %v438, 4
        %v496 = vsel %vm473, %v493, %v495
        %v497 = vrot.slane %v439, 4
        %v498 = vsel %vm473, %v495, %v497
        %v499 = vrot.slane %v440, 4
        %v500 = vsel %vm473, %v497, %v499
        %v501 = vrot.slane %v441, 4
        %v502 = vsel %vm473, %v499, %v501
        %v503 = vrot.slane %v442, 4
        %v504 = vsel %vm473, %v501, %v503
        %v505 = vrot.slane %v443, 4
        %v506 = vsel %vm473, %v503, %v505
        %v507 = vrot.slane %v444, 4
        %v508 = vsel %vm473, %v505, %v507
        %v509 = vrot.slane %v445, 4
        %v510 = vsel %vm473, %v507, %v509
        %v511 = vrot.slane %v446, 4
        %v512 = vsel %vm473, %v509, %v511
        %v513 = vrot.slane %v447, 4
        %v514 = vsel %vm473, %v511, %v513
        %v515 = vrot.slane %v448, 4
        %v516 = vsel %vm473, %v513, %v515
        %v517 = vrot.slane %v449, 4
        %v518 = vsel %vm473, %v515, %v517
        %v542 = vsel %vm473, 0.0, %v474
        %vm543 = vcmask 1045504
        %v544 = vsel %vm543, %v518, 0.0
        %vm547 = vcmask 1046528
        %v548 = vrot.slane %v542, 1
        %v549 = vrot.slane %v476, 1
        %v550 = vsel %vm547, %v548, %v549
        %v551 = vrot.slane %v478, 1
        %v552 = vsel %vm547, %v549, %v551
        %v553 = vrot.slane %v480, 1
        %v554 = vsel %vm547, %v551, %v553
        %v555 = vrot.slane %v482, 1
        %v556 = vsel %vm547, %v553, %v555
        %v557 = vrot.slane %v484, 1
        %v558 = vsel %vm547, %v555, %v557
        %v559 = vrot.slane %v486, 1
        %v560 = vsel %vm547, %v557, %v559
        %v561 = vrot.slane %v488, 1
        %v562 = vsel %vm547, %v559, %v561
        %v563 = vrot.slane %v490, 1
        %v564 = vsel %vm547, %v561, %v563
        %v565 = vrot.slane %v492, 1
        %v566 = vsel %vm547, %v563, %v565
        %v567 = vrot.slane %v494, 1
        %v568 = vsel %vm547, %v565, %v567
        %v569 = vrot.slane %v496, 1
        %v570 = vsel %vm547, %v567, %v569
        %v571 = vrot.slane %v498, 1
        %v572 = vsel %vm547, %v569, %v571
        %v573 = vrot.slane %v500, 1
        %v574 = vsel %vm547, %v571, %v573
        %v575 = vrot.slane %v502, 1
        %v576 = vsel %vm547, %v573, %v575
        %v577 = vrot.slane %v504, 1
        %v578 = vsel %vm547, %v575, %v577
        %v579 = vrot.slane %v506, 1
        %v580 = vsel %vm547, %v577, %v579
        %v581 = vrot.slane %v508, 1
        %v582 = vsel %vm547, %v579, %v581
        %v583 = vrot.slane %v510, 1
        %v584 = vsel %vm547, %v581, %v583
        %v585 = vrot.slane %v512, 1
        %v586 = vsel %vm547, %v583, %v585
        %v587 = vrot.slane %v514, 1
        %v588 = vsel %vm547, %v585, %v587
        %v589 = vrot.slane %v516, 1
        %v590 = vsel %vm547, %v587, %v589
        %v591 = vrot.slane %v544, 1
        %v592 = vsel %vm547, %v589, %v591
        %593 = vrot.lane.b32.xlu0 %v550, 1
        %v594 = vpop.permute.xlu0 %593
        %595 = vrot.lane.b32.xlu0 %v552, 1
        %v596 = vpop.permute.xlu0 %595
        %597 = vrot.lane.b32.xlu0 %v554, 1
        %v598 = vpop.permute.xlu0 %597
        %599 = vrot.lane.b32.xlu0 %v556, 1
        %v600 = vpop.permute.xlu0 %599
        %601 = vrot.lane.b32.xlu0 %v558, 1
        %v602 = vpop.permute.xlu0 %601
        %603 = vrot.lane.b32.xlu0 %v560, 1
        %v604 = vpop.permute.xlu0 %603
        %605 = vrot.lane.b32.xlu0 %v562, 1
        %v606 = vpop.permute.xlu0 %605
        %607 = vrot.lane.b32.xlu0 %v564, 1
        %v608 = vpop.permute.xlu0 %607
        %609 = vrot.lane.b32.xlu0 %v566, 1
        %v610 = vpop.permute.xlu0 %609
        %611 = vrot.lane.b32.xlu0 %v568, 1
        %v612 = vpop.permute.xlu0 %611
        %613 = vrot.lane.b32.xlu0 %v570, 1
        %v614 = vpop.permute.xlu0 %613
        %615 = vrot.lane.b32.xlu0 %v572, 1
        %v616 = vpop.permute.xlu0 %615
        %617 = vrot.lane.b32.xlu0 %v574, 1
        %v618 = vpop.permute.xlu0 %617
        %619 = vrot.lane.b32.xlu0 %v576, 1
        %v620 = vpop.permute.xlu0 %619
        %621 = vrot.lane.b32.xlu0 %v578, 1
        %v622 = vpop.permute.xlu0 %621
        %623 = vrot.lane.b32.xlu0 %v580, 1
        %v624 = vpop.permute.xlu0 %623
        %625 = vrot.lane.b32.xlu0 %v582, 1
        %v626 = vpop.permute.xlu0 %625
        %627 = vrot.lane.b32.xlu0 %v584, 1
        %v628 = vpop.permute.xlu0 %627
        %629 = vrot.lane.b32.xlu0 %v586, 1
        %v630 = vpop.permute.xlu0 %629
        %631 = vrot.lane.b32.xlu0 %v588, 1
        %v632 = vpop.permute.xlu0 %631
        %633 = vrot.lane.b32.xlu0 %v590, 1
        %v634 = vpop.permute.xlu0 %633
        %635 = vrot.lane.b32.xlu0 %v592, 1
        %v636 = vpop.permute.xlu0 %635
        %637 = vrot.lane.b32.xlu0 %v591, 1
        %v638 = vpop.permute.xlu0 %637
        %v662 = vrot.slane %v542, 2
        %v663 = vrot.slane %v476, 2
        %v664 = vsel %vm543, %v662, %v663
        %v665 = vrot.slane %v478, 2
        %v666 = vsel %vm543, %v663, %v665
        %v667 = vrot.slane %v480, 2
        %v668 = vsel %vm543, %v665, %v667
        %v669 = vrot.slane %v482, 2
        %v670 = vsel %vm543, %v667, %v669
        %v671 = vrot.slane %v484, 2
        %v672 = vsel %vm543, %v669, %v671
        %v673 = vrot.slane %v486, 2
        %v674 = vsel %vm543, %v671, %v673
        %v675 = vrot.slane %v488, 2
        %v676 = vsel %vm543, %v673, %v675
        %v677 = vrot.slane %v490, 2
        %v678 = vsel %vm543, %v675, %v677
        %v679 = vrot.slane %v492, 2
        %v680 = vsel %vm543, %v677, %v679
        %v681 = vrot.slane %v494, 2
        %v682 = vsel %vm543, %v679, %v681
        %v683 = vrot.slane %v496, 2
        %v684 = vsel %vm543, %v681, %v683
        %v685 = vrot.slane %v498, 2
        %v686 = vsel %vm543, %v683, %v685
        %v687 = vrot.slane %v500, 2
        %v688 = vsel %vm543, %v685, %v687
        %v689 = vrot.slane %v502, 2
        %v690 = vsel %vm543, %v687, %v689
        %v691 = vrot.slane %v504, 2
        %v692 = vsel %vm543, %v689, %v691
        %v693 = vrot.slane %v506, 2
        %v694 = vsel %vm543, %v691, %v693
        %v695 = vrot.slane %v508, 2
        %v696 = vsel %vm543, %v693, %v695
        %v697 = vrot.slane %v510, 2
        %v698 = vsel %vm543, %v695, %v697
        %v699 = vrot.slane %v512, 2
        %v700 = vsel %vm543, %v697, %v699
        %v701 = vrot.slane %v514, 2
        %v702 = vsel %vm543, %v699, %v701
        %v703 = vrot.slane %v516, 2
        %v704 = vsel %vm543, %v701, %v703
        %v705 = vrot.slane %v544, 2
        %v706 = vsel %vm543, %v703, %v705
        %707 = vrot.lane.b32.xlu0 %v664, 2
        %v708 = vpop.permute.xlu0 %707
        %709 = vrot.lane.b32.xlu0 %v666, 2
        %v710 = vpop.permute.xlu0 %709
        %711 = vrot.lane.b32.xlu0 %v668, 2
        %v712 = vpop.permute.xlu0 %711
        %713 = vrot.lane.b32.xlu0 %v670, 2
        %v714 = vpop.permute.xlu0 %713
        %715 = vrot.lane.b32.xlu0 %v672, 2
        %v716 = vpop.permute.xlu0 %715
        %717 = vrot.lane.b32.xlu0 %v674, 2
        %v718 = vpop.permute.xlu0 %717
        %719 = vrot.lane.b32.xlu0 %v676, 2
        %v720 = vpop.permute.xlu0 %719
        %721 = vrot.lane.b32.xlu0 %v678, 2
        %v722 = vpop.permute.xlu0 %721
        %723 = vrot.lane.b32.xlu0 %v680, 2
        %v724 = vpop.permute.xlu0 %723
        %725 = vrot.lane.b32.xlu0 %v682, 2
        %v726 = vpop.permute.xlu0 %725
        %727 = vrot.lane.b32.xlu0 %v684, 2
        %v728 = vpop.permute.xlu0 %727
        %729 = vrot.lane.b32.xlu0 %v686, 2
        %v730 = vpop.permute.xlu0 %729
        %731 = vrot.lane.b32.xlu0 %v688, 2
        %v732 = vpop.permute.xlu0 %731
        %733 = vrot.lane.b32.xlu0 %v690, 2
        %v734 = vpop.permute.xlu0 %733
        %735 = vrot.lane.b32.xlu0 %v692, 2
        %v736 = vpop.permute.xlu0 %735
        %737 = vrot.lane.b32.xlu0 %v694, 2
        %v738 = vpop.permute.xlu0 %737
        %739 = vrot.lane.b32.xlu0 %v696, 2
        %v740 = vpop.permute.xlu0 %739
        %741 = vrot.lane.b32.xlu0 %v698, 2
        %v742 = vpop.permute.xlu0 %741
        %743 = vrot.lane.b32.xlu0 %v700, 2
        %v744 = vpop.permute.xlu0 %743
        %745 = vrot.lane.b32.xlu0 %v702, 2
        %v746 = vpop.permute.xlu0 %745
        %747 = vrot.lane.b32.xlu0 %v704, 2
        %v748 = vpop.permute.xlu0 %747
        %749 = vrot.lane.b32.xlu0 %v706, 2
        %v750 = vpop.permute.xlu0 %749
        %751 = vrot.lane.b32.xlu0 %v705, 2
        %v752 = vpop.permute.xlu0 %751
        %vm776 = vcmask 1044480
        %v777 = vrot.slane %v542, 3
        %v778 = vrot.slane %v476, 3
        %v779 = vsel %vm776, %v777, %v778
        %v780 = vrot.slane %v478, 3
        %v781 = vsel %vm776, %v778, %v780
        %v782 = vrot.slane %v480, 3
        %v783 = vsel %vm776, %v780, %v782
        %v784 = vrot.slane %v482, 3
        %v785 = vsel %vm776, %v782, %v784
        %v786 = vrot.slane %v484, 3
        %v787 = vsel %vm776, %v784, %v786
        %v788 = vrot.slane %v486, 3
        %v789 = vsel %vm776, %v786, %v788
        %v790 = vrot.slane %v488, 3
        %v791 = vsel %vm776, %v788, %v790
        %v792 = vrot.slane %v490, 3
        %v793 = vsel %vm776, %v790, %v792
        %v794 = vrot.slane %v492, 3
        %v795 = vsel %vm776, %v792, %v794
        %v796 = vrot.slane %v494, 3
        %v797 = vsel %vm776, %v794, %v796
        %v798 = vrot.slane %v496, 3
        %v799 = vsel %vm776, %v796, %v798
        %v800 = vrot.slane %v498, 3
        %v801 = vsel %vm776, %v798, %v800
        %v802 = vrot.slane %v500, 3
        %v803 = vsel %vm776, %v800, %v802
        %v804 = vrot.slane %v502, 3
        %v805 = vsel %vm776, %v802, %v804
        %v806 = vrot.slane %v504, 3
        %v807 = vsel %vm776, %v804, %v806
        %v808 = vrot.slane %v506, 3
        %v809 = vsel %vm776, %v806, %v808
        %v810 = vrot.slane %v508, 3
        %v811 = vsel %vm776, %v808, %v810
        %v812 = vrot.slane %v510, 3
        %v813 = vsel %vm776, %v810, %v812
        %v814 = vrot.slane %v512, 3
        %v815 = vsel %vm776, %v812, %v814
        %v816 = vrot.slane %v514, 3
        %v817 = vsel %vm776, %v814, %v816
        %v818 = vrot.slane %v516, 3
        %v819 = vsel %vm776, %v816, %v818
        %v820 = vrot.slane %v544, 3
        %v821 = vsel %vm776, %v818, %v820
        %822 = vrot.lane.b32.xlu0 %v779, 3
        %v823 = vpop.permute.xlu0 %822
        %824 = vrot.lane.b32.xlu0 %v781, 3
        %v825 = vpop.permute.xlu0 %824
        %826 = vrot.lane.b32.xlu0 %v783, 3
        %v827 = vpop.permute.xlu0 %826
        %828 = vrot.lane.b32.xlu0 %v785, 3
        %v829 = vpop.permute.xlu0 %828
        %830 = vrot.lane.b32.xlu0 %v787, 3
        %v831 = vpop.permute.xlu0 %830
        %832 = vrot.lane.b32.xlu0 %v789, 3
        %v833 = vpop.permute.xlu0 %832
        %834 = vrot.lane.b32.xlu0 %v791, 3
        %v835 = vpop.permute.xlu0 %834
        %836 = vrot.lane.b32.xlu0 %v793, 3
        %v837 = vpop.permute.xlu0 %836
        %838 = vrot.lane.b32.xlu0 %v795, 3
        %v839 = vpop.permute.xlu0 %838
        %840 = vrot.lane.b32.xlu0 %v797, 3
        %v841 = vpop.permute.xlu0 %840
        %842 = vrot.lane.b32.xlu0 %v799, 3
        %v843 = vpop.permute.xlu0 %842
        %844 = vrot.lane.b32.xlu0 %v801, 3
        %v845 = vpop.permute.xlu0 %844
        %846 = vrot.lane.b32.xlu0 %v803, 3
        %v847 = vpop.permute.xlu0 %846
        %848 = vrot.lane.b32.xlu0 %v805, 3
        %v849 = vpop.permute.xlu0 %848
        %850 = vrot.lane.b32.xlu0 %v807, 3
        %v851 = vpop.permute.xlu0 %850
        %852 = vrot.lane.b32.xlu0 %v809, 3
        %v853 = vpop.permute.xlu0 %852
        %854 = vrot.lane.b32.xlu0 %v811, 3
        %v855 = vpop.permute.xlu0 %854
        %856 = vrot.lane.b32.xlu0 %v813, 3
        %v857 = vpop.permute.xlu0 %856
        %858 = vrot.lane.b32.xlu0 %v815, 3
        %v859 = vpop.permute.xlu0 %858
        %860 = vrot.lane.b32.xlu0 %v817, 3
        %v861 = vpop.permute.xlu0 %860
        %862 = vrot.lane.b32.xlu0 %v819, 3
        %v863 = vpop.permute.xlu0 %862
        %864 = vrot.lane.b32.xlu0 %v821, 3
        %v865 = vpop.permute.xlu0 %864
        %866 = vrot.lane.b32.xlu0 %v820, 3
        %v867 = vpop.permute.xlu0 %866
        %v891 = vrot.slane %v542, 4
        %v892 = vrot.slane %v476, 4
        %v893 = vsel %vm473, %v891, %v892
        %v894 = vrot.slane %v478, 4
        %v895 = vsel %vm473, %v892, %v894
        %v896 = vrot.slane %v480, 4
        %v897 = vsel %vm473, %v894, %v896
        %v898 = vrot.slane %v482, 4
        %v899 = vsel %vm473, %v896, %v898
        %v900 = vrot.slane %v484, 4
        %v901 = vsel %vm473, %v898, %v900
        %v902 = vrot.slane %v486, 4
        %v903 = vsel %vm473, %v900, %v902
        %v904 = vrot.slane %v488, 4
        %v905 = vsel %vm473, %v902, %v904
        %v906 = vrot.slane %v490, 4
        %v907 = vsel %vm473, %v904, %v906
        %v908 = vrot.slane %v492, 4
        %v909 = vsel %vm473, %v906, %v908
        %v910 = vrot.slane %v494, 4
        %v911 = vsel %vm473, %v908, %v910
        %v912 = vrot.slane %v496, 4
        %v913 = vsel %vm473, %v910, %v912
        %v914 = vrot.slane %v498, 4
        %v915 = vsel %vm473, %v912, %v914
        %v916 = vrot.slane %v500, 4
        %v917 = vsel %vm473, %v914, %v916
        %v918 = vrot.slane %v502, 4
        %v919 = vsel %vm473, %v916, %v918
        %v920 = vrot.slane %v504, 4
        %v921 = vsel %vm473, %v918, %v920
        %v922 = vrot.slane %v506, 4
        %v923 = vsel %vm473, %v920, %v922
        %v924 = vrot.slane %v508, 4
        %v925 = vsel %vm473, %v922, %v924
        %v926 = vrot.slane %v510, 4
        %v927 = vsel %vm473, %v924, %v926
        %v928 = vrot.slane %v512, 4
        %v929 = vsel %vm473, %v926, %v928
        %v930 = vrot.slane %v514, 4
        %v931 = vsel %vm473, %v928, %v930
        %v932 = vrot.slane %v516, 4
        %v933 = vsel %vm473, %v930, %v932
        %v934 = vrot.slane %v544, 4
        %v935 = vsel %vm473, %v932, %v934
        %936 = vrot.lane.b32.xlu0 %v893, 4
        %v937 = vpop.permute.xlu0 %936
        %938 = vrot.lane.b32.xlu0 %v895, 4
        %v939 = vpop.permute.xlu0 %938
        %940 = vrot.lane.b32.xlu0 %v897, 4
        %v941 = vpop.permute.xlu0 %940
        %942 = vrot.lane.b32.xlu0 %v899, 4
        %v943 = vpop.permute.xlu0 %942
        %944 = vrot.lane.b32.xlu0 %v901, 4
        %v945 = vpop.permute.xlu0 %944
        %946 = vrot.lane.b32.xlu0 %v903, 4
        %v947 = vpop.permute.xlu0 %946
        %948 = vrot.lane.b32.xlu0 %v905, 4
        %v949 = vpop.permute.xlu0 %948
        %950 = vrot.lane.b32.xlu0 %v907, 4
        %v951 = vpop.permute.xlu0 %950
        %952 = vrot.lane.b32.xlu0 %v909, 4
        %v953 = vpop.permute.xlu0 %952
        %954 = vrot.lane.b32.xlu0 %v911, 4
        %v955 = vpop.permute.xlu0 %954
        %956 = vrot.lane.b32.xlu0 %v913, 4
        %v957 = vpop.permute.xlu0 %956
        %958 = vrot.lane.b32.xlu0 %v915, 4
        %v959 = vpop.permute.xlu0 %958
        %960 = vrot.lane.b32.xlu0 %v917, 4
        %v961 = vpop.permute.xlu0 %960
        %962 = vrot.lane.b32.xlu0 %v919, 4
        %v963 = vpop.permute.xlu0 %962
        %964 = vrot.lane.b32.xlu0 %v921, 4
        %v965 = vpop.permute.xlu0 %964
        %966 = vrot.lane.b32.xlu0 %v923, 4
        %v967 = vpop.permute.xlu0 %966
        %968 = vrot.lane.b32.xlu0 %v925, 4
        %v969 = vpop.permute.xlu0 %968
        %970 = vrot.lane.b32.xlu0 %v927, 4
        %v971 = vpop.permute.xlu0 %970
        %972 = vrot.lane.b32.xlu0 %v929, 4
        %v973 = vpop.permute.xlu0 %972
        %974 = vrot.lane.b32.xlu0 %v931, 4
        %v975 = vpop.permute.xlu0 %974
        %976 = vrot.lane.b32.xlu0 %v933, 4
        %v977 = vpop.permute.xlu0 %976
        %978 = vrot.lane.b32.xlu0 %v935, 4
        %v979 = vpop.permute.xlu0 %978
        %980 = vrot.lane.b32.xlu0 %v934, 4
        %v981 = vpop.permute.xlu0 %980
        %vm1005 = vcmask 1042432
        %v1006 = vrot.slane %v542, 5
        %v1007 = vrot.slane %v476, 5
        %v1008 = vsel %vm1005, %v1006, %v1007
        %v1009 = vrot.slane %v478, 5
        %v1010 = vsel %vm1005, %v1007, %v1009
        %v1011 = vrot.slane %v480, 5
        %v1012 = vsel %vm1005, %v1009, %v1011
        %v1013 = vrot.slane %v482, 5
        %v1014 = vsel %vm1005, %v1011, %v1013
        %v1015 = vrot.slane %v484, 5
        %v1016 = vsel %vm1005, %v1013, %v1015
        %v1017 = vrot.slane %v486, 5
        %v1018 = vsel %vm1005, %v1015, %v1017
        %v1019 = vrot.slane %v488, 5
        %v1020 = vsel %vm1005, %v1017, %v1019
        %v1021 = vrot.slane %v490, 5
        %v1022 = vsel %vm1005, %v1019, %v1021
        %v1023 = vrot.slane %v492, 5
        %v1024 = vsel %vm1005, %v1021, %v1023
        %v1025 = vrot.slane %v494, 5
        %v1026 = vsel %vm1005, %v1023, %v1025
        %v1027 = vrot.slane %v496, 5
        %v1028 = vsel %vm1005, %v1025, %v1027
        %v1029 = vrot.slane %v498, 5
        %v1030 = vsel %vm1005, %v1027, %v1029
        %v1031 = vrot.slane %v500, 5
        %v1032 = vsel %vm1005, %v1029, %v1031
        %v1033 = vrot.slane %v502, 5
        %v1034 = vsel %vm1005, %v1031, %v1033
        %v1035 = vrot.slane %v504, 5
        %v1036 = vsel %vm1005, %v1033, %v1035
        %v1037 = vrot.slane %v506, 5
        %v1038 = vsel %vm1005, %v1035, %v1037
        %v1039 = vrot.slane %v508, 5
        %v1040 = vsel %vm1005, %v1037, %v1039
        %v1041 = vrot.slane %v510, 5
        %v1042 = vsel %vm1005, %v1039, %v1041
        %v1043 = vrot.slane %v512, 5
        %v1044 = vsel %vm1005, %v1041, %v1043
        %v1045 = vrot.slane %v514, 5
        %v1046 = vsel %vm1005, %v1043, %v1045
        %v1047 = vrot.slane %v516, 5
        %v1048 = vsel %vm1005, %v1045, %v1047
        %v1049 = vrot.slane %v544, 5
        %v1050 = vsel %vm1005, %v1047, %v1049
        %1051 = vrot.lane.b32.xlu0 %v1008, 5
        %v1052 = vpop.permute.xlu0 %1051
        %1053 = vrot.lane.b32.xlu0 %v1010, 5
        %v1054 = vpop.permute.xlu0 %1053
        %1055 = vrot.lane.b32.xlu0 %v1012, 5
        %v1056 = vpop.permute.xlu0 %1055
        %1057 = vrot.lane.b32.xlu0 %v1014, 5
        %v1058 = vpop.permute.xlu0 %1057
        %1059 = vrot.lane.b32.xlu0 %v1016, 5
        %v1060 = vpop.permute.xlu0 %1059
        %1061 = vrot.lane.b32.xlu0 %v1018, 5
        %v1062 = vpop.permute.xlu0 %1061
        %1063 = vrot.lane.b32.xlu0 %v1020, 5
        %v1064 = vpop.permute.xlu0 %1063
        %1065 = vrot.lane.b32.xlu0 %v1022, 5
        %v1066 = vpop.permute.xlu0 %1065
        %1067 = vrot.lane.b32.xlu0 %v1024, 5
        %v1068 = vpop.permute.xlu0 %1067
        %1069 = vrot.lane.b32.xlu0 %v1026, 5
        %v1070 = vpop.permute.xlu0 %1069
        %1071 = vrot.lane.b32.xlu0 %v1028, 5
        %v1072 = vpop.permute.xlu0 %1071
        %1073 = vrot.lane.b32.xlu0 %v1030, 5
        %v1074 = vpop.permute.xlu0 %1073
        %1075 = vrot.lane.b32.xlu0 %v1032, 5
        %v1076 = vpop.permute.xlu0 %1075
        %1077 = vrot.lane.b32.xlu0 %v1034, 5
        %v1078 = vpop.permute.xlu0 %1077
        %1079 = vrot.lane.b32.xlu0 %v1036, 5
        %v1080 = vpop.permute.xlu0 %1079
        %1081 = vrot.lane.b32.xlu0 %v1038, 5
        %v1082 = vpop.permute.xlu0 %1081
        %1083 = vrot.lane.b32.xlu0 %v1040, 5
        %v1084 = vpop.permute.xlu0 %1083
        %1085 = vrot.lane.b32.xlu0 %v1042, 5
        %v1086 = vpop.permute.xlu0 %1085
        %1087 = vrot.lane.b32.xlu0 %v1044, 5
        %v1088 = vpop.permute.xlu0 %1087
        %1089 = vrot.lane.b32.xlu0 %v1046, 5
        %v1090 = vpop.permute.xlu0 %1089
        %1091 = vrot.lane.b32.xlu0 %v1048, 5
        %v1092 = vpop.permute.xlu0 %1091
        %1093 = vrot.lane.b32.xlu0 %v1050, 5
        %v1094 = vpop.permute.xlu0 %1093
        %1095 = vrot.lane.b32.xlu0 %v1049, 5
        %v1096 = vpop.permute.xlu0 %1095
        %vm1121 = vcmask 1041408
        %v1122 = vrot.slane %v542, 6
        %v1123 = vrot.slane %v476, 6
        %v1124 = vsel %vm1121, %v1122, %v1123
        %v1125 = vrot.slane %v478, 6
        %v1126 = vsel %vm1121, %v1123, %v1125
        %v1127 = vrot.slane %v480, 6
        %v1128 = vsel %vm1121, %v1125, %v1127
        %v1129 = vrot.slane %v482, 6
        %v1130 = vsel %vm1121, %v1127, %v1129
        %v1131 = vrot.slane %v484, 6
        %v1132 = vsel %vm1121, %v1129, %v1131
        %v1133 = vrot.slane %v486, 6
        %v1134 = vsel %vm1121, %v1131, %v1133
        %v1135 = vrot.slane %v488, 6
        %v1136 = vsel %vm1121, %v1133, %v1135
        %v1137 = vrot.slane %v490, 6
        %v1138 = vsel %vm1121, %v1135, %v1137
        %v1139 = vrot.slane %v492, 6
        %v1140 = vsel %vm1121, %v1137, %v1139
        %v1141 = vrot.slane %v494, 6
        %v1142 = vsel %vm1121, %v1139, %v1141
        %v1143 = vrot.slane %v496, 6
        %v1144 = vsel %vm1121, %v1141, %v1143
        %v1145 = vrot.slane %v498, 6
        %v1146 = vsel %vm1121, %v1143, %v1145
        %v1147 = vrot.slane %v500, 6
        %v1148 = vsel %vm1121, %v1145, %v1147
        %v1149 = vrot.slane %v502, 6
        %v1150 = vsel %vm1121, %v1147, %v1149
        %v1151 = vrot.slane %v504, 6
        %v1152 = vsel %vm1121, %v1149, %v1151
        %v1153 = vrot.slane %v506, 6
        %v1154 = vsel %vm1121, %v1151, %v1153
        %v1155 = vrot.slane %v508, 6
        %v1156 = vsel %vm1121, %v1153, %v1155
        %v1157 = vrot.slane %v510, 6
        %v1158 = vsel %vm1121, %v1155, %v1157
        %v1159 = vrot.slane %v512, 6
        %v1160 = vsel %vm1121, %v1157, %v1159
        %v1161 = vrot.slane %v514, 6
        %v1162 = vsel %vm1121, %v1159, %v1161
        %v1163 = vrot.slane %v516, 6
        %v1164 = vsel %vm1121, %v1161, %v1163
        %v1165 = vrot.slane %v544, 6
        %v1166 = vsel %vm1121, %v1163, %v1165
        %v1167 = vrot.slane 0.0, 6
        %v1168 = vsel %vm1121, %v1165, %v1167
        %1169 = vrot.lane.b32.xlu0 %v1124, 6
        %v1170 = vpop.permute.xlu0 %1169
        %1171 = vrot.lane.b32.xlu0 %v1126, 6
        %v1172 = vpop.permute.xlu0 %1171
        %1173 = vrot.lane.b32.xlu0 %v1128, 6
        %v1174 = vpop.permute.xlu0 %1173
        %1175 = vrot.lane.b32.xlu0 %v1130, 6
        %v1176 = vpop.permute.xlu0 %1175
        %1177 = vrot.lane.b32.xlu0 %v1132, 6
        %v1178 = vpop.permute.xlu0 %1177
        %1179 = vrot.lane.b32.xlu0 %v1134, 6
        %v1180 = vpop.permute.xlu0 %1179
        %1181 = vrot.lane.b32.xlu0 %v1136, 6
        %v1182 = vpop.permute.xlu0 %1181
        %1183 = vrot.lane.b32.xlu0 %v1138, 6
        %v1184 = vpop.permute.xlu0 %1183
        %1185 = vrot.lane.b32.xlu0 %v1140, 6
        %v1186 = vpop.permute.xlu0 %1185
        %1187 = vrot.lane.b32.xlu0 %v1142, 6
        %v1188 = vpop.permute.xlu0 %1187
        %1189 = vrot.lane.b32.xlu0 %v1144, 6
        %v1190 = vpop.permute.xlu0 %1189
        %1191 = vrot.lane.b32.xlu0 %v1146, 6
        %v1192 = vpop.permute.xlu0 %1191
        %1193 = vrot.lane.b32.xlu0 %v1148, 6
        %v1194 = vpop.permute.xlu0 %1193
        %1195 = vrot.lane.b32.xlu0 %v1150, 6
        %v1196 = vpop.permute.xlu0 %1195
        %1197 = vrot.lane.b32.xlu0 %v1152, 6
        %v1198 = vpop.permute.xlu0 %1197
        %1199 = vrot.lane.b32.xlu0 %v1154, 6
        %v1200 = vpop.permute.xlu0 %1199
        %1201 = vrot.lane.b32.xlu0 %v1156, 6
        %v1202 = vpop.permute.xlu0 %1201
        %1203 = vrot.lane.b32.xlu0 %v1158, 6
        %v1204 = vpop.permute.xlu0 %1203
        %1205 = vrot.lane.b32.xlu0 %v1160, 6
        %v1206 = vpop.permute.xlu0 %1205
        %1207 = vrot.lane.b32.xlu0 %v1162, 6
        %v1208 = vpop.permute.xlu0 %1207
        %1209 = vrot.lane.b32.xlu0 %v1164, 6
        %v1210 = vpop.permute.xlu0 %1209
        %1211 = vrot.lane.b32.xlu0 %v1166, 6
        %v1212 = vpop.permute.xlu0 %1211
        %1213 = vrot.lane.b32.xlu0 %v1168, 6
        %v1214 = vpop.permute.xlu0 %1213
        %vm1238 = vcmask 1040384
        %v1239 = vrot.slane %v542, 7
        %v1240 = vrot.slane %v476, 7
        %v1241 = vsel %vm1238, %v1239, %v1240
        %v1242 = vrot.slane %v478, 7
        %v1243 = vsel %vm1238, %v1240, %v1242
        %v1244 = vrot.slane %v480, 7
        %v1245 = vsel %vm1238, %v1242, %v1244
        %v1246 = vrot.slane %v482, 7
        %v1247 = vsel %vm1238, %v1244, %v1246
        %v1248 = vrot.slane %v484, 7
        %v1249 = vsel %vm1238, %v1246, %v1248
        %v1250 = vrot.slane %v486, 7
        %v1251 = vsel %vm1238, %v1248, %v1250
        %v1252 = vrot.slane %v488, 7
        %v1253 = vsel %vm1238, %v1250, %v1252
        %v1254 = vrot.slane %v490, 7
        %v1255 = vsel %vm1238, %v1252, %v1254
        %v1256 = vrot.slane %v492, 7
        %v1257 = vsel %vm1238, %v1254, %v1256
        %v1258 = vrot.slane %v494, 7
        %v1259 = vsel %vm1238, %v1256, %v1258
        %v1260 = vrot.slane %v496, 7
        %v1261 = vsel %vm1238, %v1258, %v1260
        %v1262 = vrot.slane %v498, 7
        %v1263 = vsel %vm1238, %v1260, %v1262
        %v1264 = vrot.slane %v500, 7
        %v1265 = vsel %vm1238, %v1262, %v1264
        %v1266 = vrot.slane %v502, 7
        %v1267 = vsel %vm1238, %v1264, %v1266
        %v1268 = vrot.slane %v504, 7
        %v1269 = vsel %vm1238, %v1266, %v1268
        %v1270 = vrot.slane %v506, 7
        %v1271 = vsel %vm1238, %v1268, %v1270
        %v1272 = vrot.slane %v508, 7
        %v1273 = vsel %vm1238, %v1270, %v1272
        %v1274 = vrot.slane %v510, 7
        %v1275 = vsel %vm1238, %v1272, %v1274
        %v1276 = vrot.slane %v512, 7
        %v1277 = vsel %vm1238, %v1274, %v1276
        %v1278 = vrot.slane %v514, 7
        %v1279 = vsel %vm1238, %v1276, %v1278
        %v1280 = vrot.slane %v516, 7
        %v1281 = vsel %vm1238, %v1278, %v1280
        %v1282 = vrot.slane %v544, 7
        %v1283 = vsel %vm1238, %v1280, %v1282
        %v1284 = vrot.slane 0.0, 7
        %v1285 = vsel %vm1238, %v1282, %v1284
        %1286 = vrot.lane.b32.xlu0 %v1241, 7
        %v1287 = vpop.permute.xlu0 %1286
        %1288 = vrot.lane.b32.xlu0 %v1243, 7
        %v1289 = vpop.permute.xlu0 %1288
        %1290 = vrot.lane.b32.xlu0 %v1245, 7
        %v1291 = vpop.permute.xlu0 %1290
        %1292 = vrot.lane.b32.xlu0 %v1247, 7
        %v1293 = vpop.permute.xlu0 %1292
        %1294 = vrot.lane.b32.xlu0 %v1249, 7
        %v1295 = vpop.permute.xlu0 %1294
        %1296 = vrot.lane.b32.xlu0 %v1251, 7
        %v1297 = vpop.permute.xlu0 %1296
        %1298 = vrot.lane.b32.xlu0 %v1253, 7
        %v1299 = vpop.permute.xlu0 %1298
        %1300 = vrot.lane.b32.xlu0 %v1255, 7
        %v1301 = vpop.permute.xlu0 %1300
        %1302 = vrot.lane.b32.xlu0 %v1257, 7
        %v1303 = vpop.permute.xlu0 %1302
        %1304 = vrot.lane.b32.xlu0 %v1259, 7
        %v1305 = vpop.permute.xlu0 %1304
        %1306 = vrot.lane.b32.xlu0 %v1261, 7
        %v1307 = vpop.permute.xlu0 %1306
        %1308 = vrot.lane.b32.xlu0 %v1263, 7
        %v1309 = vpop.permute.xlu0 %1308
        %1310 = vrot.lane.b32.xlu0 %v1265, 7
        %v1311 = vpop.permute.xlu0 %1310
        %1312 = vrot.lane.b32.xlu0 %v1267, 7
        %v1313 = vpop.permute.xlu0 %1312
        %1314 = vrot.lane.b32.xlu0 %v1269, 7
        %v1315 = vpop.permute.xlu0 %1314
        %1316 = vrot.lane.b32.xlu0 %v1271, 7
        %v1317 = vpop.permute.xlu0 %1316
        %1318 = vrot.lane.b32.xlu0 %v1273, 7
        %v1319 = vpop.permute.xlu0 %1318
        %1320 = vrot.lane.b32.xlu0 %v1275, 7
        %v1321 = vpop.permute.xlu0 %1320
        %1322 = vrot.lane.b32.xlu0 %v1277, 7
        %v1323 = vpop.permute.xlu0 %1322
        %1324 = vrot.lane.b32.xlu0 %v1279, 7
        %v1325 = vpop.permute.xlu0 %1324
        %1326 = vrot.lane.b32.xlu0 %v1281, 7
        %v1327 = vpop.permute.xlu0 %1326
        %1328 = vrot.lane.b32.xlu0 %v1283, 7
        %v1329 = vpop.permute.xlu0 %1328
        %1330 = vrot.lane.b32.xlu0 %v1285, 7
        %v1331 = vpop.permute.xlu0 %1330
        %vm1355 = vcmask 7168
        %v1356 = vsel %vm1355, %v542, %v594
        %v1357 = vsel %vm1355, %v476, %v596
        %v1358 = vsel %vm1355, %v478, %v598
        %v1359 = vsel %vm1355, %v480, %v600
        %v1360 = vsel %vm1355, %v482, %v602
        %v1361 = vsel %vm1355, %v484, %v604
        %v1362 = vsel %vm1355, %v486, %v606
        %v1363 = vsel %vm1355, %v488, %v608
        %v1364 = vsel %vm1355, %v490, %v610
        %v1365 = vsel %vm1355, %v492, %v612
        %v1366 = vsel %vm1355, %v494, %v614
        %v1367 = vsel %vm1355, %v496, %v616
        %v1368 = vsel %vm1355, %v498, %v618
        %v1369 = vsel %vm1355, %v500, %v620
        %v1370 = vsel %vm1355, %v502, %v622
        %v1371 = vsel %vm1355, %v504, %v624
        %v1372 = vsel %vm1355, %v506, %v626
        %v1373 = vsel %vm1355, %v508, %v628
        %v1374 = vsel %vm1355, %v510, %v630
        %v1375 = vsel %vm1355, %v512, %v632
        %v1376 = vsel %vm1355, %v514, %v634
        %v1377 = vsel %vm1355, %v516, %v636
        %v1378 = vsel %vm1355, %v544, %v638
        %vm1379 = vcmask 15360
        %v1380 = vsel %vm1379, %v1356, %v708
        %v1381 = vsel %vm1379, %v1357, %v710
        %v1382 = vsel %vm1379, %v1358, %v712
        %v1383 = vsel %vm1379, %v1359, %v714
        %v1384 = vsel %vm1379, %v1360, %v716
        %v1385 = vsel %vm1379, %v1361, %v718
        %v1386 = vsel %vm1379, %v1362, %v720
        %v1387 = vsel %vm1379, %v1363, %v722
        %v1388 = vsel %vm1379, %v1364, %v724
        %v1389 = vsel %vm1379, %v1365, %v726
        %v1390 = vsel %vm1379, %v1366, %v728
        %v1391 = vsel %vm1379, %v1367, %v730
        %v1392 = vsel %vm1379, %v1368, %v732
        %v1393 = vsel %vm1379, %v1369, %v734
        %v1394 = vsel %vm1379, %v1370, %v736
        %v1395 = vsel %vm1379, %v1371, %v738
        %v1396 = vsel %vm1379, %v1372, %v740
        %v1397 = vsel %vm1379, %v1373, %v742
        %v1398 = vsel %vm1379, %v1374, %v744
        %v1399 = vsel %vm1379, %v1375, %v746
        %v1400 = vsel %vm1379, %v1376, %v748
        %v1401 = vsel %vm1379, %v1377, %v750
        %v1402 = vsel %vm1379, %v1378, %v752
        %vm1403 = vcmask 23552
        %v1404 = vsel %vm1403, %v1380, %v823
        %v1405 = vsel %vm1403, %v1381, %v825
        %v1406 = vsel %vm1403, %v1382, %v827
        %v1407 = vsel %vm1403, %v1383, %v829
        %v1408 = vsel %vm1403, %v1384, %v831
        %v1409 = vsel %vm1403, %v1385, %v833
        %v1410 = vsel %vm1403, %v1386, %v835
        %v1411 = vsel %vm1403, %v1387, %v837
        %v1412 = vsel %vm1403, %v1388, %v839
        %v1413 = vsel %vm1403, %v1389, %v841
        %v1414 = vsel %vm1403, %v1390, %v843
        %v1415 = vsel %vm1403, %v1391, %v845
        %v1416 = vsel %vm1403, %v1392, %v847
        %v1417 = vsel %vm1403, %v1393, %v849
        %v1418 = vsel %vm1403, %v1394, %v851
        %v1419 = vsel %vm1403, %v1395, %v853
        %v1420 = vsel %vm1403, %v1396, %v855
        %v1421 = vsel %vm1403, %v1397, %v857
        %v1422 = vsel %vm1403, %v1398, %v859
        %v1423 = vsel %vm1403, %v1399, %v861
        %v1424 = vsel %vm1403, %v1400, %v863
        %v1425 = vsel %vm1403, %v1401, %v865
        %v1426 = vsel %vm1403, %v1402, %v867
        %vm1427 = vcmask 31744
        %v1428 = vsel %vm1427, %v1404, %v937
        %v1429 = vsel %vm1427, %v1405, %v939
        %v1430 = vsel %vm1427, %v1406, %v941
        %v1431 = vsel %vm1427, %v1407, %v943
        %v1432 = vsel %vm1427, %v1408, %v945
        %v1433 = vsel %vm1427, %v1409, %v947
        %v1434 = vsel %vm1427, %v1410, %v949
        %v1435 = vsel %vm1427, %v1411, %v951
        %v1436 = vsel %vm1427, %v1412, %v953
        %v1437 = vsel %vm1427, %v1413, %v955
        %v1438 = vsel %vm1427, %v1414, %v957
        %v1439 = vsel %vm1427, %v1415, %v959
        %v1440 = vsel %vm1427, %v1416, %v961
        %v1441 = vsel %vm1427, %v1417, %v963
        %v1442 = vsel %vm1427, %v1418, %v965
        %v1443 = vsel %vm1427, %v1419, %v967
        %v1444 = vsel %vm1427, %v1420, %v969
        %v1445 = vsel %vm1427, %v1421, %v971
        %v1446 = vsel %vm1427, %v1422, %v973
        %v1447 = vsel %vm1427, %v1423, %v975
        %v1448 = vsel %vm1427, %v1424, %v977
        %v1449 = vsel %vm1427, %v1425, %v979
        %v1450 = vsel %vm1427, %v1426, %v981
        %vm1451 = vcmask 39936
        %v1452 = vsel %vm1451, %v1428, %v1052
        %v1453 = vsel %vm1451, %v1429, %v1054
        %v1454 = vsel %vm1451, %v1430, %v1056
        %v1455 = vsel %vm1451, %v1431, %v1058
        %v1456 = vsel %vm1451, %v1432, %v1060
        %v1457 = vsel %vm1451, %v1433, %v1062
        %v1458 = vsel %vm1451, %v1434, %v1064
        %v1459 = vsel %vm1451, %v1435, %v1066
        %v1460 = vsel %vm1451, %v1436, %v1068
        %v1461 = vsel %vm1451, %v1437, %v1070
        %v1462 = vsel %vm1451, %v1438, %v1072
        %v1463 = vsel %vm1451, %v1439, %v1074
        %v1464 = vsel %vm1451, %v1440, %v1076
        %v1465 = vsel %vm1451, %v1441, %v1078
        %v1466 = vsel %vm1451, %v1442, %v1080
        %v1467 = vsel %vm1451, %v1443, %v1082
        %v1468 = vsel %vm1451, %v1444, %v1084
        %v1469 = vsel %vm1451, %v1445, %v1086
        %v1470 = vsel %vm1451, %v1446, %v1088
        %v1471 = vsel %vm1451, %v1447, %v1090
        %v1472 = vsel %vm1451, %v1448, %v1092
        %v1473 = vsel %vm1451, %v1449, %v1094
        %v1474 = vsel %vm1451, %v1450, %v1096
        %vm1475 = vcmask 48128
        %v1476 = vsel %vm1475, %v1452, %v1170
        %v1477 = vsel %vm1475, %v1453, %v1172
        %v1478 = vsel %vm1475, %v1454, %v1174
        %v1479 = vsel %vm1475, %v1455, %v1176
        %v1480 = vsel %vm1475, %v1456, %v1178
        %v1481 = vsel %vm1475, %v1457, %v1180
        %v1482 = vsel %vm1475, %v1458, %v1182
        %v1483 = vsel %vm1475, %v1459, %v1184
        %v1484 = vsel %vm1475, %v1460, %v1186
        %v1485 = vsel %vm1475, %v1461, %v1188
        %v1486 = vsel %vm1475, %v1462, %v1190
        %v1487 = vsel %vm1475, %v1463, %v1192
        %v1488 = vsel %vm1475, %v1464, %v1194
        %v1489 = vsel %vm1475, %v1465, %v1196
        %v1490 = vsel %vm1475, %v1466, %v1198
        %v1491 = vsel %vm1475, %v1467, %v1200
        %v1492 = vsel %vm1475, %v1468, %v1202
        %v1493 = vsel %vm1475, %v1469, %v1204
        %v1494 = vsel %vm1475, %v1470, %v1206
        %v1495 = vsel %vm1475, %v1471, %v1208
        %v1496 = vsel %vm1475, %v1472, %v1210
        %v1497 = vsel %vm1475, %v1473, %v1212
        %v1498 = vsel %vm1475, %v1474, %v1214
        %vm1499 = vcmask 56320
        %v1500 = vsel %vm1499, %v1476, %v1287
        %v1501 = vsel %vm1499, %v1477, %v1289
        %v1502 = vsel %vm1499, %v1478, %v1291
        %v1503 = vsel %vm1499, %v1479, %v1293
        %v1504 = vsel %vm1499, %v1480, %v1295
        %v1505 = vsel %vm1499, %v1481, %v1297
        %v1506 = vsel %vm1499, %v1482, %v1299
        %v1507 = vsel %vm1499, %v1483, %v1301
        %v1508 = vsel %vm1499, %v1484, %v1303
        %v1509 = vsel %vm1499, %v1485, %v1305
        %v1510 = vsel %vm1499, %v1486, %v1307
        %v1511 = vsel %vm1499, %v1487, %v1309
        %v1512 = vsel %vm1499, %v1488, %v1311
        %v1513 = vsel %vm1499, %v1489, %v1313
        %v1514 = vsel %vm1499, %v1490, %v1315
        %v1515 = vsel %vm1499, %v1491, %v1317
        %v1516 = vsel %vm1499, %v1492, %v1319
        %v1517 = vsel %vm1499, %v1493, %v1321
        %v1518 = vsel %vm1499, %v1494, %v1323
        %v1519 = vsel %vm1499, %v1495, %v1325
        %v1520 = vsel %vm1499, %v1496, %v1327
        %v1521 = vsel %vm1499, %v1497, %v1329
        %v1522 = vsel %vm1499, %v1498, %v1331
        %v1523 = vpack.c.bf16 %v1501, %v1500
        %v1524 = vpack.c.bf16 %v1503, %v1502
        %v1525 = vpack.c.bf16 %v1505, %v1504
        %v1526 = vpack.c.bf16 %v1507, %v1506
        %v1527 = vpack.c.bf16 %v1509, %v1508
        %v1528 = vpack.c.bf16 %v1511, %v1510
        %v1529 = vpack.c.bf16 %v1513, %v1512
        %v1530 = vpack.c.bf16 %v1515, %v1514
        %v1531 = vpack.c.bf16 %v1517, %v1516
        %v1532 = vpack.c.bf16 %v1519, %v1518
        %v1533 = vpack.c.bf16 %v1521, %v1520
        %v1534 = vpack.c.bf16 %v1522, %v1522
        %v1535 = vld [vmem:[%s1] sm:$0xf]
        %vm1536 = vcmask 64512
        %v1538 = vsel %vm1536, %v1523, 0
        %v1541 = vsel %vm1536, %v1524, 0
        %v1544 = vsel %vm1536, %v1525, 0
        %v1547 = vsel %vm1536, %v1526, 0
        %v1550 = vsel %vm1536, %v1527, 0
        %v1553 = vsel %vm1536, %v1528, 0
        %v1556 = vsel %vm1536, %v1529, 0
        %v1559 = vsel %vm1536, %v1530, 0
        %v1562 = vsel %vm1536, %v1531, 0
        %v1565 = vsel %vm1536, %v1532, 0
        %v1568 = vsel %vm1536, %v1533, 0
        %v1571 = vsel %vm1536, %v1534, 0
        %v1574 = vsel %vm473, %v1535, 0
        %1576 = vmatprep.subr.bf16.mxu0 0
        %1577 = vmatpush1.bf16.msra.mxu0 %v1574
        %1578 = vmatprep.subr.bf16.mxu0 0
        %1579 = vmatpush1.bf16.msra.mxu0 0
        %1580 = vmatprep.subr.bf16.mxu0 0
        %1581 = vmatpush1.bf16.msra.mxu0 0
        %1582 = vmatprep.subr.bf16.mxu0 0
        %1583 = vmatpush1.bf16.msra.mxu0 0
        %1584 = vmatprep.subr.bf16.mxu0 0
        %1585 = vmatpush1.bf16.msra.mxu0 0
        %1586 = vmatprep.subr.bf16.mxu0 0
        %1587 = vmatpush1.bf16.msra.mxu0 0
        %1588 = vmatprep.subr.bf16.mxu0 0
        %1589 = vmatpush1.bf16.msra.mxu0 0
        %1590 = vmatprep.subr.bf16.mxu0 0
        %1591 = vmatpush1.bf16.msra.mxu0 0
        %1592 = vmatprep.subr.bf16.mxu0 0
        %1593 = vmatpush1.bf16.msra.mxu0 0
        %1594 = vmatprep.subr.bf16.mxu0 0
        %1595 = vmatpush1.bf16.msra.mxu0 0
        %1596 = vmatprep.subr.bf16.mxu0 0
        %1597 = vmatpush1.bf16.msra.mxu0 0
        %1598 = vmatprep.subr.bf16.mxu0 0
        %1599 = vmatpush1.bf16.msra.mxu0 0
        %1600 = vmatprep.subr.bf16.mxu0 0
        %1601 = vmatpush1.bf16.msra.mxu0 0
        %1602 = vmatprep.subr.bf16.mxu0 0
        %1603 = vmatpush1.bf16.msra.mxu0 0
        %1604 = vmatprep.subr.bf16.mxu0 0
        %1605 = vmatpush1.bf16.msra.mxu0 0
        %1606 = vmatprep.subr.bf16.mxu0 0
        %1607 = vmatpush1.bf16.msra.mxu0 0
        %1608 = vmatprep.mubr.bf16.mxu0 0
        %1609 = vmatmul.mubr.bf16.gmra.mrb[0].mxu0 %v1538
        %v1610 = vpop.f32.mrb[0].mxu0
        %v1611 = vadd.f32 0.0, %v1610
        %v1612 = vpop.f32.mrb[0].mxu0
        %v1613 = vpop.f32.mrb[0].mxu0
        %v1614 = vadd.f32 0.0, %v1613
        %v1615 = vpop.f32.mrb[0].mxu0
        %1616 = vmatprep.mubr.bf16.mxu0 0
        %1617 = vmatmul.mubr.bf16.gmra.mrb[0].mxu0 %v1541
        %v1618 = vpop.f32.mrb[0].mxu0
        %v1619 = vadd.f32 0.0, %v1618
        %v1620 = vpop.f32.mrb[0].mxu0
        %v1621 = vpop.f32.mrb[0].mxu0
        %v1622 = vadd.f32 0.0, %v1621
        %v1623 = vpop.f32.mrb[0].mxu0
        %1624 = vmatprep.mubr.bf16.mxu0 0
        %1625 = vmatmul.mubr.bf16.gmra.mrb[0].mxu0 %v1544
        %v1626 = vpop.f32.mrb[0].mxu0
        %v1627 = vadd.f32 0.0, %v1626
        %v1628 = vpop.f32.mrb[0].mxu0
        %v1629 = vpop.f32.mrb[0].mxu0
        %v1630 = vadd.f32 0.0, %v1629
        %v1631 = vpop.f32.mrb[0].mxu0
        %1632 = vmatprep.mubr.bf16.mxu0 0
        %1633 = vmatmul.mubr.bf16.gmra.mrb[0].mxu0 %v1547
        %v1634 = vpop.f32.mrb[0].mxu0
        %v1635 = vadd.f32 0.0, %v1634
        %v1636 = vpop.f32.mrb[0].mxu0
        %v1637 = vpop.f32.mrb[0].mxu0
        %v1638 = vadd.f32 0.0, %v1637
        %v1639 = vpop.f32.mrb[0].mxu0
        %1640 = vmatprep.mubr.bf16.mxu0 0
        %1641 = vmatmul.mubr.bf16.gmra.mrb[0].mxu0 %v1550
        %v1642 = vpop.f32.mrb[0].mxu0
        %v1643 = vadd.f32 0.0, %v1642
        %v1644 = vpop.f32.mrb[0].mxu0
        %v1645 = vpop.f32.mrb[0].mxu0
        %v1646 = vadd.f32 0.0, %v1645
        %v1647 = vpop.f32.mrb[0].mxu0
        %1648 = vmatprep.mubr.bf16.mxu0 0
        %1649 = vmatmul.mubr.bf16.gmra.mrb[0].mxu0 %v1553
        %v1650 = vpop.f32.mrb[0].mxu0
        %v1651 = vadd.f32 0.0, %v1650
        %v1652 = vpop.f32.mrb[0].mxu0
        %v1653 = vpop.f32.mrb[0].mxu0
        %v1654 = vadd.f32 0.0, %v1653
        %v1655 = vpop.f32.mrb[0].mxu0
        %1656 = vmatprep.mubr.bf16.mxu0 0
        %1657 = vmatmul.mubr.bf16.gmra.mrb[0].mxu0 %v1556
        %v1658 = vpop.f32.mrb[0].mxu0
        %v1659 = vadd.f32 0.0, %v1658
        %v1660 = vpop.f32.mrb[0].mxu0
        %v1661 = vpop.f32.mrb[0].mxu0
        %v1662 = vadd.f32 0.0, %v1661
        %v1663 = vpop.f32.mrb[0].mxu0
        %1664 = vmatprep.mubr.bf16.mxu0 0
        %1665 = vmatmul.mubr.bf16.gmra.mrb[0].mxu0 %v1559
        %v1666 = vpop.f32.mrb[0].mxu0
        %v1667 = vadd.f32 0.0, %v1666
        %v1668 = vpop.f32.mrb[0].mxu0
        %v1669 = vpop.f32.mrb[0].mxu0
        %v1670 = vadd.f32 0.0, %v1669
        %v1671 = vpop.f32.mrb[0].mxu0
        %1672 = vmatprep.mubr.bf16.mxu0 0
        %1673 = vmatmul.mubr.bf16.gmra.mrb[0].mxu0 %v1562
        %v1674 = vpop.f32.mrb[0].mxu0
        %v1675 = vadd.f32 0.0, %v1674
        %v1676 = vpop.f32.mrb[0].mxu0
        %v1677 = vpop.f32.mrb[0].mxu0
        %v1678 = vadd.f32 0.0, %v1677
        %v1679 = vpop.f32.mrb[0].mxu0
        %1680 = vmatprep.mubr.bf16.mxu0 0
        %1681 = vmatmul.mubr.bf16.gmra.mrb[0].mxu0 %v1565
        %v1682 = vpop.f32.mrb[0].mxu0
        %v1683 = vadd.f32 0.0, %v1682
        %v1684 = vpop.f32.mrb[0].mxu0
        %v1685 = vpop.f32.mrb[0].mxu0
        %v1686 = vadd.f32 0.0, %v1685
        %v1687 = vpop.f32.mrb[0].mxu0
        %1688 = vmatprep.mubr.bf16.mxu0 0
        %1689 = vmatmul.mubr.bf16.gmra.mrb[0].mxu0 %v1568
        %v1690 = vpop.f32.mrb[0].mxu0
        %v1691 = vadd.f32 0.0, %v1690
        %v1692 = vpop.f32.mrb[0].mxu0
        %v1693 = vpop.f32.mrb[0].mxu0
        %v1694 = vadd.f32 0.0, %v1693
        %v1695 = vpop.f32.mrb[0].mxu0
        %1696 = vmatprep.mubr.bf16.mxu0 0
        %1697 = vmatmul.mubr.bf16.gmra.mrb[0].mxu0 %v1571
        %v1698 = vpop.f32.mrb[0].mxu0
        %v1699 = vadd.f32 0.0, %v1698
        %v1700 = vpop.f32.mrb[0].mxu0
        %v1701 = vpop.f32.mrb[0].mxu0
        %v1702 = vpop.f32.mrb[0].mxu0
        %1703 = vdwg.mxu0
        %v1704 = vld [vmem:[%s2] sm:$0x1]
        %v1706 = vlaneseq
        %v1707 = vshrl.u32 %v1706, 7
        %v1708 = vsub.s32 0, %v1707
        %v1709 = vrot.slane %v1704, %v1708
        %v1711 = vmul.f32 %v1611, %v1709
        %v1712 = vmul.f32 %v1614, %v1709
        %v1713 = vmul.f32 %v1619, %v1709
        %v1714 = vmul.f32 %v1622, %v1709
        %v1715 = vmul.f32 %v1627, %v1709
        %v1716 = vmul.f32 %v1630, %v1709
        %v1717 = vmul.f32 %v1635, %v1709
        %v1718 = vmul.f32 %v1638, %v1709
        %v1719 = vmul.f32 %v1643, %v1709
        %v1720 = vmul.f32 %v1646, %v1709
        %v1721 = vmul.f32 %v1651, %v1709
        %v1722 = vmul.f32 %v1654, %v1709
        %v1723 = vmul.f32 %v1659, %v1709
        %v1724 = vmul.f32 %v1662, %v1709
        %v1725 = vmul.f32 %v1667, %v1709
        %v1726 = vmul.f32 %v1670, %v1709
        %v1727 = vmul.f32 %v1675, %v1709
        %v1728 = vmul.f32 %v1678, %v1709
        %v1729 = vmul.f32 %v1683, %v1709
        %v1730 = vmul.f32 %v1686, %v1709
        %v1731 = vmul.f32 %v1691, %v1709
        %v1732 = vmul.f32 %v1694, %v1709
        %v1733 = vmul.f32 %v1699, %v1709
        %v1734 = vld [vmem:[%s3] sm:$0x1]
        %v1736 = vlaneseq
        %v1737 = vshrl.u32 %v1736, 7
        %v1738 = vsub.s32 0, %v1737
        %v1739 = vrot.slane %v1734, %v1738
        %v1741 = vadd.f32 %v1711, %v1739
        %v1742 = vadd.f32 %v1712, %v1739
        %v1743 = vadd.f32 %v1713, %v1739
        %v1744 = vadd.f32 %v1714, %v1739
        %v1745 = vadd.f32 %v1715, %v1739
        %v1746 = vadd.f32 %v1716, %v1739
        %v1747 = vadd.f32 %v1717, %v1739
        %v1748 = vadd.f32 %v1718, %v1739
        %v1749 = vadd.f32 %v1719, %v1739
        %v1750 = vadd.f32 %v1720, %v1739
        %v1751 = vadd.f32 %v1721, %v1739
        %v1752 = vadd.f32 %v1722, %v1739
        %v1753 = vadd.f32 %v1723, %v1739
        %v1754 = vadd.f32 %v1724, %v1739
        %v1755 = vadd.f32 %v1725, %v1739
        %v1756 = vadd.f32 %v1726, %v1739
        %v1757 = vadd.f32 %v1727, %v1739
        %v1758 = vadd.f32 %v1728, %v1739
        %v1759 = vadd.f32 %v1729, %v1739
        %v1760 = vadd.f32 %v1730, %v1739
        %v1761 = vadd.f32 %v1731, %v1739
        %v1762 = vadd.f32 %v1732, %v1739
        %v1763 = vadd.f32 %v1733, %v1739
        %v1764 = vmax.f32 %v1741, 0.0
        %v1765 = vmax.f32 %v1742, 0.0
        %v1766 = vmax.f32 %v1743, 0.0
        %v1767 = vmax.f32 %v1744, 0.0
        %v1768 = vmax.f32 %v1745, 0.0
        %v1769 = vmax.f32 %v1746, 0.0
        %v1770 = vmax.f32 %v1747, 0.0
        %v1771 = vmax.f32 %v1748, 0.0
        %v1772 = vmax.f32 %v1749, 0.0
        %v1773 = vmax.f32 %v1750, 0.0
        %v1774 = vmax.f32 %v1751, 0.0
        %v1775 = vmax.f32 %v1752, 0.0
        %v1776 = vmax.f32 %v1753, 0.0
        %v1777 = vmax.f32 %v1754, 0.0
        %v1778 = vmax.f32 %v1755, 0.0
        %v1779 = vmax.f32 %v1756, 0.0
        %v1780 = vmax.f32 %v1757, 0.0
        %v1781 = vmax.f32 %v1758, 0.0
        %v1782 = vmax.f32 %v1759, 0.0
        %v1783 = vmax.f32 %v1760, 0.0
        %v1784 = vmax.f32 %v1761, 0.0
        %v1785 = vmax.f32 %v1762, 0.0
        %v1786 = vmax.f32 %v1763, 0.0
        %vm1787 = vcmask 261120
        %1788 = vst.msk [vmem:[#allocation2] sm:$0xff] %vm1787, %v1764
        %1789 = vst.msk [vmem:[#allocation2 + $0x8] sm:$0xff] %vm1787, %v1765
        %1790 = vst.msk [vmem:[#allocation2 + $0x10] sm:$0xff] %vm1787, %v1766
        %1791 = vst.msk [vmem:[#allocation2 + $0x18] sm:$0xff] %vm1787, %v1767
        %1792 = vst.msk [vmem:[#allocation2 + $0x20] sm:$0xff] %vm1787, %v1768
        %1793 = vst.msk [vmem:[#allocation2 + $0x28] sm:$0xff] %vm1787, %v1769
        %1794 = vst.msk [vmem:[#allocation2 + $0x30] sm:$0xff] %vm1787, %v1770
        %1795 = vst.msk [vmem:[#allocation2 + $0x38] sm:$0xff] %vm1787, %v1771
        %1796 = vst.msk [vmem:[#allocation2 + $0x40] sm:$0xff] %vm1787, %v1772
        %1797 = vst.msk [vmem:[#allocation2 + $0x48] sm:$0xff] %vm1787, %v1773
        %1798 = vst.msk [vmem:[#allocation2 + $0x50] sm:$0xff] %vm1787, %v1774
        %1799 = vst.msk [vmem:[#allocation2 + $0x58] sm:$0xff] %vm1787, %v1775
        %1800 = vst.msk [vmem:[#allocation2 + $0x60] sm:$0xff] %vm1787, %v1776
        %1801 = vst.msk [vmem:[#allocation2 + $0x68] sm:$0xff] %vm1787, %v1777
        %1802 = vst.msk [vmem:[#allocation2 + $0x70] sm:$0xff] %vm1787, %v1778
        %1803 = vst.msk [vmem:[#allocation2 + $0x78] sm:$0xff] %vm1787, %v1779
        %1804 = vst.msk [vmem:[#allocation2 + $0x80] sm:$0xff] %vm1787, %v1780
        %1805 = vst.msk [vmem:[#allocation2 + $0x88] sm:$0xff] %vm1787, %v1781
        %1806 = vst.msk [vmem:[#allocation2 + $0x90] sm:$0xff] %vm1787, %v1782
        %1807 = vst.msk [vmem:[#allocation2 + $0x98] sm:$0xff] %vm1787, %v1783
        %1808 = vst.msk [vmem:[#allocation2 + $0xa0] sm:$0xff] %vm1787, %v1784
        %1809 = vst.msk [vmem:[#allocation2 + $0xa8] sm:$0xff] %vm1787, %v1785
        %vm1810 = vcmask 256000
        %1811 = vst.msk [vmem:[#allocation2 + $0xb0] sm:$0x7] %vm1810, %v1786
        %v1812 = vld [vmem:[#allocation2] ss:$2 sm:$0xff]
        %s1813 = scalar_lea.vmem [#allocation2], 16
        %v1814 = vld [vmem:[%s1813] ss:$2 sm:$0xff]
        %s1815 = scalar_lea.vmem [#allocation2], 32
        %v1816 = vld [vmem:[%s1815] ss:$2 sm:$0xff]
        %s1817 = scalar_lea.vmem [#allocation2], 48
        %v1818 = vld [vmem:[%s1817] ss:$2 sm:$0xff]
        %s1819 = scalar_lea.vmem [#allocation2], 64
        %v1820 = vld [vmem:[%s1819] ss:$2 sm:$0xff]
        %s1821 = scalar_lea.vmem [#allocation2], 80
        %v1822 = vld [vmem:[%s1821] ss:$2 sm:$0xff]
        %s1823 = scalar_lea.vmem [#allocation2], 96
        %v1824 = vld [vmem:[%s1823] ss:$2 sm:$0xff]
        %s1825 = scalar_lea.vmem [#allocation2], 112
        %v1826 = vld [vmem:[%s1825] ss:$2 sm:$0xff]
        %s1827 = scalar_lea.vmem [#allocation2], 128
        %v1828 = vld [vmem:[%s1827] ss:$2 sm:$0xff]
        %s1829 = scalar_lea.vmem [#allocation2], 144
        %v1830 = vld [vmem:[%s1829] ss:$2 sm:$0xff]
        %s1831 = scalar_lea.vmem [#allocation2], 160
        %v1832 = vld [vmem:[%s1831] ss:$2 sm:$0xff]
        %s1833 = scalar_lea.vmem [#allocation2], 176
        %v1834 = vld [vmem:[%s1833] ss:$2 sm:$0x3]
        %s1835 = scalar_lea.vmem [#allocation2], 1
        %v1836 = vld [vmem:[%s1835] ss:$2 sm:$0xff]
        %s1837 = scalar_lea.vmem [#allocation2], 17
        %v1838 = vld [vmem:[%s1837] ss:$2 sm:$0xff]
        %s1839 = scalar_lea.vmem [#allocation2], 33
        %v1840 = vld [vmem:[%s1839] ss:$2 sm:$0xff]
        %s1841 = scalar_lea.vmem [#allocation2], 49
        %v1842 = vld [vmem:[%s1841] ss:$2 sm:$0xff]
        %s1843 = scalar_lea.vmem [#allocation2], 65
        %v1844 = vld [vmem:[%s1843] ss:$2 sm:$0xff]
        %s1845 = scalar_lea.vmem [#allocation2], 81
        %v1846 = vld [vmem:[%s1845] ss:$2 sm:$0xff]
        %s1847 = scalar_lea.vmem [#allocation2], 97
        %v1848 = vld [vmem:[%s1847] ss:$2 sm:$0xff]
        %s1849 = scalar_lea.vmem [#allocation2], 113
        %v1850 = vld [vmem:[%s1849] ss:$2 sm:$0xff]
        %s1851 = scalar_lea.vmem [#allocation2], 129
        %v1852 = vld [vmem:[%s1851] ss:$2 sm:$0xff]
        %s1853 = scalar_lea.vmem [#allocation2], 145
        %v1854 = vld [vmem:[%s1853] ss:$2 sm:$0xff]
        %s1855 = scalar_lea.vmem [#allocation2], 161
        %v1856 = vld [vmem:[%s1855] ss:$2 sm:$0xff]
        %s1857 = scalar_lea.vmem [#allocation2], 177
        %v1858 = vld [vmem:[%s1857] ss:$2 sm:$0x1]
        %v1871 = vrot.slane %v1836, 7
        %v1872 = vrot.slane %v1838, 7
        %v1873 = vsel %vm1238, %v1871, %v1872
        %v1874 = vrot.slane %v1840, 7
        %v1875 = vsel %vm1238, %v1872, %v1874
        %v1876 = vrot.slane %v1842, 7
        %v1877 = vsel %vm1238, %v1874, %v1876
        %v1878 = vrot.slane %v1844, 7
        %v1879 = vsel %vm1238, %v1876, %v1878
        %v1880 = vrot.slane %v1846, 7
        %v1881 = vsel %vm1238, %v1878, %v1880
        %v1882 = vrot.slane %v1848, 7
        %v1883 = vsel %vm1238, %v1880, %v1882
        %v1884 = vrot.slane %v1850, 7
        %v1885 = vsel %vm1238, %v1882, %v1884
        %v1886 = vrot.slane %v1852, 7
        %v1887 = vsel %vm1238, %v1884, %v1886
        %v1888 = vrot.slane %v1854, 7
        %v1889 = vsel %vm1238, %v1886, %v1888
        %v1890 = vrot.slane %v1856, 7
        %v1891 = vsel %vm1238, %v1888, %v1890
        %v1892 = vrot.slane %v1858, 7
        %v1893 = vsel %vm1238, %v1890, %v1892
        %v1906 = vsel %vm1238, 0.0, %v1871
        %v1907 = vmax.f32 %v1812, %v1906
        %v1908 = vmax.f32 %v1814, %v1873
        %v1909 = vmax.f32 %v1816, %v1875
        %v1910 = vmax.f32 %v1818, %v1877
        %v1911 = vmax.f32 %v1820, %v1879
        %v1912 = vmax.f32 %v1822, %v1881
        %v1913 = vmax.f32 %v1824, %v1883
        %v1914 = vmax.f32 %v1826, %v1885
        %v1915 = vmax.f32 %v1828, %v1887
        %v1916 = vmax.f32 %v1830, %v1889
        %v1917 = vmax.f32 %v1832, %v1891
        %v1918 = vmax.f32 %v1834, %v1893
        %v1931 = vrot.slane %v1907, 4
        %v1932 = vrot.slane %v1908, 4
        %v1933 = vsel %vm473, %v1931, %v1932
        %v1934 = vrot.slane %v1909, 4
        %v1935 = vsel %vm473, %v1932, %v1934
        %v1936 = vrot.slane %v1910, 4
        %v1937 = vsel %vm473, %v1934, %v1936
        %v1938 = vrot.slane %v1911, 4
        %v1939 = vsel %vm473, %v1936, %v1938
        %v1940 = vrot.slane %v1912, 4
        %v1941 = vsel %vm473, %v1938, %v1940
        %v1942 = vrot.slane %v1913, 4
        %v1943 = vsel %vm473, %v1940, %v1942
        %v1944 = vrot.slane %v1914, 4
        %v1945 = vsel %vm473, %v1942, %v1944
        %v1946 = vrot.slane %v1915, 4
        %v1947 = vsel %vm473, %v1944, %v1946
        %v1948 = vrot.slane %v1916, 4
        %v1949 = vsel %vm473, %v1946, %v1948
        %v1950 = vrot.slane %v1917, 4
        %v1951 = vsel %vm473, %v1948, %v1950
        %v1952 = vrot.slane %v1918, 4
        %v1953 = vsel %vm473, %v1950, %v1952
        %v1966 = vsel %vm473, 0.0, %v1931
        %v1967 = vsel %vm543, %v1953, 0.0
        %v1970 = vrot.slane %v1966, 1
        %v1971 = vrot.slane %v1933, 1
        %v1972 = vsel %vm547, %v1970, %v1971
        %v1973 = vrot.slane %v1935, 1
        %v1974 = vsel %vm547, %v1971, %v1973
        %v1975 = vrot.slane %v1937, 1
        %v1976 = vsel %vm547, %v1973, %v1975
        %v1977 = vrot.slane %v1939, 1
        %v1978 = vsel %vm547, %v1975, %v1977
        %v1979 = vrot.slane %v1941, 1
        %v1980 = vsel %vm547, %v1977, %v1979
        %v1981 = vrot.slane %v1943, 1
        %v1982 = vsel %vm547, %v1979, %v1981
        %v1983 = vrot.slane %v1945, 1
        %v1984 = vsel %vm547, %v1981, %v1983
        %v1985 = vrot.slane %v1947, 1
        %v1986 = vsel %vm547, %v1983, %v1985
        %v1987 = vrot.slane %v1949, 1
        %v1988 = vsel %vm547, %v1985, %v1987
        %v1989 = vrot.slane %v1951, 1
        %v1990 = vsel %vm547, %v1987, %v1989
        %v1991 = vrot.slane %v1967, 1
        %v1992 = vsel %vm547, %v1989, %v1991
        %1993 = vrot.lane.b32.xlu0 %v1972, 32
        %v1994 = vpop.permute.xlu0 %1993
        %1995 = vrot.lane.b32.xlu0 %v1974, 32
        %v1996 = vpop.permute.xlu0 %1995
        %1997 = vrot.lane.b32.xlu0 %v1976, 32
        %v1998 = vpop.permute.xlu0 %1997
        %1999 = vrot.lane.b32.xlu0 %v1978, 32
        %v2000 = vpop.permute.xlu0 %1999
        %2001 = vrot.lane.b32.xlu0 %v1980, 32
        %v2002 = vpop.permute.xlu0 %2001
        %2003 = vrot.lane.b32.xlu0 %v1982, 32
        %v2004 = vpop.permute.xlu0 %2003
        %2005 = vrot.lane.b32.xlu0 %v1984, 32
        %v2006 = vpop.permute.xlu0 %2005
        %2007 = vrot.lane.b32.xlu0 %v1986, 32
        %v2008 = vpop.permute.xlu0 %2007
        %2009 = vrot.lane.b32.xlu0 %v1988, 32
        %v2010 = vpop.permute.xlu0 %2009
        %2011 = vrot.lane.b32.xlu0 %v1990, 32
        %v2012 = vpop.permute.xlu0 %2011
        %2013 = vrot.lane.b32.xlu0 %v1992, 32
        %v2014 = vpop.permute.xlu0 %2013
        %2015 = vrot.lane.b32.xlu0 %v1991, 32
        %v2016 = vpop.permute.xlu0 %2015
        %v2029 = vrot.slane %v1966, 2
        %v2030 = vrot.slane %v1933, 2
        %v2031 = vsel %vm543, %v2029, %v2030
        %v2032 = vrot.slane %v1935, 2
        %v2033 = vsel %vm543, %v2030, %v2032
        %v2034 = vrot.slane %v1937, 2
        %v2035 = vsel %vm543, %v2032, %v2034
        %v2036 = vrot.slane %v1939, 2
        %v2037 = vsel %vm543, %v2034, %v2036
        %v2038 = vrot.slane %v1941, 2
        %v2039 = vsel %vm543, %v2036, %v2038
        %v2040 = vrot.slane %v1943, 2
        %v2041 = vsel %vm543, %v2038, %v2040
        %v2042 = vrot.slane %v1945, 2
        %v2043 = vsel %vm543, %v2040, %v2042
        %v2044 = vrot.slane %v1947, 2
        %v2045 = vsel %vm543, %v2042, %v2044
        %v2046 = vrot.slane %v1949, 2
        %v2047 = vsel %vm543, %v2044, %v2046
        %v2048 = vrot.slane %v1951, 2
        %v2049 = vsel %vm543, %v2046, %v2048
        %v2050 = vrot.slane %v1967, 2
        %v2051 = vsel %vm543, %v2048, %v2050
        %2052 = vrot.lane.b32.xlu0 %v2031, 64
        %v2053 = vpop.permute.xlu0 %2052
        %2054 = vrot.lane.b32.xlu0 %v2033, 64
        %v2055 = vpop.permute.xlu0 %2054
        %2056 = vrot.lane.b32.xlu0 %v2035, 64
        %v2057 = vpop.permute.xlu0 %2056
        %2058 = vrot.lane.b32.xlu0 %v2037, 64
        %v2059 = vpop.permute.xlu0 %2058
        %2060 = vrot.lane.b32.xlu0 %v2039, 64
        %v2061 = vpop.permute.xlu0 %2060
        %2062 = vrot.lane.b32.xlu0 %v2041, 64
        %v2063 = vpop.permute.xlu0 %2062
        %2064 = vrot.lane.b32.xlu0 %v2043, 64
        %v2065 = vpop.permute.xlu0 %2064
        %2066 = vrot.lane.b32.xlu0 %v2045, 64
        %v2067 = vpop.permute.xlu0 %2066
        %2068 = vrot.lane.b32.xlu0 %v2047, 64
        %v2069 = vpop.permute.xlu0 %2068
        %2070 = vrot.lane.b32.xlu0 %v2049, 64
        %v2071 = vpop.permute.xlu0 %2070
        %2072 = vrot.lane.b32.xlu0 %v2051, 64
        %v2073 = vpop.permute.xlu0 %2072
        %2074 = vrot.lane.b32.xlu0 %v2050, 64
        %v2075 = vpop.permute.xlu0 %2074
        %v2088 = vrot.slane %v1966, 3
        %v2089 = vrot.slane %v1933, 3
        %v2090 = vsel %vm776, %v2088, %v2089
        %v2091 = vrot.slane %v1935, 3
        %v2092 = vsel %vm776, %v2089, %v2091
        %v2093 = vrot.slane %v1937, 3
        %v2094 = vsel %vm776, %v2091, %v2093
        %v2095 = vrot.slane %v1939, 3
        %v2096 = vsel %vm776, %v2093, %v2095
        %v2097 = vrot.slane %v1941, 3
        %v2098 = vsel %vm776, %v2095, %v2097
        %v2099 = vrot.slane %v1943, 3
        %v2100 = vsel %vm776, %v2097, %v2099
        %v2101 = vrot.slane %v1945, 3
        %v2102 = vsel %vm776, %v2099, %v2101
        %v2103 = vrot.slane %v1947, 3
        %v2104 = vsel %vm776, %v2101, %v2103
        %v2105 = vrot.slane %v1949, 3
        %v2106 = vsel %vm776, %v2103, %v2105
        %v2107 = vrot.slane %v1951, 3
        %v2108 = vsel %vm776, %v2105, %v2107
        %v2109 = vrot.slane %v1967, 3
        %v2110 = vsel %vm776, %v2107, %v2109
        %2111 = vrot.lane.b32.xlu0 %v2090, 96
        %v2112 = vpop.permute.xlu0 %2111
        %2113 = vrot.lane.b32.xlu0 %v2092, 96
        %v2114 = vpop.permute.xlu0 %2113
        %2115 = vrot.lane.b32.xlu0 %v2094, 96
        %v2116 = vpop.permute.xlu0 %2115
        %2117 = vrot.lane.b32.xlu0 %v2096, 96
        %v2118 = vpop.permute.xlu0 %2117
        %2119 = vrot.lane.b32.xlu0 %v2098, 96
        %v2120 = vpop.permute.xlu0 %2119
        %2121 = vrot.lane.b32.xlu0 %v2100, 96
        %v2122 = vpop.permute.xlu0 %2121
        %2123 = vrot.lane.b32.xlu0 %v2102, 96
        %v2124 = vpop.permute.xlu0 %2123
        %2125 = vrot.lane.b32.xlu0 %v2104, 96
        %v2126 = vpop.permute.xlu0 %2125
        %2127 = vrot.lane.b32.xlu0 %v2106, 96
        %v2128 = vpop.permute.xlu0 %2127
        %2129 = vrot.lane.b32.xlu0 %v2108, 96
        %v2130 = vpop.permute.xlu0 %2129
        %2131 = vrot.lane.b32.xlu0 %v2110, 96
        %v2132 = vpop.permute.xlu0 %2131
        %2133 = vrot.lane.b32.xlu0 %v2109, 96
        %v2134 = vpop.permute.xlu0 %2133
        %v2147 = vrot.slane %v1966, 4
        %v2148 = vrot.slane %v1933, 4
        %v2149 = vsel %vm473, %v2147, %v2148
        %v2150 = vrot.slane %v1935, 4
        %v2151 = vsel %vm473, %v2148, %v2150
        %v2152 = vrot.slane %v1937, 4
        %v2153 = vsel %vm473, %v2150, %v2152
        %v2154 = vrot.slane %v1939, 4
        %v2155 = vsel %vm473, %v2152, %v2154
        %v2156 = vrot.slane %v1941, 4
        %v2157 = vsel %vm473, %v2154, %v2156
        %v2158 = vrot.slane %v1943, 4
        %v2159 = vsel %vm473, %v2156, %v2158
        %v2160 = vrot.slane %v1945, 4
        %v2161 = vsel %vm473, %v2158, %v2160
        %v2162 = vrot.slane %v1947, 4
        %v2163 = vsel %vm473, %v2160, %v2162
        %v2164 = vrot.slane %v1949, 4
        %v2165 = vsel %vm473, %v2162, %v2164
        %v2166 = vrot.slane %v1951, 4
        %v2167 = vsel %vm473, %v2164, %v2166
        %v2168 = vrot.slane %v1967, 4
        %v2169 = vsel %vm473, %v2166, %v2168
        %v2182 = vrot.slane %v1966, 5
        %v2183 = vrot.slane %v1933, 5
        %v2184 = vsel %vm1005, %v2182, %v2183
        %v2185 = vrot.slane %v1935, 5
        %v2186 = vsel %vm1005, %v2183, %v2185
        %v2187 = vrot.slane %v1937, 5
        %v2188 = vsel %vm1005, %v2185, %v2187
        %v2189 = vrot.slane %v1939, 5
        %v2190 = vsel %vm1005, %v2187, %v2189
        %v2191 = vrot.slane %v1941, 5
        %v2192 = vsel %vm1005, %v2189, %v2191
        %v2193 = vrot.slane %v1943, 5
        %v2194 = vsel %vm1005, %v2191, %v2193
        %v2195 = vrot.slane %v1945, 5
        %v2196 = vsel %vm1005, %v2193, %v2195
        %v2197 = vrot.slane %v1947, 5
        %v2198 = vsel %vm1005, %v2195, %v2197
        %v2199 = vrot.slane %v1949, 5
        %v2200 = vsel %vm1005, %v2197, %v2199
        %v2201 = vrot.slane %v1951, 5
        %v2202 = vsel %vm1005, %v2199, %v2201
        %v2203 = vrot.slane %v1967, 5
        %v2204 = vsel %vm1005, %v2201, %v2203
        %2205 = vrot.lane.b32.xlu0 %v2184, 32
        %v2206 = vpop.permute.xlu0 %2205
        %2207 = vrot.lane.b32.xlu0 %v2186, 32
        %v2208 = vpop.permute.xlu0 %2207
        %2209 = vrot.lane.b32.xlu0 %v2188, 32
        %v2210 = vpop.permute.xlu0 %2209
        %2211 = vrot.lane.b32.xlu0 %v2190, 32
        %v2212 = vpop.permute.xlu0 %2211
        %2213 = vrot.lane.b32.xlu0 %v2192, 32
        %v2214 = vpop.permute.xlu0 %2213
        %2215 = vrot.lane.b32.xlu0 %v2194, 32
        %v2216 = vpop.permute.xlu0 %2215
        %2217 = vrot.lane.b32.xlu0 %v2196, 32
        %v2218 = vpop.permute.xlu0 %2217
        %2219 = vrot.lane.b32.xlu0 %v2198, 32
        %v2220 = vpop.permute.xlu0 %2219
        %2221 = vrot.lane.b32.xlu0 %v2200, 32
        %v2222 = vpop.permute.xlu0 %2221
        %2223 = vrot.lane.b32.xlu0 %v2202, 32
        %v2224 = vpop.permute.xlu0 %2223
        %2225 = vrot.lane.b32.xlu0 %v2204, 32
        %v2226 = vpop.permute.xlu0 %2225
        %2227 = vrot.lane.b32.xlu0 %v2203, 32
        %v2228 = vpop.permute.xlu0 %2227
        %v2241 = vrot.slane %v1966, 6
        %v2242 = vrot.slane %v1933, 6
        %v2243 = vsel %vm1121, %v2241, %v2242
        %v2244 = vrot.slane %v1935, 6
        %v2245 = vsel %vm1121, %v2242, %v2244
        %v2246 = vrot.slane %v1937, 6
        %v2247 = vsel %vm1121, %v2244, %v2246
        %v2248 = vrot.slane %v1939, 6
        %v2249 = vsel %vm1121, %v2246, %v2248
        %v2250 = vrot.slane %v1941, 6
        %v2251 = vsel %vm1121, %v2248, %v2250
        %v2252 = vrot.slane %v1943, 6
        %v2253 = vsel %vm1121, %v2250, %v2252
        %v2254 = vrot.slane %v1945, 6
        %v2255 = vsel %vm1121, %v2252, %v2254
        %v2256 = vrot.slane %v1947, 6
        %v2257 = vsel %vm1121, %v2254, %v2256
        %v2258 = vrot.slane %v1949, 6
        %v2259 = vsel %vm1121, %v2256, %v2258
        %v2260 = vrot.slane %v1951, 6
        %v2261 = vsel %vm1121, %v2258, %v2260
        %v2262 = vrot.slane %v1967, 6
        %v2263 = vsel %vm1121, %v2260, %v2262
        %v2264 = vsel %vm1121, %v2262, %v1167
        %2265 = vrot.lane.b32.xlu0 %v2243, 64
        %v2266 = vpop.permute.xlu0 %2265
        %2267 = vrot.lane.b32.xlu0 %v2245, 64
        %v2268 = vpop.permute.xlu0 %2267
        %2269 = vrot.lane.b32.xlu0 %v2247, 64
        %v2270 = vpop.permute.xlu0 %2269
        %2271 = vrot.lane.b32.xlu0 %v2249, 64
        %v2272 = vpop.permute.xlu0 %2271
        %2273 = vrot.lane.b32.xlu0 %v2251, 64
        %v2274 = vpop.permute.xlu0 %2273
        %2275 = vrot.lane.b32.xlu0 %v2253, 64
        %v2276 = vpop.permute.xlu0 %2275
        %2277 = vrot.lane.b32.xlu0 %v2255, 64
        %v2278 = vpop.permute.xlu0 %2277
        %2279 = vrot.lane.b32.xlu0 %v2257, 64
        %v2280 = vpop.permute.xlu0 %2279
        %2281 = vrot.lane.b32.xlu0 %v2259, 64
        %v2282 = vpop.permute.xlu0 %2281
        %2283 = vrot.lane.b32.xlu0 %v2261, 64
        %v2284 = vpop.permute.xlu0 %2283
        %2285 = vrot.lane.b32.xlu0 %v2263, 64
        %v2286 = vpop.permute.xlu0 %2285
        %2287 = vrot.lane.b32.xlu0 %v2264, 64
        %v2288 = vpop.permute.xlu0 %2287
        %v2301 = vrot.slane %v1966, 7
        %v2302 = vrot.slane %v1933, 7
        %v2303 = vsel %vm1238, %v2301, %v2302
        %v2304 = vrot.slane %v1935, 7
        %v2305 = vsel %vm1238, %v2302, %v2304
        %v2306 = vrot.slane %v1937, 7
        %v2307 = vsel %vm1238, %v2304, %v2306
        %v2308 = vrot.slane %v1939, 7
        %v2309 = vsel %vm1238, %v2306, %v2308
        %v2310 = vrot.slane %v1941, 7
        %v2311 = vsel %vm1238, %v2308, %v2310
        %v2312 = vrot.slane %v1943, 7
        %v2313 = vsel %vm1238, %v2310, %v2312
        %v2314 = vrot.slane %v1945, 7
        %v2315 = vsel %vm1238, %v2312, %v2314
        %v2316 = vrot.slane %v1947, 7
        %v2317 = vsel %vm1238, %v2314, %v2316
        %v2318 = vrot.slane %v1949, 7
        %v2319 = vsel %vm1238, %v2316, %v2318
        %v2320 = vrot.slane %v1951, 7
        %v2321 = vsel %vm1238, %v2318, %v2320
        %v2322 = vrot.slane %v1967, 7
        %v2323 = vsel %vm1238, %v2320, %v2322
        %v2324 = vsel %vm1238, %v2322, %v1284
        %2325 = vrot.lane.b32.xlu0 %v2303, 96
        %v2326 = vpop.permute.xlu0 %2325
        %2327 = vrot.lane.b32.xlu0 %v2305, 96
        %v2328 = vpop.permute.xlu0 %2327
        %2329 = vrot.lane.b32.xlu0 %v2307, 96
        %v2330 = vpop.permute.xlu0 %2329
        %2331 = vrot.lane.b32.xlu0 %v2309, 96
        %v2332 = vpop.permute.xlu0 %2331
        %2333 = vrot.lane.b32.xlu0 %v2311, 96
        %v2334 = vpop.permute.xlu0 %2333
        %2335 = vrot.lane.b32.xlu0 %v2313, 96
        %v2336 = vpop.permute.xlu0 %2335
        %2337 = vrot.lane.b32.xlu0 %v2315, 96
        %v2338 = vpop.permute.xlu0 %2337
        %2339 = vrot.lane.b32.xlu0 %v2317, 96
        %v2340 = vpop.permute.xlu0 %2339
        %2341 = vrot.lane.b32.xlu0 %v2319, 96
        %v2342 = vpop.permute.xlu0 %2341
        %2343 = vrot.lane.b32.xlu0 %v2321, 96
        %v2344 = vpop.permute.xlu0 %2343
        %2345 = vrot.lane.b32.xlu0 %v2323, 96
        %v2346 = vpop.permute.xlu0 %2345
        %2347 = vrot.lane.b32.xlu0 %v2324, 96
        %v2348 = vpop.permute.xlu0 %2347
        %v2361 = vsel %vm1787, %v1966, %v1994
        %v2362 = vsel %vm1787, %v1933, %v1996
        %v2363 = vsel %vm1787, %v1935, %v1998
        %v2364 = vsel %vm1787, %v1937, %v2000
        %v2365 = vsel %vm1787, %v1939, %v2002
        %v2366 = vsel %vm1787, %v1941, %v2004
        %v2367 = vsel %vm1787, %v1943, %v2006
        %v2368 = vsel %vm1787, %v1945, %v2008
        %v2369 = vsel %vm1787, %v1947, %v2010
        %v2370 = vsel %vm1787, %v1949, %v2012
        %v2371 = vsel %vm1787, %v1951, %v2014
        %v2372 = vsel %vm1787, %v1967, %v2016
        %vm2373 = vcmask 523264
        %v2374 = vsel %vm2373, %v2361, %v2053
        %v2375 = vsel %vm2373, %v2362, %v2055
        %v2376 = vsel %vm2373, %v2363, %v2057
        %v2377 = vsel %vm2373, %v2364, %v2059
        %v2378 = vsel %vm2373, %v2365, %v2061
        %v2379 = vsel %vm2373, %v2366, %v2063
        %v2380 = vsel %vm2373, %v2367, %v2065
        %v2381 = vsel %vm2373, %v2368, %v2067
        %v2382 = vsel %vm2373, %v2369, %v2069
        %v2383 = vsel %vm2373, %v2370, %v2071
        %v2384 = vsel %vm2373, %v2371, %v2073
        %v2385 = vsel %vm2373, %v2372, %v2075
        %vm2386 = vcmask 785408
        %v2387 = vsel %vm2386, %v2374, %v2112
        %v2388 = vsel %vm2386, %v2375, %v2114
        %v2389 = vsel %vm2386, %v2376, %v2116
        %v2390 = vsel %vm2386, %v2377, %v2118
        %v2391 = vsel %vm2386, %v2378, %v2120
        %v2392 = vsel %vm2386, %v2379, %v2122
        %v2393 = vsel %vm2386, %v2380, %v2124
        %v2394 = vsel %vm2386, %v2381, %v2126
        %v2395 = vsel %vm2386, %v2382, %v2128
        %v2396 = vsel %vm2386, %v2383, %v2130
        %v2397 = vsel %vm2386, %v2384, %v2132
        %v2398 = vsel %vm2386, %v2385, %v2134
        %v2399 = vsel %vm1787, %v2149, %v2206
        %v2400 = vsel %vm1787, %v2151, %v2208
        %v2401 = vsel %vm1787, %v2153, %v2210
        %v2402 = vsel %vm1787, %v2155, %v2212
        %v2403 = vsel %vm1787, %v2157, %v2214
        %v2404 = vsel %vm1787, %v2159, %v2216
        %v2405 = vsel %vm1787, %v2161, %v2218
        %v2406 = vsel %vm1787, %v2163, %v2220
        %v2407 = vsel %vm1787, %v2165, %v2222
        %v2408 = vsel %vm1787, %v2167, %v2224
        %v2409 = vsel %vm1787, %v2169, %v2226
        %v2410 = vsel %vm1787, %v2168, %v2228
        %v2411 = vsel %vm2373, %v2399, %v2266
        %v2412 = vsel %vm2373, %v2400, %v2268
        %v2413 = vsel %vm2373, %v2401, %v2270
        %v2414 = vsel %vm2373, %v2402, %v2272
        %v2415 = vsel %vm2373, %v2403, %v2274
        %v2416 = vsel %vm2373, %v2404, %v2276
        %v2417 = vsel %vm2373, %v2405, %v2278
        %v2418 = vsel %vm2373, %v2406, %v2280
        %v2419 = vsel %vm2373, %v2407, %v2282
        %v2420 = vsel %vm2373, %v2408, %v2284
        %v2421 = vsel %vm2373, %v2409, %v2286
        %v2422 = vsel %vm2373, %v2410, %v2288
        %v2423 = vsel %vm2386, %v2411, %v2326
        %v2424 = vsel %vm2386, %v2412, %v2328
        %v2425 = vsel %vm2386, %v2413, %v2330
        %v2426 = vsel %vm2386, %v2414, %v2332
        %v2427 = vsel %vm2386, %v2415, %v2334
        %v2428 = vsel %vm2386, %v2416, %v2336
        %v2429 = vsel %vm2386, %v2417, %v2338
        %v2430 = vsel %vm2386, %v2418, %v2340
        %v2431 = vsel %vm2386, %v2419, %v2342
        %v2432 = vsel %vm2386, %v2420, %v2344
        %v2433 = vsel %vm2386, %v2421, %v2346
        %v2434 = vsel %vm2386, %v2422, %v2348
        %v2435 = vpack.c.bf16 %v2388, %v2387
        %v2436 = vpack.c.bf16 %v2424, %v2423
        %v2437 = vpack.c.bf16 %v2390, %v2389
        %v2438 = vpack.c.bf16 %v2426, %v2425
        %v2439 = vpack.c.bf16 %v2392, %v2391
        %v2440 = vpack.c.bf16 %v2428, %v2427
        %v2441 = vpack.c.bf16 %v2394, %v2393
        %v2442 = vpack.c.bf16 %v2430, %v2429
        %v2443 = vpack.c.bf16 %v2396, %v2395
        %v2444 = vpack.c.bf16 %v2432, %v2431
        %v2445 = vpack.c.bf16 %v2398, %v2397
        %v2446 = vpack.c.bf16 %v2434, %v2433
        %v2447 = vld [vmem:[%s4] sm:$0xf]
        %v2448 = vld [vmem:[%s4 + $0x4] sm:$0xf]
        %v2449 = vld [vmem:[%s4 + $0x8] sm:$0xf]
        %v2450 = vld [vmem:[%s4 + $0xc] sm:$0xf]
        %v2451 = vld [vmem:[%s4 + $0x10] sm:$0xf]
        %v2452 = vld [vmem:[%s4 + $0x14] sm:$0xf]
        %v2453 = vld [vmem:[%s4 + $0x18] sm:$0xf]
        %v2454 = vld [vmem:[%s4 + $0x1c] sm:$0xf]
        %v2455 = vld [vmem:[%s4 + $0x20] sm:$0xf]
        %v2456 = vld [vmem:[%s4 + $0x24] sm:$0xf]
        %v2457 = vld [vmem:[%s4 + $0x28] sm:$0xf]
        %v2458 = vld [vmem:[%s4 + $0x2c] sm:$0xf]
        %v2459 = vld [vmem:[%s4 + $0x30] sm:$0xf]
        %v2460 = vld [vmem:[%s4 + $0x34] sm:$0xf]
        %v2461 = vld [vmem:[%s4 + $0x38] sm:$0xf]
        %v2462 = vld [vmem:[%s4 + $0x3c] sm:$0xf]
        %v2463 = vld [vmem:[%s4 + $0x40] sm:$0xf]
        %v2464 = vld [vmem:[%s4 + $0x44] sm:$0xf]
        %v2465 = vld [vmem:[%s4 + $0x48] sm:$0xf]
        %v2466 = vld [vmem:[%s4 + $0x4c] sm:$0xf]
        %v2467 = vld [vmem:[%s4 + $0x50] sm:$0xf]
        %v2468 = vld [vmem:[%s4 + $0x54] sm:$0xf]
        %v2469 = vld [vmem:[%s4 + $0x58] sm:$0xf]
        %v2470 = vld [vmem:[%s4 + $0x5c] sm:$0xf]
        %v2471 = vld [vmem:[%s4 + $0x60] sm:$0xf]
        %v2472 = vld [vmem:[%s4 + $0x64] sm:$0xf]
        %v2473 = vld [vmem:[%s4 + $0x68] sm:$0xf]
        %v2474 = vld [vmem:[%s4 + $0x6c] sm:$0xf]
        %v2475 = vld [vmem:[%s4 + $0x70] sm:$0xf]
        %v2476 = vld [vmem:[%s4 + $0x74] sm:$0xf]
        %v2477 = vld [vmem:[%s4 + $0x78] sm:$0xf]
        %v2478 = vld [vmem:[%s4 + $0x7c] sm:$0xf]
        %v2511 = vunpack.c.l.b16 %v2447
        %v2512 = vunpack.c.l.b16 %v2448
        %v2513 = vunpack.c.l.b16 %v2449
        %v2514 = vunpack.c.l.b16 %v2450
        %v2515 = vunpack.c.l.b16 %v2451
        %v2516 = vunpack.c.l.b16 %v2452
        %v2517 = vunpack.c.l.b16 %v2453
        %v2518 = vunpack.c.l.b16 %v2454
        %v2519 = vunpack.c.l.b16 %v2455
        %v2520 = vunpack.c.l.b16 %v2456
        %v2521 = vunpack.c.l.b16 %v2457
        %v2522 = vunpack.c.l.b16 %v2458
        %v2523 = vunpack.c.l.b16 %v2459
        %v2524 = vunpack.c.l.b16 %v2460
        %v2525 = vunpack.c.l.b16 %v2461
        %v2526 = vunpack.c.l.b16 %v2462
        %v2527 = vunpack.c.l.b16 %v2463
        %v2528 = vunpack.c.l.b16 %v2464
        %v2529 = vunpack.c.l.b16 %v2465
        %v2530 = vunpack.c.l.b16 %v2466
        %v2531 = vunpack.c.l.b16 %v2467
        %v2532 = vunpack.c.l.b16 %v2468
        %v2533 = vunpack.c.l.b16 %v2469
        %v2534 = vunpack.c.l.b16 %v2470
        %v2535 = vunpack.c.l.b16 %v2471
        %v2536 = vunpack.c.l.b16 %v2472
        %v2537 = vunpack.c.l.b16 %v2473
        %v2538 = vunpack.c.l.b16 %v2474
        %v2539 = vunpack.c.l.b16 %v2475
        %v2540 = vunpack.c.l.b16 %v2476
        %v2541 = vunpack.c.l.b16 %v2477
        %v2542 = vunpack.c.l.b16 %v2478
        %v2543 = vpack.c.b16 %v2512, %v2511
        %v2544 = vpack.c.b16 %v2514, %v2513
        %v2545 = vpack.c.b16 %v2516, %v2515
        %v2546 = vpack.c.b16 %v2518, %v2517
        %v2547 = vpack.c.b16 %v2520, %v2519
        %v2548 = vpack.c.b16 %v2522, %v2521
        %v2549 = vpack.c.b16 %v2524, %v2523
        %v2550 = vpack.c.b16 %v2526, %v2525
        %v2551 = vpack.c.b16 %v2528, %v2527
        %v2552 = vpack.c.b16 %v2530, %v2529
        %v2553 = vpack.c.b16 %v2532, %v2531
        %v2554 = vpack.c.b16 %v2534, %v2533
        %v2555 = vpack.c.b16 %v2536, %v2535
        %v2556 = vpack.c.b16 %v2538, %v2537
        %v2557 = vpack.c.b16 %v2540, %v2539
        %v2558 = vpack.c.b16 %v2542, %v2541
        %2575 = vmatprep.subr.bf16.mxu0 0
        %2576 = vmatpush1.bf16.msra.mxu0 %v2543
        %2577 = vmatprep.subr.bf16.mxu0 0
        %2578 = vmatpush1.bf16.msra.mxu0 %v2544
        %2579 = vmatprep.subr.bf16.mxu0 0
        %2580 = vmatpush1.bf16.msra.mxu0 %v2545
        %2581 = vmatprep.subr.bf16.mxu0 0
        %2582 = vmatpush1.bf16.msra.mxu0 %v2546
        %2583 = vmatprep.subr.bf16.mxu0 0
        %2584 = vmatpush1.bf16.msra.mxu0 %v2547
        %2585 = vmatprep.subr.bf16.mxu0 0
        %2586 = vmatpush1.bf16.msra.mxu0 %v2548
        %2587 = vmatprep.subr.bf16.mxu0 0
        %2588 = vmatpush1.bf16.msra.mxu0 %v2549
        %2589 = vmatprep.subr.bf16.mxu0 0
        %2590 = vmatpush1.bf16.msra.mxu0 %v2550
        %2591 = vmatprep.subr.bf16.mxu0 0
        %2592 = vmatpush1.bf16.msra.mxu0 %v2551
        %2593 = vmatprep.subr.bf16.mxu0 0
        %2594 = vmatpush1.bf16.msra.mxu0 %v2552
        %2595 = vmatprep.subr.bf16.mxu0 0
        %2596 = vmatpush1.bf16.msra.mxu0 %v2553
        %2597 = vmatprep.subr.bf16.mxu0 0
        %2598 = vmatpush1.bf16.msra.mxu0 %v2554
        %2599 = vmatprep.subr.bf16.mxu0 0
        %2600 = vmatpush1.bf16.msra.mxu0 %v2555
        %2601 = vmatprep.subr.bf16.mxu0 0
        %2602 = vmatpush1.bf16.msra.mxu0 %v2556
        %2603 = vmatprep.subr.bf16.mxu0 0
        %2604 = vmatpush1.bf16.msra.mxu0 %v2557
        %2605 = vmatprep.subr.bf16.mxu0 0
        %2606 = vmatpush1.bf16.msra.mxu0 %v2558
        %2607 = vmatprep.mubr.bf16.mxu0 %v2436
        %2608 = vmatmul.mubr.bf16.gmra.mrb[0].mxu0 %v2435
        %v2609 = vpop.f32.mrb[0].mxu0
        %v2610 = vadd.f32 0.0, %v2609
        %v2611 = vpop.f32.mrb[0].mxu0
        %v2612 = vpop.f32.mrb[0].mxu0
        %v2613 = vadd.f32 0.0, %v2612
        %v2614 = vpop.f32.mrb[0].mxu0
        %2615 = vmatprep.mubr.bf16.mxu0 %v2438
        %2616 = vmatmul.mubr.bf16.gmra.mrb[0].mxu0 %v2437
        %v2617 = vpop.f32.mrb[0].mxu0
        %v2618 = vadd.f32 0.0, %v2617
        %v2619 = vpop.f32.mrb[0].mxu0
        %v2620 = vpop.f32.mrb[0].mxu0
        %v2621 = vadd.f32 0.0, %v2620
        %v2622 = vpop.f32.mrb[0].mxu0
        %2623 = vmatprep.mubr.bf16.mxu0 %v2440
        %2624 = vmatmul.mubr.bf16.gmra.mrb[0].mxu0 %v2439
        %v2625 = vpop.f32.mrb[0].mxu0
        %v2626 = vadd.f32 0.0, %v2625
        %v2627 = vpop.f32.mrb[0].mxu0
        %v2628 = vpop.f32.mrb[0].mxu0
        %v2629 = vadd.f32 0.0, %v2628
        %v2630 = vpop.f32.mrb[0].mxu0
        %2631 = vmatprep.mubr.bf16.mxu0 %v2442
        %2632 = vmatmul.mubr.bf16.gmra.mrb[0].mxu0 %v2441
        %v2633 = vpop.f32.mrb[0].mxu0
        %v2634 = vadd.f32 0.0, %v2633
        %v2635 = vpop.f32.mrb[0].mxu0
        %v2636 = vpop.f32.mrb[0].mxu0
        %v2637 = vadd.f32 0.0, %v2636
        %v2638 = vpop.f32.mrb[0].mxu0
        %2639 = vmatprep.mubr.bf16.mxu0 %v2444
        %2640 = vmatmul.mubr.bf16.gmra.mrb[0].mxu0 %v2443
        %v2641 = vpop.f32.mrb[0].mxu0
        %v2642 = vadd.f32 0.0, %v2641
        %v2643 = vpop.f32.mrb[0].mxu0
        %v2644 = vpop.f32.mrb[0].mxu0
        %v2645 = vadd.f32 0.0, %v2644
        %v2646 = vpop.f32.mrb[0].mxu0
        %2647 = vmatprep.mubr.bf16.mxu0 %v2446
        %2648 = vmatmul.mubr.bf16.gmra.mrb[0].mxu0 %v2445
        %v2649 = vpop.f32.mrb[0].mxu0
        %v2650 = vadd.f32 0.0, %v2649
        %v2651 = vpop.f32.mrb[0].mxu0
        %v2652 = vpop.f32.mrb[0].mxu0
        %v2653 = vadd.f32 0.0, %v2652
        %v2654 = vpop.f32.mrb[0].mxu0
        %2655 = vdwg.mxu0
        %v2656 = vld [vmem:[%s5] sm:$0x1]
        %v2658 = vlaneseq
        %v2659 = vshrl.u32 %v2658, 7
        %v2660 = vsub.s32 0, %v2659
        %v2661 = vrot.slane %v2656, %v2660
        %v2663 = vmul.f32 %v2610, %v2661
        %v2664 = vmul.f32 %v2613, %v2661
        %v2665 = vmul.f32 %v2618, %v2661
        %v2666 = vmul.f32 %v2621, %v2661
        %v2667 = vmul.f32 %v2626, %v2661
        %v2668 = vmul.f32 %v2629, %v2661
        %v2669 = vmul.f32 %v2634, %v2661
        %v2670 = vmul.f32 %v2637, %v2661
        %v2671 = vmul.f32 %v2642, %v2661
        %v2672 = vmul.f32 %v2645, %v2661
        %v2673 = vmul.f32 %v2650, %v2661
        %v2674 = vmul.f32 %v2653, %v2661
        %v2675 = vld [vmem:[%s6] sm:$0x1]
        %v2677 = vlaneseq
        %v2678 = vshrl.u32 %v2677, 7
        %v2679 = vsub.s32 0, %v2678
        %v2680 = vrot.slane %v2675, %v2679
        %v2682 = vadd.f32 %v2663, %v2680
        %v2683 = vadd.f32 %v2664, %v2680
        %v2684 = vadd.f32 %v2665, %v2680
        %v2685 = vadd.f32 %v2666, %v2680
        %v2686 = vadd.f32 %v2667, %v2680
        %v2687 = vadd.f32 %v2668, %v2680
        %v2688 = vadd.f32 %v2669, %v2680
        %v2689 = vadd.f32 %v2670, %v2680
        %v2690 = vadd.f32 %v2671, %v2680
        %v2691 = vadd.f32 %v2672, %v2680
        %v2692 = vadd.f32 %v2673, %v2680
        %v2693 = vadd.f32 %v2674, %v2680
        %v2694 = vmax.f32 %v2682, 0.0
        %v2695 = vmax.f32 %v2683, 0.0
        %v2696 = vmax.f32 %v2684, 0.0
        %v2697 = vmax.f32 %v2685, 0.0
        %v2698 = vmax.f32 %v2686, 0.0
        %v2699 = vmax.f32 %v2687, 0.0
        %v2700 = vmax.f32 %v2688, 0.0
        %v2701 = vmax.f32 %v2689, 0.0
        %v2702 = vmax.f32 %v2690, 0.0
        %v2703 = vmax.f32 %v2691, 0.0
        %v2704 = vmax.f32 %v2692, 0.0
        %v2705 = vmax.f32 %v2693, 0.0
        %2706 = vst.msk [vmem:[#allocation3] sm:$0xff] %vm2373, %v2694
        %2707 = vst.msk [vmem:[#allocation3 + $0x8] sm:$0xff] %vm2373, %v2695
        %2708 = vst.msk [vmem:[#allocation3 + $0x10] sm:$0xff] %vm2373, %v2696
        %2709 = vst.msk [vmem:[#allocation3 + $0x18] sm:$0xff] %vm2373, %v2697
        %2710 = vst.msk [vmem:[#allocation3 + $0x20] sm:$0xff] %vm2373, %v2698
        %2711 = vst.msk [vmem:[#allocation3 + $0x28] sm:$0xff] %vm2373, %v2699
        %2712 = vst.msk [vmem:[#allocation3 + $0x30] sm:$0xff] %vm2373, %v2700
        %2713 = vst.msk [vmem:[#allocation3 + $0x38] sm:$0xff] %vm2373, %v2701
        %2714 = vst.msk [vmem:[#allocation3 + $0x40] sm:$0xff] %vm2373, %v2702
        %2715 = vst.msk [vmem:[#allocation3 + $0x48] sm:$0xff] %vm2373, %v2703
        %2716 = vst.msk [vmem:[#allocation3 + $0x50] sm:$0xff] %vm2373, %v2704
        %vm2717 = vcmask 518144
        %2718 = vst.msk [vmem:[#allocation3 + $0x58] sm:$0x7] %vm2717, %v2705
        %v2719 = vld [vmem:[#allocation3] ss:$2 sm:$0xff]
        %s2720 = scalar_lea.vmem [#allocation3], 16
        %v2721 = vld [vmem:[%s2720] ss:$2 sm:$0xff]
        %s2722 = scalar_lea.vmem [#allocation3], 32
        %v2723 = vld [vmem:[%s2722] ss:$2 sm:$0xff]
        %s2724 = scalar_lea.vmem [#allocation3], 48
        %v2725 = vld [vmem:[%s2724] ss:$2 sm:$0xff]
        %s2726 = scalar_lea.vmem [#allocation3], 64
        %v2727 = vld [vmem:[%s2726] ss:$2 sm:$0xff]
        %s2728 = scalar_lea.vmem [#allocation3], 80
        %v2729 = vld [vmem:[%s2728] ss:$2 sm:$0x3f]
        %s2730 = scalar_lea.vmem [#allocation3], 1
        %v2731 = vld [vmem:[%s2730] ss:$2 sm:$0xff]
        %s2732 = scalar_lea.vmem [#allocation3], 17
        %v2733 = vld [vmem:[%s2732] ss:$2 sm:$0xff]
        %s2734 = scalar_lea.vmem [#allocation3], 33
        %v2735 = vld [vmem:[%s2734] ss:$2 sm:$0xff]
        %s2736 = scalar_lea.vmem [#allocation3], 49
        %v2737 = vld [vmem:[%s2736] ss:$2 sm:$0xff]
        %s2738 = scalar_lea.vmem [#allocation3], 65
        %v2739 = vld [vmem:[%s2738] ss:$2 sm:$0xff]
        %s2740 = scalar_lea.vmem [#allocation3], 81
        %v2741 = vld [vmem:[%s2740] ss:$2 sm:$0x1f]
        %v2748 = vrot.slane %v2731, 7
        %v2749 = vrot.slane %v2733, 7
        %v2750 = vsel %vm1238, %v2748, %v2749
        %v2751 = vrot.slane %v2735, 7
        %v2752 = vsel %vm1238, %v2749, %v2751
        %v2753 = vrot.slane %v2737, 7
        %v2754 = vsel %vm1238, %v2751, %v2753
        %v2755 = vrot.slane %v2739, 7
        %v2756 = vsel %vm1238, %v2753, %v2755
        %v2757 = vrot.slane %v2741, 7
        %v2758 = vsel %vm1238, %v2755, %v2757
        %v2765 = vsel %vm1238, 0.0, %v2748
        %v2766 = vmax.f32 %v2719, %v2765
        %v2767 = vmax.f32 %v2721, %v2750
        %v2768 = vmax.f32 %v2723, %v2752
        %v2769 = vmax.f32 %v2725, %v2754
        %v2770 = vmax.f32 %v2727, %v2756
        %v2771 = vmax.f32 %v2729, %v2758
        %v2778 = vrot.slane %v2766, 4
        %v2779 = vrot.slane %v2767, 4
        %v2780 = vsel %vm473, %v2778, %v2779
        %v2781 = vrot.slane %v2768, 4
        %v2782 = vsel %vm473, %v2779, %v2781
        %v2783 = vrot.slane %v2769, 4
        %v2784 = vsel %vm473, %v2781, %v2783
        %v2785 = vrot.slane %v2770, 4
        %v2786 = vsel %vm473, %v2783, %v2785
        %v2787 = vrot.slane %v2771, 4
        %v2788 = vsel %vm473, %v2785, %v2787
        %v2796 = vsel %vm473, 0.0, %v2778
        %v2797 = vsel %vm1121, %v2787, 0.0
        %v2799 = vrot.slane %v2796, 1
        %v2800 = vrot.slane %v2780, 1
        %v2801 = vsel %vm547, %v2799, %v2800
        %v2802 = vrot.slane %v2782, 1
        %v2803 = vsel %vm547, %v2800, %v2802
        %v2804 = vrot.slane %v2784, 1
        %v2805 = vsel %vm547, %v2802, %v2804
        %v2806 = vrot.slane %v2786, 1
        %v2807 = vsel %vm547, %v2804, %v2806
        %v2808 = vrot.slane %v2788, 1
        %v2809 = vsel %vm547, %v2806, %v2808
        %2810 = vrot.lane.b32.xlu0 %v2801, 64
        %v2811 = vpop.permute.xlu0 %2810
        %2812 = vrot.lane.b32.xlu0 %v2803, 64
        %v2813 = vpop.permute.xlu0 %2812
        %2814 = vrot.lane.b32.xlu0 %v2805, 64
        %v2815 = vpop.permute.xlu0 %2814
        %2816 = vrot.lane.b32.xlu0 %v2807, 64
        %v2817 = vpop.permute.xlu0 %2816
        %2818 = vrot.lane.b32.xlu0 %v2809, 64
        %v2819 = vpop.permute.xlu0 %2818
        %2820 = vrot.lane.b32.xlu0 %v2808, 64
        %v2821 = vpop.permute.xlu0 %2820
        %v2829 = vrot.slane %v2796, 2
        %v2830 = vrot.slane %v2780, 2
        %v2831 = vsel %vm543, %v2829, %v2830
        %v2832 = vrot.slane %v2782, 2
        %v2833 = vsel %vm543, %v2830, %v2832
        %v2834 = vrot.slane %v2784, 2
        %v2835 = vsel %vm543, %v2832, %v2834
        %v2836 = vrot.slane %v2786, 2
        %v2837 = vsel %vm543, %v2834, %v2836
        %v2838 = vrot.slane %v2788, 2
        %v2839 = vsel %vm543, %v2836, %v2838
        %v2840 = vrot.slane %v2797, 2
        %v2841 = vsel %vm543, %v2838, %v2840
        %v2848 = vrot.slane %v2796, 3
        %v2849 = vrot.slane %v2780, 3
        %v2850 = vsel %vm776, %v2848, %v2849
        %v2851 = vrot.slane %v2782, 3
        %v2852 = vsel %vm776, %v2849, %v2851
        %v2853 = vrot.slane %v2784, 3
        %v2854 = vsel %vm776, %v2851, %v2853
        %v2855 = vrot.slane %v2786, 3
        %v2856 = vsel %vm776, %v2853, %v2855
        %v2857 = vrot.slane %v2788, 3
        %v2858 = vsel %vm776, %v2855, %v2857
        %v2859 = vrot.slane %v2797, 3
        %v2860 = vsel %vm776, %v2857, %v2859
        %2861 = vrot.lane.b32.xlu0 %v2850, 64
        %v2862 = vpop.permute.xlu0 %2861
        %2863 = vrot.lane.b32.xlu0 %v2852, 64
        %v2864 = vpop.permute.xlu0 %2863
        %2865 = vrot.lane.b32.xlu0 %v2854, 64
        %v2866 = vpop.permute.xlu0 %2865
        %2867 = vrot.lane.b32.xlu0 %v2856, 64
        %v2868 = vpop.permute.xlu0 %2867
        %2869 = vrot.lane.b32.xlu0 %v2858, 64
        %v2870 = vpop.permute.xlu0 %2869
        %2871 = vrot.lane.b32.xlu0 %v2860, 64
        %v2872 = vpop.permute.xlu0 %2871
        %v2879 = vrot.slane %v2796, 4
        %v2880 = vrot.slane %v2780, 4
        %v2881 = vsel %vm473, %v2879, %v2880
        %v2882 = vrot.slane %v2782, 4
        %v2883 = vsel %vm473, %v2880, %v2882
        %v2884 = vrot.slane %v2784, 4
        %v2885 = vsel %vm473, %v2882, %v2884
        %v2886 = vrot.slane %v2786, 4
        %v2887 = vsel %vm473, %v2884, %v2886
        %v2888 = vrot.slane %v2788, 4
        %v2889 = vsel %vm473, %v2886, %v2888
        %v2890 = vrot.slane %v2797, 4
        %v2891 = vsel %vm473, %v2888, %v2890
        %v2898 = vrot.slane %v2796, 5
        %v2899 = vrot.slane %v2780, 5
        %v2900 = vsel %vm1005, %v2898, %v2899
        %v2901 = vrot.slane %v2782, 5
        %v2902 = vsel %vm1005, %v2899, %v2901
        %v2903 = vrot.slane %v2784, 5
        %v2904 = vsel %vm1005, %v2901, %v2903
        %v2905 = vrot.slane %v2786, 5
        %v2906 = vsel %vm1005, %v2903, %v2905
        %v2907 = vrot.slane %v2788, 5
        %v2908 = vsel %vm1005, %v2905, %v2907
        %v2909 = vrot.slane %v2797, 5
        %v2910 = vsel %vm1005, %v2907, %v2909
        %2911 = vrot.lane.b32.xlu0 %v2900, 64
        %v2912 = vpop.permute.xlu0 %2911
        %2913 = vrot.lane.b32.xlu0 %v2902, 64
        %v2914 = vpop.permute.xlu0 %2913
        %2915 = vrot.lane.b32.xlu0 %v2904, 64
        %v2916 = vpop.permute.xlu0 %2915
        %2917 = vrot.lane.b32.xlu0 %v2906, 64
        %v2918 = vpop.permute.xlu0 %2917
        %2919 = vrot.lane.b32.xlu0 %v2908, 64
        %v2920 = vpop.permute.xlu0 %2919
        %2921 = vrot.lane.b32.xlu0 %v2910, 64
        %v2922 = vpop.permute.xlu0 %2921
        %v2929 = vrot.slane %v2796, 6
        %v2930 = vrot.slane %v2780, 6
        %v2931 = vsel %vm1121, %v2929, %v2930
        %v2932 = vrot.slane %v2782, 6
        %v2933 = vsel %vm1121, %v2930, %v2932
        %v2934 = vrot.slane %v2784, 6
        %v2935 = vsel %vm1121, %v2932, %v2934
        %v2936 = vrot.slane %v2786, 6
        %v2937 = vsel %vm1121, %v2934, %v2936
        %v2938 = vrot.slane %v2788, 6
        %v2939 = vsel %vm1121, %v2936, %v2938
        %v2940 = vrot.slane %v2797, 6
        %v2941 = vsel %vm1121, %v2938, %v2940
        %v2948 = vrot.slane %v2796, 7
        %v2949 = vrot.slane %v2780, 7
        %v2950 = vsel %vm1238, %v2948, %v2949
        %v2951 = vrot.slane %v2782, 7
        %v2952 = vsel %vm1238, %v2949, %v2951
        %v2953 = vrot.slane %v2784, 7
        %v2954 = vsel %vm1238, %v2951, %v2953
        %v2955 = vrot.slane %v2786, 7
        %v2956 = vsel %vm1238, %v2953, %v2955
        %v2957 = vrot.slane %v2788, 7
        %v2958 = vsel %vm1238, %v2955, %v2957
        %v2959 = vrot.slane %v2797, 7
        %v2960 = vsel %vm1238, %v2957, %v2959
        %2961 = vrot.lane.b32.xlu0 %v2950, 64
        %v2962 = vpop.permute.xlu0 %2961
        %2963 = vrot.lane.b32.xlu0 %v2952, 64
        %v2964 = vpop.permute.xlu0 %2963
        %2965 = vrot.lane.b32.xlu0 %v2954, 64
        %v2966 = vpop.permute.xlu0 %2965
        %2967 = vrot.lane.b32.xlu0 %v2956, 64
        %v2968 = vpop.permute.xlu0 %2967
        %2969 = vrot.lane.b32.xlu0 %v2958, 64
        %v2970 = vpop.permute.xlu0 %2969
        %2971 = vrot.lane.b32.xlu0 %v2960, 64
        %v2972 = vpop.permute.xlu0 %2971
        %v2979 = vsel %vm2373, %v2796, %v2811
        %v2980 = vsel %vm2373, %v2780, %v2813
        %v2981 = vsel %vm2373, %v2782, %v2815
        %v2982 = vsel %vm2373, %v2784, %v2817
        %v2983 = vsel %vm2373, %v2786, %v2819
        %v2984 = vsel %vm2373, %v2788, %v2821
        %v2985 = vsel %vm2373, %v2831, %v2862
        %v2986 = vsel %vm2373, %v2833, %v2864
        %v2987 = vsel %vm2373, %v2835, %v2866
        %v2988 = vsel %vm2373, %v2837, %v2868
        %v2989 = vsel %vm2373, %v2839, %v2870
        %v2990 = vsel %vm2373, %v2841, %v2872
        %v2991 = vsel %vm2373, %v2881, %v2912
        %v2992 = vsel %vm2373, %v2883, %v2914
        %v2993 = vsel %vm2373, %v2885, %v2916
        %v2994 = vsel %vm2373, %v2887, %v2918
        %v2995 = vsel %vm2373, %v2889, %v2920
        %v2996 = vsel %vm2373, %v2891, %v2922
        %v2997 = vsel %vm2373, %v2931, %v2962
        %v2998 = vsel %vm2373, %v2933, %v2964
        %v2999 = vsel %vm2373, %v2935, %v2966
        %v3000 = vsel %vm2373, %v2937, %v2968
        %v3001 = vsel %vm2373, %v2939, %v2970
        %v3002 = vsel %vm2373, %v2941, %v2972
        %v3003 = vpack.c.bf16 %v2980, %v2979
        %v3004 = vpack.c.bf16 %v2986, %v2985
        %v3005 = vpack.c.bf16 %v2992, %v2991
        %v3006 = vpack.c.bf16 %v2998, %v2997
        %v3007 = vpack.c.bf16 %v2982, %v2981
        %v3008 = vpack.c.bf16 %v2988, %v2987
        %v3009 = vpack.c.bf16 %v2994, %v2993
        %v3010 = vpack.c.bf16 %v3000, %v2999
        %v3011 = vpack.c.bf16 %v2984, %v2983
        %v3012 = vpack.c.bf16 %v2990, %v2989
        %v3013 = vpack.c.bf16 %v2996, %v2995
        %v3014 = vpack.c.bf16 %v3002, %v3001
        %v3015 = vld [vmem:[%s7] sm:$0xf]
        %v3016 = vld [vmem:[%s7 + $0x4] sm:$0xf]
        %v3017 = vld [vmem:[%s7 + $0x8] sm:$0xf]
        %v3018 = vld [vmem:[%s7 + $0xc] sm:$0xf]
        %v3019 = vld [vmem:[%s7 + $0x10] sm:$0xf]
        %v3020 = vld [vmem:[%s7 + $0x14] sm:$0xf]
        %v3021 = vld [vmem:[%s7 + $0x18] sm:$0xf]
        %v3022 = vld [vmem:[%s7 + $0x1c] sm:$0xf]
        %v3023 = vld [vmem:[%s7 + $0x20] sm:$0xf]
        %v3024 = vld [vmem:[%s7 + $0x24] sm:$0xf]
        %v3025 = vld [vmem:[%s7 + $0x28] sm:$0xf]
        %v3026 = vld [vmem:[%s7 + $0x2c] sm:$0xf]
        %v3027 = vld [vmem:[%s7 + $0x30] sm:$0xf]
        %v3028 = vld [vmem:[%s7 + $0x34] sm:$0xf]
        %v3029 = vld [vmem:[%s7 + $0x38] sm:$0xf]
        %v3030 = vld [vmem:[%s7 + $0x3c] sm:$0xf]
        %v3031 = vld [vmem:[%s7 + $0x40] sm:$0xf]
        %v3032 = vld [vmem:[%s7 + $0x44] sm:$0xf]
        %v3033 = vld [vmem:[%s7 + $0x48] sm:$0xf]
        %v3034 = vld [vmem:[%s7 + $0x4c] sm:$0xf]
        %v3035 = vld [vmem:[%s7 + $0x50] sm:$0xf]
        %v3036 = vld [vmem:[%s7 + $0x54] sm:$0xf]
        %v3037 = vld [vmem:[%s7 + $0x58] sm:$0xf]
        %v3038 = vld [vmem:[%s7 + $0x5c] sm:$0xf]
        %v3039 = vld [vmem:[%s7 + $0x60] sm:$0xf]
        %v3040 = vld [vmem:[%s7 + $0x64] sm:$0xf]
        %v3041 = vld [vmem:[%s7 + $0x68] sm:$0xf]
        %v3042 = vld [vmem:[%s7 + $0x6c] sm:$0xf]
        %v3043 = vld [vmem:[%s7 + $0x70] sm:$0xf]
        %v3044 = vld [vmem:[%s7 + $0x74] sm:$0xf]
        %v3045 = vld [vmem:[%s7 + $0x78] sm:$0xf]
        %v3046 = vld [vmem:[%s7 + $0x7c] sm:$0xf]
        %v3047 = vld [vmem:[%s7 + $0x80] sm:$0xf]
        %v3048 = vld [vmem:[%s7 + $0x84] sm:$0xf]
        %v3049 = vld [vmem:[%s7 + $0x88] sm:$0xf]
        %v3050 = vld [vmem:[%s7 + $0x8c] sm:$0xf]
        %v3051 = vld [vmem:[%s7 + $0x90] sm:$0xf]
        %v3052 = vld [vmem:[%s7 + $0x94] sm:$0xf]
        %v3053 = vld [vmem:[%s7 + $0x98] sm:$0xf]
        %v3054 = vld [vmem:[%s7 + $0x9c] sm:$0xf]
        %v3055 = vld [vmem:[%s7 + $0xa0] sm:$0xf]
        %v3056 = vld [vmem:[%s7 + $0xa4] sm:$0xf]
        %v3057 = vld [vmem:[%s7 + $0xa8] sm:$0xf]
        %v3058 = vld [vmem:[%s7 + $0xac] sm:$0xf]
        %v3059 = vld [vmem:[%s7 + $0xb0] sm:$0xf]
        %v3060 = vld [vmem:[%s7 + $0xb4] sm:$0xf]
        %v3061 = vld [vmem:[%s7 + $0xb8] sm:$0xf]
        %v3062 = vld [vmem:[%s7 + $0xbc] sm:$0xf]
        %v3063 = vld [vmem:[%s7 + $0xc0] sm:$0xf]
        %v3064 = vld [vmem:[%s7 + $0xc4] sm:$0xf]
        %v3065 = vld [vmem:[%s7 + $0xc8] sm:$0xf]
        %v3066 = vld [vmem:[%s7 + $0xcc] sm:$0xf]
        %v3067 = vld [vmem:[%s7 + $0xd0] sm:$0xf]
        %v3068 = vld [vmem:[%s7 + $0xd4] sm:$0xf]
        %v3069 = vld [vmem:[%s7 + $0xd8] sm:$0xf]
        %v3070 = vld [vmem:[%s7 + $0xdc] sm:$0xf]
        %v3071 = vld [vmem:[%s7 + $0xe0] sm:$0xf]
        %v3072 = vld [vmem:[%s7 + $0xe4] sm:$0xf]
        %v3073 = vld [vmem:[%s7 + $0xe8] sm:$0xf]
        %v3074 = vld [vmem:[%s7 + $0xec] sm:$0xf]
        %v3075 = vld [vmem:[%s7 + $0xf0] sm:$0xf]
        %v3076 = vld [vmem:[%s7 + $0xf4] sm:$0xf]
        %v3077 = vld [vmem:[%s7 + $0xf8] sm:$0xf]
        %v3078 = vld [vmem:[%s7 + $0xfc] sm:$0xf]
        %v3143 = vunpack.c.l.b16 %v3015
        %v3144 = vunpack.c.l.b16 %v3016
        %v3145 = vunpack.c.l.b16 %v3017
        %v3146 = vunpack.c.l.b16 %v3018
        %v3147 = vunpack.c.l.b16 %v3019
        %v3148 = vunpack.c.l.b16 %v3020
        %v3149 = vunpack.c.l.b16 %v3021
        %v3150 = vunpack.c.l.b16 %v3022
        %v3151 = vunpack.c.l.b16 %v3023
        %v3152 = vunpack.c.l.b16 %v3024
        %v3153 = vunpack.c.l.b16 %v3025
        %v3154 = vunpack.c.l.b16 %v3026
        %v3155 = vunpack.c.l.b16 %v3027
        %v3156 = vunpack.c.l.b16 %v3028
        %v3157 = vunpack.c.l.b16 %v3029
        %v3158 = vunpack.c.l.b16 %v3030
        %v3159 = vunpack.c.l.b16 %v3031
        %v3160 = vunpack.c.l.b16 %v3032
        %v3161 = vunpack.c.l.b16 %v3033
        %v3162 = vunpack.c.l.b16 %v3034
        %v3163 = vunpack.c.l.b16 %v3035
        %v3164 = vunpack.c.l.b16 %v3036
        %v3165 = vunpack.c.l.b16 %v3037
        %v3166 = vunpack.c.l.b16 %v3038
        %v3167 = vunpack.c.l.b16 %v3039
        %v3168 = vunpack.c.l.b16 %v3040
        %v3169 = vunpack.c.l.b16 %v3041
        %v3170 = vunpack.c.l.b16 %v3042
        %v3171 = vunpack.c.l.b16 %v3043
        %v3172 = vunpack.c.l.b16 %v3044
        %v3173 = vunpack.c.l.b16 %v3045
        %v3174 = vunpack.c.l.b16 %v3046
        %v3175 = vunpack.c.l.b16 %v3047
        %v3176 = vunpack.c.l.b16 %v3048
        %v3177 = vunpack.c.l.b16 %v3049
        %v3178 = vunpack.c.l.b16 %v3050
        %v3179 = vunpack.c.l.b16 %v3051
        %v3180 = vunpack.c.l.b16 %v3052
        %v3181 = vunpack.c.l.b16 %v3053
        %v3182 = vunpack.c.l.b16 %v3054
        %v3183 = vunpack.c.l.b16 %v3055
        %v3184 = vunpack.c.l.b16 %v3056
        %v3185 = vunpack.c.l.b16 %v3057
        %v3186 = vunpack.c.l.b16 %v3058
        %v3187 = vunpack.c.l.b16 %v3059
        %v3188 = vunpack.c.l.b16 %v3060
        %v3189 = vunpack.c.l.b16 %v3061
        %v3190 = vunpack.c.l.b16 %v3062
        %v3191 = vunpack.c.l.b16 %v3063
        %v3192 = vunpack.c.l.b16 %v3064
        %v3193 = vunpack.c.l.b16 %v3065
        %v3194 = vunpack.c.l.b16 %v3066
        %v3195 = vunpack.c.l.b16 %v3067
        %v3196 = vunpack.c.l.b16 %v3068
        %v3197 = vunpack.c.l.b16 %v3069
        %v3198 = vunpack.c.l.b16 %v3070
        %v3199 = vunpack.c.l.b16 %v3071
        %v3200 = vunpack.c.l.b16 %v3072
        %v3201 = vunpack.c.l.b16 %v3073
        %v3202 = vunpack.c.l.b16 %v3074
        %v3203 = vunpack.c.l.b16 %v3075
        %v3204 = vunpack.c.l.b16 %v3076
        %v3205 = vunpack.c.l.b16 %v3077
        %v3206 = vunpack.c.l.b16 %v3078
        %v3207 = vpack.c.b16 %v3144, %v3143
        %v3208 = vpack.c.b16 %v3146, %v3145
        %v3209 = vpack.c.b16 %v3148, %v3147
        %v3210 = vpack.c.b16 %v3150, %v3149
        %v3211 = vpack.c.b16 %v3152, %v3151
        %v3212 = vpack.c.b16 %v3154, %v3153
        %v3213 = vpack.c.b16 %v3156, %v3155
        %v3214 = vpack.c.b16 %v3158, %v3157
        %v3215 = vpack.c.b16 %v3160, %v3159
        %v3216 = vpack.c.b16 %v3162, %v3161
        %v3217 = vpack.c.b16 %v3164, %v3163
        %v3218 = vpack.c.b16 %v3166, %v3165
        %v3219 = vpack.c.b16 %v3168, %v3167
        %v3220 = vpack.c.b16 %v3170, %v3169
        %v3221 = vpack.c.b16 %v3172, %v3171
        %v3222 = vpack.c.b16 %v3174, %v3173
        %v3223 = vpack.c.b16 %v3176, %v3175
        %v3224 = vpack.c.b16 %v3178, %v3177
        %v3225 = vpack.c.b16 %v3180, %v3179
        %v3226 = vpack.c.b16 %v3182, %v3181
        %v3227 = vpack.c.b16 %v3184, %v3183
        %v3228 = vpack.c.b16 %v3186, %v3185
        %v3229 = vpack.c.b16 %v3188, %v3187
        %v3230 = vpack.c.b16 %v3190, %v3189
        %v3231 = vpack.c.b16 %v3192, %v3191
        %v3232 = vpack.c.b16 %v3194, %v3193
        %v3233 = vpack.c.b16 %v3196, %v3195
        %v3234 = vpack.c.b16 %v3198, %v3197
        %v3235 = vpack.c.b16 %v3200, %v3199
        %v3236 = vpack.c.b16 %v3202, %v3201
        %v3237 = vpack.c.b16 %v3204, %v3203
        %v3238 = vpack.c.b16 %v3206, %v3205
        %3271 = vmatprep.subr.bf16.mxu0 0
        %3272 = vmatpush1.bf16.msra.mxu0 %v3207
        %3273 = vmatprep.subr.bf16.mxu0 0
        %3274 = vmatpush1.bf16.msra.mxu0 %v3208
        %3275 = vmatprep.subr.bf16.mxu0 0
        %3276 = vmatpush1.bf16.msra.mxu0 %v3209
        %3277 = vmatprep.subr.bf16.mxu0 0
        %3278 = vmatpush1.bf16.msra.mxu0 %v3210
        %3279 = vmatprep.subr.bf16.mxu0 0
        %3280 = vmatpush1.bf16.msra.mxu0 %v3211
        %3281 = vmatprep.subr.bf16.mxu0 0
        %3282 = vmatpush1.bf16.msra.mxu0 %v3212
        %3283 = vmatprep.subr.bf16.mxu0 0
        %3284 = vmatpush1.bf16.msra.mxu0 %v3213
        %3285 = vmatprep.subr.bf16.mxu0 0
        %3286 = vmatpush1.bf16.msra.mxu0 %v3214
        %3287 = vmatprep.subr.bf16.mxu0 0
        %3288 = vmatpush1.bf16.msra.mxu0 %v3215
        %3289 = vmatprep.subr.bf16.mxu0 0
        %3290 = vmatpush1.bf16.msra.mxu0 %v3216
        %3291 = vmatprep.subr.bf16.mxu0 0
        %3292 = vmatpush1.bf16.msra.mxu0 %v3217
        %3293 = vmatprep.subr.bf16.mxu0 0
        %3294 = vmatpush1.bf16.msra.mxu0 %v3218
        %3295 = vmatprep.subr.bf16.mxu0 0
        %3296 = vmatpush1.bf16.msra.mxu0 %v3219
        %3297 = vmatprep.subr.bf16.mxu0 0
        %3298 = vmatpush1.bf16.msra.mxu0 %v3220
        %3299 = vmatprep.subr.bf16.mxu0 0
        %3300 = vmatpush1.bf16.msra.mxu0 %v3221
        %3301 = vmatprep.subr.bf16.mxu0 0
        %3302 = vmatpush1.bf16.msra.mxu0 %v3222
        %3303 = vmatprep.mubr.bf16.mxu0 %v3004
        %3304 = vmatmul.mubr.bf16.gmra.mrb[0].mxu0 %v3003
        %v3305 = vpop.f32.mrb[0].mxu0
        %v3306 = vadd.f32 0.0, %v3305
        %v3307 = vpop.f32.mrb[0].mxu0
        %v3308 = vpop.f32.mrb[0].mxu0
        %v3309 = vadd.f32 0.0, %v3308
        %v3310 = vpop.f32.mrb[0].mxu0
        %3311 = vmatprep.mubr.bf16.mxu0 %v3008
        %3312 = vmatmul.mubr.bf16.gmra.mrb[0].mxu0 %v3007
        %v3313 = vpop.f32.mrb[0].mxu0
        %v3314 = vadd.f32 0.0, %v3313
        %v3315 = vpop.f32.mrb[0].mxu0
        %v3316 = vpop.f32.mrb[0].mxu0
        %v3317 = vadd.f32 0.0, %v3316
        %v3318 = vpop.f32.mrb[0].mxu0
        %3319 = vmatprep.mubr.bf16.mxu0 %v3012
        %3320 = vmatmul.mubr.bf16.gmra.mrb[0].mxu0 %v3011
        %v3321 = vpop.f32.mrb[0].mxu0
        %v3322 = vadd.f32 0.0, %v3321
        %v3323 = vpop.f32.mrb[0].mxu0
        %v3324 = vpop.f32.mrb[0].mxu0
        %v3325 = vadd.f32 0.0, %v3324
        %v3326 = vpop.f32.mrb[0].mxu0
        %3327 = vdwg.mxu0
        %3328 = vmatprep.subr.bf16.mxu0 0
        %3329 = vmatpush1.bf16.msra.mxu0 %v3223
        %3330 = vmatprep.subr.bf16.mxu0 0
        %3331 = vmatpush1.bf16.msra.mxu0 %v3224
        %3332 = vmatprep.subr.bf16.mxu0 0
        %3333 = vmatpush1.bf16.msra.mxu0 %v3225
        %3334 = vmatprep.subr.bf16.mxu0 0
        %3335 = vmatpush1.bf16.msra.mxu0 %v3226
        %3336 = vmatprep.subr.bf16.mxu0 0
        %3337 = vmatpush1.bf16.msra.mxu0 %v3227
        %3338 = vmatprep.subr.bf16.mxu0 0
        %3339 = vmatpush1.bf16.msra.mxu0 %v3228
        %3340 = vmatprep.subr.bf16.mxu0 0
        %3341 = vmatpush1.bf16.msra.mxu0 %v3229
        %3342 = vmatprep.subr.bf16.mxu0 0
        %3343 = vmatpush1.bf16.msra.mxu0 %v3230
        %3344 = vmatprep.subr.bf16.mxu0 0
        %3345 = vmatpush1.bf16.msra.mxu0 %v3231
        %3346 = vmatprep.subr.bf16.mxu0 0
        %3347 = vmatpush1.bf16.msra.mxu0 %v3232
        %3348 = vmatprep.subr.bf16.mxu0 0
        %3349 = vmatpush1.bf16.msra.mxu0 %v3233
        %3350 = vmatprep.subr.bf16.mxu0 0
        %3351 = vmatpush1.bf16.msra.mxu0 %v3234
        %3352 = vmatprep.subr.bf16.mxu0 0
        %3353 = vmatpush1.bf16.msra.mxu0 %v3235
        %3354 = vmatprep.subr.bf16.mxu0 0
        %3355 = vmatpush1.bf16.msra.mxu0 %v3236
        %3356 = vmatprep.subr.bf16.mxu0 0
        %3357 = vmatpush1.bf16.msra.mxu0 %v3237
        %3358 = vmatprep.subr.bf16.mxu0 0
        %3359 = vmatpush1.bf16.msra.mxu0 %v3238
        %3360 = vmatprep.mubr.bf16.mxu0 %v3006
        %3361 = vmatmul.mubr.bf16.gmra.mrb[0].mxu0 %v3005
        %v3362 = vpop.f32.mrb[0].mxu0
        %v3363 = vadd.f32 %v3306, %v3362
        %v3364 = vpop.f32.mrb[0].mxu0
        %v3365 = vpop.f32.mrb[0].mxu0
        %v3366 = vadd.f32 %v3309, %v3365
        %v3367 = vpop.f32.mrb[0].mxu0
        %3368 = vmatprep.mubr.bf16.mxu0 %v3010
        %3369 = vmatmul.mubr.bf16.gmra.mrb[0].mxu0 %v3009
        %v3370 = vpop.f32.mrb[0].mxu0
        %v3371 = vadd.f32 %v3314, %v3370
        %v3372 = vpop.f32.mrb[0].mxu0
        %v3373 = vpop.f32.mrb[0].mxu0
        %v3374 = vadd.f32 %v3317, %v3373
        %v3375 = vpop.f32.mrb[0].mxu0
        %3376 = vmatprep.mubr.bf16.mxu0 %v3014
        %3377 = vmatmul.mubr.bf16.gmra.mrb[0].mxu0 %v3013
        %v3378 = vpop.f32.mrb[0].mxu0
        %v3379 = vadd.f32 %v3322, %v3378
        %v3380 = vpop.f32.mrb[0].mxu0
        %v3381 = vpop.f32.mrb[0].mxu0
        %v3382 = vadd.f32 %v3325, %v3381
        %v3383 = vpop.f32.mrb[0].mxu0
        %3384 = vdwg.mxu0
        %v3385 = vld [vmem:[%s8] sm:$0x1]
        %v3387 = vlaneseq
        %v3388 = vshrl.u32 %v3387, 7
        %v3389 = vsub.s32 0, %v3388
        %v3390 = vrot.slane %v3385, %v3389
        %v3392 = vmul.f32 %v3363, %v3390
        %v3393 = vmul.f32 %v3366, %v3390
        %v3394 = vmul.f32 %v3371, %v3390
        %v3395 = vmul.f32 %v3374, %v3390
        %v3396 = vmul.f32 %v3379, %v3390
        %v3397 = vmul.f32 %v3382, %v3390
        %v3398 = vld [vmem:[%s9] sm:$0x1]
        %v3400 = vlaneseq
        %v3401 = vshrl.u32 %v3400, 7
        %v3402 = vsub.s32 0, %v3401
        %v3403 = vrot.slane %v3398, %v3402
        %v3405 = vadd.f32 %v3392, %v3403
        %v3406 = vadd.f32 %v3393, %v3403
        %v3407 = vadd.f32 %v3394, %v3403
        %v3408 = vadd.f32 %v3395, %v3403
        %v3409 = vadd.f32 %v3396, %v3403
        %v3410 = vadd.f32 %v3397, %v3403
        %v3411 = vmax.f32 %v3405, 0.0
        %v3412 = vmax.f32 %v3406, 0.0
        %v3413 = vmax.f32 %v3407, 0.0
        %v3414 = vmax.f32 %v3408, 0.0
        %v3415 = vmax.f32 %v3409, 0.0
        %v3416 = vmax.f32 %v3410, 0.0
        %3417 = vst [vmem:[#allocation4] sm:$0xff] %v3411
        %3418 = vst [vmem:[#allocation4 + $0x8] sm:$0xff] %v3412
        %3419 = vst [vmem:[#allocation4 + $0x10] sm:$0xff] %v3413
        %3420 = vst [vmem:[#allocation4 + $0x18] sm:$0xff] %v3414
        %3421 = vst [vmem:[#allocation4 + $0x20] sm:$0xff] %v3415
        %3422 = vst [vmem:[#allocation4 + $0x28] sm:$0x7f] %v3416
        %v3423 = vld [vmem:[#allocation4] ss:$2 sm:$0xff]
        %s3424 = scalar_lea.vmem [#allocation4], 16
        %v3425 = vld [vmem:[%s3424] ss:$2 sm:$0xff]
        %s3426 = scalar_lea.vmem [#allocation4], 32
        %v3427 = vld [vmem:[%s3426] ss:$2 sm:$0xff]
        %s3428 = scalar_lea.vmem [#allocation4], 1
        %v3429 = vld [vmem:[%s3428] ss:$2 sm:$0xff]
        %s3430 = scalar_lea.vmem [#allocation4], 17
        %v3431 = vld [vmem:[%s3430] ss:$2 sm:$0xff]
        %s3432 = scalar_lea.vmem [#allocation4], 33
        %v3433 = vld [vmem:[%s3432] ss:$2 sm:$0x7f]
        %v3437 = vrot.slane %v3429, 7
        %v3438 = vrot.slane %v3431, 7
        %v3439 = vsel %vm1238, %v3437, %v3438
        %v3440 = vrot.slane %v3433, 7
        %v3441 = vsel %vm1238, %v3438, %v3440
        %v3445 = vsel %vm1238, 0.0, %v3437
        %v3446 = vmax.f32 %v3423, %v3445
        %v3447 = vmax.f32 %v3425, %v3439
        %v3448 = vmax.f32 %v3427, %v3441
        %v3450 = vrot.slane %v3446, 1
        %v3452 = vrot.slane %v3446, 2
        %v3454 = vrot.slane %v3446, 3
        %v3456 = vrot.slane %v3446, 4
        %v3458 = vrot.slane %v3446, 5
        %v3460 = vrot.slane %v3446, 6
        %v3462 = vrot.slane %v3446, 7
        %v3465 = vrot.slane %v3447, 1
        %v3467 = vrot.slane %v3447, 2
        %v3469 = vrot.slane %v3447, 3
        %v3471 = vrot.slane %v3447, 4
        %v3473 = vrot.slane %v3447, 5
        %v3475 = vrot.slane %v3447, 6
        %v3477 = vrot.slane %v3447, 7
        %v3480 = vrot.slane %v3448, 1
        %v3482 = vrot.slane %v3448, 2
        %v3484 = vrot.slane %v3448, 3
        %v3486 = vrot.slane %v3448, 4
        %v3488 = vrot.slane %v3448, 5
        %v3490 = vrot.slane %v3448, 6
        %v3492 = vrot.slane %v3448, 7
        %v3494 = vpack.c.bf16 %v3446, %v3446
        %v3495 = vpack.c.bf16 %v3450, %v3450
        %v3496 = vpack.c.bf16 %v3452, %v3452
        %v3497 = vpack.c.bf16 %v3454, %v3454
        %v3498 = vpack.c.bf16 %v3456, %v3456
        %v3499 = vpack.c.bf16 %v3458, %v3458
        %v3500 = vpack.c.bf16 %v3460, %v3460
        %v3501 = vpack.c.bf16 %v3462, %v3462
        %v3502 = vpack.c.bf16 %v3447, %v3447
        %v3503 = vpack.c.bf16 %v3465, %v3465
        %v3504 = vpack.c.bf16 %v3467, %v3467
        %v3505 = vpack.c.bf16 %v3469, %v3469
        %v3506 = vpack.c.bf16 %v3471, %v3471
        %v3507 = vpack.c.bf16 %v3473, %v3473
        %v3508 = vpack.c.bf16 %v3475, %v3475
        %v3509 = vpack.c.bf16 %v3477, %v3477
        %v3510 = vpack.c.bf16 %v3448, %v3448
        %v3511 = vpack.c.bf16 %v3480, %v3480
        %v3512 = vpack.c.bf16 %v3482, %v3482
        %v3513 = vpack.c.bf16 %v3484, %v3484
        %v3514 = vpack.c.bf16 %v3486, %v3486
        %v3515 = vpack.c.bf16 %v3488, %v3488
        %v3516 = vpack.c.bf16 %v3490, %v3490
        %v3517 = vpack.c.bf16 %v3492, %v3492
        %v3518 = vld [vmem:[#allocation5] sm:$0xf]
        %v3519 = vld [vmem:[#allocation5 + $0x4] sm:$0xf]
        %v3520 = vld [vmem:[#allocation5 + $0x8] sm:$0xf]
        %v3521 = vld [vmem:[#allocation5 + $0xc] sm:$0xf]
        %v3522 = vld [vmem:[#allocation5 + $0x10] sm:$0xf]
        %v3523 = vld [vmem:[#allocation5 + $0x14] sm:$0xf]
        %v3524 = vld [vmem:[#allocation5 + $0x18] sm:$0xf]
        %v3525 = vld [vmem:[#allocation5 + $0x1c] sm:$0xf]
        %v3526 = vld [vmem:[#allocation5 + $0x20] sm:$0xf]
        %v3527 = vld [vmem:[#allocation5 + $0x24] sm:$0xf]
        %v3528 = vld [vmem:[#allocation5 + $0x28] sm:$0xf]
        %v3529 = vld [vmem:[#allocation5 + $0x2c] sm:$0xf]
        %v3530 = vld [vmem:[#allocation5 + $0x30] sm:$0xf]
        %v3531 = vld [vmem:[#allocation5 + $0x34] sm:$0xf]
        %v3532 = vld [vmem:[#allocation5 + $0x38] sm:$0xf]
        %v3533 = vld [vmem:[#allocation5 + $0x3c] sm:$0xf]
        %v3534 = vld [vmem:[#allocation5 + $0x40] sm:$0xf]
        %v3535 = vld [vmem:[#allocation5 + $0x44] sm:$0xf]
        %v3536 = vld [vmem:[#allocation5 + $0x48] sm:$0xf]
        %v3537 = vld [vmem:[#allocation5 + $0x4c] sm:$0xf]
        %v3538 = vld [vmem:[#allocation5 + $0x50] sm:$0xf]
        %v3539 = vld [vmem:[#allocation5 + $0x54] sm:$0xf]
        %v3540 = vld [vmem:[#allocation5 + $0x58] sm:$0xf]
        %v3541 = vld [vmem:[#allocation5 + $0x5c] sm:$0xf]
        %v3542 = vld [vmem:[#allocation5 + $0x60] sm:$0xf]
        %v3543 = vld [vmem:[#allocation5 + $0x64] sm:$0xf]
        %v3544 = vld [vmem:[#allocation5 + $0x68] sm:$0xf]
        %v3545 = vld [vmem:[#allocation5 + $0x6c] sm:$0xf]
        %v3546 = vld [vmem:[#allocation5 + $0x70] sm:$0xf]
        %v3547 = vld [vmem:[#allocation5 + $0x74] sm:$0xf]
        %v3548 = vld [vmem:[#allocation5 + $0x78] sm:$0xf]
        %v3549 = vld [vmem:[#allocation5 + $0x7c] sm:$0xf]
        %v3550 = vld [vmem:[#allocation5 + $0x80] sm:$0xf]
        %v3551 = vld [vmem:[#allocation5 + $0x84] sm:$0xf]
        %v3552 = vld [vmem:[#allocation5 + $0x88] sm:$0xf]
        %v3553 = vld [vmem:[#allocation5 + $0x8c] sm:$0xf]
        %v3554 = vld [vmem:[#allocation5 + $0x90] sm:$0xf]
        %v3555 = vld [vmem:[#allocation5 + $0x94] sm:$0xf]
        %v3556 = vld [vmem:[#allocation5 + $0x98] sm:$0xf]
        %v3557 = vld [vmem:[#allocation5 + $0x9c] sm:$0xf]
        %v3558 = vld [vmem:[#allocation5 + $0xa0] sm:$0xf]
        %v3559 = vld [vmem:[#allocation5 + $0xa4] sm:$0xf]
        %v3560 = vld [vmem:[#allocation5 + $0xa8] sm:$0xf]
        %v3561 = vld [vmem:[#allocation5 + $0xac] sm:$0xf]
        %v3562 = vld [vmem:[#allocation5 + $0xb0] sm:$0xf]
        %v3563 = vld [vmem:[#allocation5 + $0xb4] sm:$0xf]
        %v3564 = vld [vmem:[#allocation5 + $0xb8] sm:$0xf]
        %v3565 = vld [vmem:[#allocation5 + $0xbc] sm:$0xf]
        %v3566 = vld [vmem:[#allocation5 + $0xc0] sm:$0xf]
        %v3567 = vld [vmem:[#allocation5 + $0xc4] sm:$0xf]
        %v3568 = vld [vmem:[#allocation5 + $0xc8] sm:$0xf]
        %v3569 = vld [vmem:[#allocation5 + $0xcc] sm:$0xf]
        %v3570 = vld [vmem:[#allocation5 + $0xd0] sm:$0xf]
        %v3571 = vld [vmem:[#allocation5 + $0xd4] sm:$0xf]
        %v3572 = vld [vmem:[#allocation5 + $0xd8] sm:$0xf]
        %v3573 = vld [vmem:[#allocation5 + $0xdc] sm:$0xf]
        %v3574 = vld [vmem:[#allocation5 + $0xe0] sm:$0xf]
        %v3575 = vld [vmem:[#allocation5 + $0xe4] sm:$0xf]
        %v3576 = vld [vmem:[#allocation5 + $0xe8] sm:$0xf]
        %v3577 = vld [vmem:[#allocation5 + $0xec] sm:$0xf]
        %v3578 = vld [vmem:[#allocation5 + $0xf0] sm:$0xf]
        %v3579 = vld [vmem:[#allocation5 + $0xf4] sm:$0xf]
        %v3580 = vld [vmem:[#allocation5 + $0xf8] sm:$0xf]
        %v3581 = vld [vmem:[#allocation5 + $0xfc] sm:$0xf]
        %v3582 = vld [vmem:[#allocation5 + $0x100] sm:$0xf]
        %v3583 = vld [vmem:[#allocation5 + $0x104] sm:$0xf]
        %v3584 = vld [vmem:[#allocation5 + $0x108] sm:$0xf]
        %v3585 = vld [vmem:[#allocation5 + $0x10c] sm:$0xf]
        %v3586 = vld [vmem:[#allocation5 + $0x110] sm:$0xf]
        %v3587 = vld [vmem:[#allocation5 + $0x114] sm:$0xf]
        %v3588 = vld [vmem:[#allocation5 + $0x118] sm:$0xf]
        %v3589 = vld [vmem:[#allocation5 + $0x11c] sm:$0xf]
        %v3590 = vld [vmem:[#allocation5 + $0x120] sm:$0xf]
        %v3591 = vld [vmem:[#allocation5 + $0x124] sm:$0xf]
        %v3592 = vld [vmem:[#allocation5 + $0x128] sm:$0xf]
        %v3593 = vld [vmem:[#allocation5 + $0x12c] sm:$0xf]
        %v3594 = vld [vmem:[#allocation5 + $0x130] sm:$0xf]
        %v3595 = vld [vmem:[#allocation5 + $0x134] sm:$0xf]
        %v3596 = vld [vmem:[#allocation5 + $0x138] sm:$0xf]
        %v3597 = vld [vmem:[#allocation5 + $0x13c] sm:$0xf]
        %v3598 = vld [vmem:[#allocation5 + $0x140] sm:$0xf]
        %v3599 = vld [vmem:[#allocation5 + $0x144] sm:$0xf]
        %v3600 = vld [vmem:[#allocation5 + $0x148] sm:$0xf]
        %v3601 = vld [vmem:[#allocation5 + $0x14c] sm:$0xf]
        %v3602 = vld [vmem:[#allocation5 + $0x150] sm:$0xf]
        %v3603 = vld [vmem:[#allocation5 + $0x154] sm:$0xf]
        %v3604 = vld [vmem:[#allocation5 + $0x158] sm:$0xf]
        %v3605 = vld [vmem:[#allocation5 + $0x15c] sm:$0xf]
        %v3606 = vld [vmem:[#allocation5 + $0x160] sm:$0xf]
        %v3607 = vld [vmem:[#allocation5 + $0x164] sm:$0xf]
        %v3608 = vld [vmem:[#allocation5 + $0x168] sm:$0xf]
        %v3609 = vld [vmem:[#allocation5 + $0x16c] sm:$0xf]
        %v3610 = vld [vmem:[#allocation5 + $0x170] sm:$0xf]
        %v3611 = vld [vmem:[#allocation5 + $0x174] sm:$0xf]
        %v3612 = vld [vmem:[#allocation5 + $0x178] sm:$0xf]
        %v3613 = vld [vmem:[#allocation5 + $0x17c] sm:$0xf]
        %v3614 = vld [vmem:[#allocation5 + $0x180] sm:$0xf]
        %v3615 = vld [vmem:[#allocation5 + $0x184] sm:$0xf]
        %v3616 = vld [vmem:[#allocation5 + $0x188] sm:$0xf]
        %v3617 = vld [vmem:[#allocation5 + $0x18c] sm:$0xf]
        %v3618 = vld [vmem:[#allocation5 + $0x190] sm:$0xf]
        %v3619 = vld [vmem:[#allocation5 + $0x194] sm:$0xf]
        %v3620 = vld [vmem:[#allocation5 + $0x198] sm:$0xf]
        %v3621 = vld [vmem:[#allocation5 + $0x19c] sm:$0xf]
        %v3622 = vld [vmem:[#allocation5 + $0x1a0] sm:$0xf]
        %v3623 = vld [vmem:[#allocation5 + $0x1a4] sm:$0xf]
        %v3624 = vld [vmem:[#allocation5 + $0x1a8] sm:$0xf]
        %v3625 = vld [vmem:[#allocation5 + $0x1ac] sm:$0xf]
        %v3626 = vld [vmem:[#allocation5 + $0x1b0] sm:$0xf]
        %v3627 = vld [vmem:[#allocation5 + $0x1b4] sm:$0xf]
        %v3628 = vld [vmem:[#allocation5 + $0x1b8] sm:$0xf]
        %v3629 = vld [vmem:[#allocation5 + $0x1bc] sm:$0xf]
        %v3630 = vld [vmem:[#allocation5 + $0x1c0] sm:$0xf]
        %v3631 = vld [vmem:[#allocation5 + $0x1c4] sm:$0xf]
        %v3632 = vld [vmem:[#allocation5 + $0x1c8] sm:$0xf]
        %v3633 = vld [vmem:[#allocation5 + $0x1cc] sm:$0xf]
        %v3634 = vld [vmem:[#allocation5 + $0x1d0] sm:$0xf]
        %v3635 = vld [vmem:[#allocation5 + $0x1d4] sm:$0xf]
        %v3636 = vld [vmem:[#allocation5 + $0x1d8] sm:$0xf]
        %v3637 = vld [vmem:[#allocation5 + $0x1dc] sm:$0xf]
        %v3638 = vld [vmem:[#allocation5 + $0x1e0] sm:$0xf]
        %v3639 = vld [vmem:[#allocation5 + $0x1e4] sm:$0xf]
        %v3640 = vld [vmem:[#allocation5 + $0x1e8] sm:$0xf]
        %v3641 = vld [vmem:[#allocation5 + $0x1ec] sm:$0xf]
        %v3642 = vld [vmem:[#allocation5 + $0x1f0] sm:$0xf]
        %v3643 = vld [vmem:[#allocation5 + $0x1f4] sm:$0xf]
        %v3644 = vld [vmem:[#allocation5 + $0x1f8] sm:$0xf]
        %v3645 = vld [vmem:[#allocation5 + $0x1fc] sm:$0xf]
        %v3646 = vld [vmem:[#allocation5 + $0x200] sm:$0xf]
        %v3647 = vld [vmem:[#allocation5 + $0x204] sm:$0xf]
        %v3648 = vld [vmem:[#allocation5 + $0x208] sm:$0xf]
        %v3649 = vld [vmem:[#allocation5 + $0x20c] sm:$0xf]
        %v3650 = vld [vmem:[#allocation5 + $0x210] sm:$0xf]
        %v3651 = vld [vmem:[#allocation5 + $0x214] sm:$0xf]
        %v3652 = vld [vmem:[#allocation5 + $0x218] sm:$0xf]
        %v3653 = vld [vmem:[#allocation5 + $0x21c] sm:$0xf]
        %v3654 = vld [vmem:[#allocation5 + $0x220] sm:$0xf]
        %v3655 = vld [vmem:[#allocation5 + $0x224] sm:$0xf]
        %v3656 = vld [vmem:[#allocation5 + $0x228] sm:$0xf]
        %v3657 = vld [vmem:[#allocation5 + $0x22c] sm:$0xf]
        %v3658 = vld [vmem:[#allocation5 + $0x230] sm:$0xf]
        %v3659 = vld [vmem:[#allocation5 + $0x234] sm:$0xf]
        %v3660 = vld [vmem:[#allocation5 + $0x238] sm:$0xf]
        %v3661 = vld [vmem:[#allocation5 + $0x23c] sm:$0xf]
        %v3662 = vld [vmem:[#allocation5 + $0x240] sm:$0xf]
        %v3663 = vld [vmem:[#allocation5 + $0x244] sm:$0xf]
        %v3664 = vld [vmem:[#allocation5 + $0x248] sm:$0xf]
        %v3665 = vld [vmem:[#allocation5 + $0x24c] sm:$0xf]
        %v3666 = vld [vmem:[#allocation5 + $0x250] sm:$0xf]
        %v3667 = vld [vmem:[#allocation5 + $0x254] sm:$0xf]
        %v3668 = vld [vmem:[#allocation5 + $0x258] sm:$0xf]
        %v3669 = vld [vmem:[#allocation5 + $0x25c] sm:$0xf]
        %v3670 = vld [vmem:[#allocation5 + $0x260] sm:$0xf]
        %v3671 = vld [vmem:[#allocation5 + $0x264] sm:$0xf]
        %v3672 = vld [vmem:[#allocation5 + $0x268] sm:$0xf]
        %v3673 = vld [vmem:[#allocation5 + $0x26c] sm:$0xf]
        %v3674 = vld [vmem:[#allocation5 + $0x270] sm:$0xf]
        %v3675 = vld [vmem:[#allocation5 + $0x274] sm:$0xf]
        %v3676 = vld [vmem:[#allocation5 + $0x278] sm:$0xf]
        %v3677 = vld [vmem:[#allocation5 + $0x27c] sm:$0xf]
        %v3678 = vld [vmem:[#allocation5 + $0x280] sm:$0xf]
        %v3679 = vld [vmem:[#allocation5 + $0x284] sm:$0xf]
        %v3680 = vld [vmem:[#allocation5 + $0x288] sm:$0xf]
        %v3681 = vld [vmem:[#allocation5 + $0x28c] sm:$0xf]
        %v3682 = vld [vmem:[#allocation5 + $0x290] sm:$0xf]
        %v3683 = vld [vmem:[#allocation5 + $0x294] sm:$0xf]
        %v3684 = vld [vmem:[#allocation5 + $0x298] sm:$0xf]
        %v3685 = vld [vmem:[#allocation5 + $0x29c] sm:$0xf]
        %v3686 = vld [vmem:[#allocation5 + $0x2a0] sm:$0xf]
        %v3687 = vld [vmem:[#allocation5 + $0x2a4] sm:$0xf]
        %v3688 = vld [vmem:[#allocation5 + $0x2a8] sm:$0xf]
        %v3689 = vld [vmem:[#allocation5 + $0x2ac] sm:$0xf]
        %v3690 = vld [vmem:[#allocation5 + $0x2b0] sm:$0xf]
        %v3691 = vld [vmem:[#allocation5 + $0x2b4] sm:$0xf]
        %v3692 = vld [vmem:[#allocation5 + $0x2b8] sm:$0xf]
        %v3693 = vld [vmem:[#allocation5 + $0x2bc] sm:$0xf]
        %v3694 = vld [vmem:[#allocation5 + $0x2c0] sm:$0xf]
        %v3695 = vld [vmem:[#allocation5 + $0x2c4] sm:$0xf]
        %v3696 = vld [vmem:[#allocation5 + $0x2c8] sm:$0xf]
        %v3697 = vld [vmem:[#allocation5 + $0x2cc] sm:$0xf]
        %v3698 = vld [vmem:[#allocation5 + $0x2d0] sm:$0xf]
        %v3699 = vld [vmem:[#allocation5 + $0x2d4] sm:$0xf]
        %v3700 = vld [vmem:[#allocation5 + $0x2d8] sm:$0xf]
        %v3701 = vld [vmem:[#allocation5 + $0x2dc] sm:$0xf]
        %v3702 = vld [vmem:[#allocation5 + $0x2e0] sm:$0xf]
        %v3703 = vld [vmem:[#allocation5 + $0x2e4] sm:$0xf]
        %v3704 = vld [vmem:[#allocation5 + $0x2e8] sm:$0xf]
        %v3705 = vld [vmem:[#allocation5 + $0x2ec] sm:$0xf]
        %v3706 = vld [vmem:[#allocation5 + $0x2f0] sm:$0xf]
        %v3707 = vld [vmem:[#allocation5 + $0x2f4] sm:$0xf]
        %v3708 = vld [vmem:[#allocation5 + $0x2f8] sm:$0xf]
        %v3709 = vld [vmem:[#allocation5 + $0x2fc] sm:$0xf]
        %v3710 = vld [vmem:[#allocation5 + $0x300] sm:$0xf]
        %v3711 = vld [vmem:[#allocation5 + $0x304] sm:$0xf]
        %v3712 = vld [vmem:[#allocation5 + $0x308] sm:$0xf]
        %v3713 = vld [vmem:[#allocation5 + $0x30c] sm:$0xf]
        %v3714 = vld [vmem:[#allocation5 + $0x310] sm:$0xf]
        %v3715 = vld [vmem:[#allocation5 + $0x314] sm:$0xf]
        %v3716 = vld [vmem:[#allocation5 + $0x318] sm:$0xf]
        %v3717 = vld [vmem:[#allocation5 + $0x31c] sm:$0xf]
        %v3718 = vld [vmem:[#allocation5 + $0x320] sm:$0xf]
        %v3719 = vld [vmem:[#allocation5 + $0x324] sm:$0xf]
        %v3720 = vld [vmem:[#allocation5 + $0x328] sm:$0xf]
        %v3721 = vld [vmem:[#allocation5 + $0x32c] sm:$0xf]
        %v3722 = vld [vmem:[#allocation5 + $0x330] sm:$0xf]
        %v3723 = vld [vmem:[#allocation5 + $0x334] sm:$0xf]
        %v3724 = vld [vmem:[#allocation5 + $0x338] sm:$0xf]
        %v3725 = vld [vmem:[#allocation5 + $0x33c] sm:$0xf]
        %v3726 = vld [vmem:[#allocation5 + $0x340] sm:$0xf]
        %v3727 = vld [vmem:[#allocation5 + $0x344] sm:$0xf]
        %v3728 = vld [vmem:[#allocation5 + $0x348] sm:$0xf]
        %v3729 = vld [vmem:[#allocation5 + $0x34c] sm:$0xf]
        %v3730 = vld [vmem:[#allocation5 + $0x350] sm:$0xf]
        %v3731 = vld [vmem:[#allocation5 + $0x354] sm:$0xf]
        %v3732 = vld [vmem:[#allocation5 + $0x358] sm:$0xf]
        %v3733 = vld [vmem:[#allocation5 + $0x35c] sm:$0xf]
        %v3734 = vld [vmem:[#allocation5 + $0x360] sm:$0xf]
        %v3735 = vld [vmem:[#allocation5 + $0x364] sm:$0xf]
        %v3736 = vld [vmem:[#allocation5 + $0x368] sm:$0xf]
        %v3737 = vld [vmem:[#allocation5 + $0x36c] sm:$0xf]
        %v3738 = vld [vmem:[#allocation5 + $0x370] sm:$0xf]
        %v3739 = vld [vmem:[#allocation5 + $0x374] sm:$0xf]
        %v3740 = vld [vmem:[#allocation5 + $0x378] sm:$0xf]
        %v3741 = vld [vmem:[#allocation5 + $0x37c] sm:$0xf]
        %v3742 = vld [vmem:[#allocation5 + $0x380] sm:$0xf]
        %v3743 = vld [vmem:[#allocation5 + $0x384] sm:$0xf]
        %v3744 = vld [vmem:[#allocation5 + $0x388] sm:$0xf]
        %v3745 = vld [vmem:[#allocation5 + $0x38c] sm:$0xf]
        %v3746 = vld [vmem:[#allocation5 + $0x390] sm:$0xf]
        %v3747 = vld [vmem:[#allocation5 + $0x394] sm:$0xf]
        %v3748 = vld [vmem:[#allocation5 + $0x398] sm:$0xf]
        %v3749 = vld [vmem:[#allocation5 + $0x39c] sm:$0xf]
        %v3750 = vld [vmem:[#allocation5 + $0x3a0] sm:$0xf]
        %v3751 = vld [vmem:[#allocation5 + $0x3a4] sm:$0xf]
        %v3752 = vld [vmem:[#allocation5 + $0x3a8] sm:$0xf]
        %v3753 = vld [vmem:[#allocation5 + $0x3ac] sm:$0xf]
        %v3754 = vld [vmem:[#allocation5 + $0x3b0] sm:$0xf]
        %v3755 = vld [vmem:[#allocation5 + $0x3b4] sm:$0xf]
        %v3756 = vld [vmem:[#allocation5 + $0x3b8] sm:$0xf]
        %v3757 = vld [vmem:[#allocation5 + $0x3bc] sm:$0xf]
        %v3758 = vld [vmem:[#allocation5 + $0x3c0] sm:$0xf]
        %v3759 = vld [vmem:[#allocation5 + $0x3c4] sm:$0xf]
        %v3760 = vld [vmem:[#allocation5 + $0x3c8] sm:$0xf]
        %v3761 = vld [vmem:[#allocation5 + $0x3cc] sm:$0xf]
        %v3762 = vld [vmem:[#allocation5 + $0x3d0] sm:$0xf]
        %v3763 = vld [vmem:[#allocation5 + $0x3d4] sm:$0xf]
        %v3764 = vld [vmem:[#allocation5 + $0x3d8] sm:$0xf]
        %v3765 = vld [vmem:[#allocation5 + $0x3dc] sm:$0xf]
        %v3766 = vld [vmem:[#allocation5 + $0x3e0] sm:$0xf]
        %v3767 = vld [vmem:[#allocation5 + $0x3e4] sm:$0xf]
        %v3768 = vld [vmem:[#allocation5 + $0x3e8] sm:$0xf]
        %v3769 = vld [vmem:[#allocation5 + $0x3ec] sm:$0xf]
        %v3770 = vld [vmem:[#allocation5 + $0x3f0] sm:$0xf]
        %v3771 = vld [vmem:[#allocation5 + $0x3f4] sm:$0xf]
        %v3772 = vld [vmem:[#allocation5 + $0x3f8] sm:$0xf]
        %v3773 = vld [vmem:[#allocation5 + $0x3fc] sm:$0xf]
        %v3774 = vld [vmem:[#allocation5 + $0x400] sm:$0xf]
        %v3775 = vld [vmem:[#allocation5 + $0x404] sm:$0xf]
        %v3776 = vld [vmem:[#allocation5 + $0x408] sm:$0xf]
        %v3777 = vld [vmem:[#allocation5 + $0x40c] sm:$0xf]
        %v3778 = vld [vmem:[#allocation5 + $0x410] sm:$0xf]
        %v3779 = vld [vmem:[#allocation5 + $0x414] sm:$0xf]
        %v3780 = vld [vmem:[#allocation5 + $0x418] sm:$0xf]
        %v3781 = vld [vmem:[#allocation5 + $0x41c] sm:$0xf]
        %v3782 = vld [vmem:[#allocation5 + $0x420] sm:$0xf]
        %v3783 = vld [vmem:[#allocation5 + $0x424] sm:$0xf]
        %v3784 = vld [vmem:[#allocation5 + $0x428] sm:$0xf]
        %v3785 = vld [vmem:[#allocation5 + $0x42c] sm:$0xf]
        %v3786 = vld [vmem:[#allocation5 + $0x430] sm:$0xf]
        %v3787 = vld [vmem:[#allocation5 + $0x434] sm:$0xf]
        %v3788 = vld [vmem:[#allocation5 + $0x438] sm:$0xf]
        %v3789 = vld [vmem:[#allocation5 + $0x43c] sm:$0xf]
        %v3790 = vld [vmem:[#allocation5 + $0x440] sm:$0xf]
        %v3791 = vld [vmem:[#allocation5 + $0x444] sm:$0xf]
        %v3792 = vld [vmem:[#allocation5 + $0x448] sm:$0xf]
        %v3793 = vld [vmem:[#allocation5 + $0x44c] sm:$0xf]
        %v3794 = vld [vmem:[#allocation5 + $0x450] sm:$0xf]
        %v3795 = vld [vmem:[#allocation5 + $0x454] sm:$0xf]
        %v3796 = vld [vmem:[#allocation5 + $0x458] sm:$0xf]
        %v3797 = vld [vmem:[#allocation5 + $0x45c] sm:$0xf]
        %v3798 = vld [vmem:[#allocation5 + $0x460] sm:$0xf]
        %v3799 = vld [vmem:[#allocation5 + $0x464] sm:$0xf]
        %v3800 = vld [vmem:[#allocation5 + $0x468] sm:$0xf]
        %v3801 = vld [vmem:[#allocation5 + $0x46c] sm:$0xf]
        %v3802 = vld [vmem:[#allocation5 + $0x470] sm:$0xf]
        %v3803 = vld [vmem:[#allocation5 + $0x474] sm:$0xf]
        %v3804 = vld [vmem:[#allocation5 + $0x478] sm:$0xf]
        %v3805 = vld [vmem:[#allocation5 + $0x47c] sm:$0xf]
        %v3806 = vld [vmem:[#allocation5 + $0x480] sm:$0xf]
        %v3807 = vld [vmem:[#allocation5 + $0x484] sm:$0xf]
        %v3808 = vld [vmem:[#allocation5 + $0x488] sm:$0xf]
        %v3809 = vld [vmem:[#allocation5 + $0x48c] sm:$0xf]
        %v3810 = vld [vmem:[#allocation5 + $0x490] sm:$0xf]
        %v3811 = vld [vmem:[#allocation5 + $0x494] sm:$0xf]
        %v3812 = vld [vmem:[#allocation5 + $0x498] sm:$0xf]
        %v3813 = vld [vmem:[#allocation5 + $0x49c] sm:$0xf]
        %v3814 = vld [vmem:[#allocation5 + $0x4a0] sm:$0xf]
        %v3815 = vld [vmem:[#allocation5 + $0x4a4] sm:$0xf]
        %v3816 = vld [vmem:[#allocation5 + $0x4a8] sm:$0xf]
        %v3817 = vld [vmem:[#allocation5 + $0x4ac] sm:$0xf]
        %v3818 = vld [vmem:[#allocation5 + $0x4b0] sm:$0xf]
        %v3819 = vld [vmem:[#allocation5 + $0x4b4] sm:$0xf]
        %v3820 = vld [vmem:[#allocation5 + $0x4b8] sm:$0xf]
        %v3821 = vld [vmem:[#allocation5 + $0x4bc] sm:$0xf]
        %v3822 = vld [vmem:[#allocation5 + $0x4c0] sm:$0xf]
        %v3823 = vld [vmem:[#allocation5 + $0x4c4] sm:$0xf]
        %v3824 = vld [vmem:[#allocation5 + $0x4c8] sm:$0xf]
        %v3825 = vld [vmem:[#allocation5 + $0x4cc] sm:$0xf]
        %v3826 = vld [vmem:[#allocation5 + $0x4d0] sm:$0xf]
        %v3827 = vld [vmem:[#allocation5 + $0x4d4] sm:$0xf]
        %v3828 = vld [vmem:[#allocation5 + $0x4d8] sm:$0xf]
        %v3829 = vld [vmem:[#allocation5 + $0x4dc] sm:$0xf]
        %v3830 = vld [vmem:[#allocation5 + $0x4e0] sm:$0xf]
        %v3831 = vld [vmem:[#allocation5 + $0x4e4] sm:$0xf]
        %v3832 = vld [vmem:[#allocation5 + $0x4e8] sm:$0xf]
        %v3833 = vld [vmem:[#allocation5 + $0x4ec] sm:$0xf]
        %v3834 = vld [vmem:[#allocation5 + $0x4f0] sm:$0xf]
        %v3835 = vld [vmem:[#allocation5 + $0x4f4] sm:$0xf]
        %v3836 = vld [vmem:[#allocation5 + $0x4f8] sm:$0xf]
        %v3837 = vld [vmem:[#allocation5 + $0x4fc] sm:$0xf]
        %v3838 = vld [vmem:[#allocation5 + $0x500] sm:$0xf]
        %v3839 = vld [vmem:[#allocation5 + $0x504] sm:$0xf]
        %v3840 = vld [vmem:[#allocation5 + $0x508] sm:$0xf]
        %v3841 = vld [vmem:[#allocation5 + $0x50c] sm:$0xf]
        %v3842 = vld [vmem:[#allocation5 + $0x510] sm:$0xf]
        %v3843 = vld [vmem:[#allocation5 + $0x514] sm:$0xf]
        %v3844 = vld [vmem:[#allocation5 + $0x518] sm:$0xf]
        %v3845 = vld [vmem:[#allocation5 + $0x51c] sm:$0xf]
        %v3846 = vld [vmem:[#allocation5 + $0x520] sm:$0xf]
        %v3847 = vld [vmem:[#allocation5 + $0x524] sm:$0xf]
        %v3848 = vld [vmem:[#allocation5 + $0x528] sm:$0xf]
        %v3849 = vld [vmem:[#allocation5 + $0x52c] sm:$0xf]
        %v3850 = vld [vmem:[#allocation5 + $0x530] sm:$0xf]
        %v3851 = vld [vmem:[#allocation5 + $0x534] sm:$0xf]
        %v3852 = vld [vmem:[#allocation5 + $0x538] sm:$0xf]
        %v3853 = vld [vmem:[#allocation5 + $0x53c] sm:$0xf]
        %v3854 = vld [vmem:[#allocation5 + $0x540] sm:$0xf]
        %v3855 = vld [vmem:[#allocation5 + $0x544] sm:$0xf]
        %v3856 = vld [vmem:[#allocation5 + $0x548] sm:$0xf]
        %v3857 = vld [vmem:[#allocation5 + $0x54c] sm:$0xf]
        %v3858 = vld [vmem:[#allocation5 + $0x550] sm:$0xf]
        %v3859 = vld [vmem:[#allocation5 + $0x554] sm:$0xf]
        %v3860 = vld [vmem:[#allocation5 + $0x558] sm:$0xf]
        %v3861 = vld [vmem:[#allocation5 + $0x55c] sm:$0xf]
        %v3862 = vld [vmem:[#allocation5 + $0x560] sm:$0xf]
        %v3863 = vld [vmem:[#allocation5 + $0x564] sm:$0xf]
        %v3864 = vld [vmem:[#allocation5 + $0x568] sm:$0xf]
        %v3865 = vld [vmem:[#allocation5 + $0x56c] sm:$0xf]
        %v3866 = vld [vmem:[#allocation5 + $0x570] sm:$0xf]
        %v3867 = vld [vmem:[#allocation5 + $0x574] sm:$0xf]
        %v3868 = vld [vmem:[#allocation5 + $0x578] sm:$0xf]
        %v3869 = vld [vmem:[#allocation5 + $0x57c] sm:$0xf]
        %v3870 = vld [vmem:[#allocation5 + $0x580] sm:$0xf]
        %v3871 = vld [vmem:[#allocation5 + $0x584] sm:$0xf]
        %v3872 = vld [vmem:[#allocation5 + $0x588] sm:$0xf]
        %v3873 = vld [vmem:[#allocation5 + $0x58c] sm:$0xf]
        %v3874 = vld [vmem:[#allocation5 + $0x590] sm:$0xf]
        %v3875 = vld [vmem:[#allocation5 + $0x594] sm:$0xf]
        %v3876 = vld [vmem:[#allocation5 + $0x598] sm:$0xf]
        %v3877 = vld [vmem:[#allocation5 + $0x59c] sm:$0xf]
        %v3878 = vld [vmem:[#allocation5 + $0x5a0] sm:$0xf]
        %v3879 = vld [vmem:[#allocation5 + $0x5a4] sm:$0xf]
        %v3880 = vld [vmem:[#allocation5 + $0x5a8] sm:$0xf]
        %v3881 = vld [vmem:[#allocation5 + $0x5ac] sm:$0xf]
        %v3882 = vld [vmem:[#allocation5 + $0x5b0] sm:$0xf]
        %v3883 = vld [vmem:[#allocation5 + $0x5b4] sm:$0xf]
        %v3884 = vld [vmem:[#allocation5 + $0x5b8] sm:$0xf]
        %v3885 = vld [vmem:[#allocation5 + $0x5bc] sm:$0xf]
        %v3886 = vld [vmem:[#allocation5 + $0x5c0] sm:$0xf]
        %v3887 = vld [vmem:[#allocation5 + $0x5c4] sm:$0xf]
        %v3888 = vld [vmem:[#allocation5 + $0x5c8] sm:$0xf]
        %v3889 = vld [vmem:[#allocation5 + $0x5cc] sm:$0xf]
        %v3890 = vld [vmem:[#allocation5 + $0x5d0] sm:$0xf]
        %v3891 = vld [vmem:[#allocation5 + $0x5d4] sm:$0xf]
        %v3892 = vld [vmem:[#allocation5 + $0x5d8] sm:$0xf]
        %v3893 = vld [vmem:[#allocation5 + $0x5dc] sm:$0xf]
        %v3894 = vld [vmem:[#allocation5 + $0x5e0] sm:$0xf]
        %v3895 = vld [vmem:[#allocation5 + $0x5e4] sm:$0xf]
        %v3896 = vld [vmem:[#allocation5 + $0x5e8] sm:$0xf]
        %v3897 = vld [vmem:[#allocation5 + $0x5ec] sm:$0xf]
        %v3898 = vld [vmem:[#allocation5 + $0x5f0] sm:$0xf]
        %v3899 = vld [vmem:[#allocation5 + $0x5f4] sm:$0xf]
        %v3900 = vld [vmem:[#allocation5 + $0x5f8] sm:$0xf]
        %v3901 = vld [vmem:[#allocation5 + $0x5fc] sm:$0xf]
        %v3902 = vld [vmem:[%s11] sm:$0x1]
        %v4287 = vunpack.c.l.b16 %v3518
        %v4288 = vunpack.c.l.b16 %v3519
        %v4289 = vunpack.c.l.b16 %v3520
        %v4290 = vunpack.c.l.b16 %v3521
        %v4291 = vunpack.c.l.b16 %v3522
        %v4292 = vunpack.c.l.b16 %v3523
        %v4293 = vunpack.c.l.b16 %v3524
        %v4294 = vunpack.c.l.b16 %v3525
        %v4295 = vunpack.c.l.b16 %v3526
        %v4296 = vunpack.c.l.b16 %v3527
        %v4297 = vunpack.c.l.b16 %v3528
        %v4298 = vunpack.c.l.b16 %v3529
        %v4299 = vunpack.c.l.b16 %v3530
        %v4300 = vunpack.c.l.b16 %v3531
        %v4301 = vunpack.c.l.b16 %v3532
        %v4302 = vunpack.c.l.b16 %v3533
        %v4303 = vunpack.c.l.b16 %v3534
        %v4304 = vunpack.c.l.b16 %v3535
        %v4305 = vunpack.c.l.b16 %v3536
        %v4306 = vunpack.c.l.b16 %v3537
        %v4307 = vunpack.c.l.b16 %v3538
        %v4308 = vunpack.c.l.b16 %v3539
        %v4309 = vunpack.c.l.b16 %v3540
        %v4310 = vunpack.c.l.b16 %v3541
        %v4311 = vunpack.c.l.b16 %v3542
        %v4312 = vunpack.c.l.b16 %v3543
        %v4313 = vunpack.c.l.b16 %v3544
        %v4314 = vunpack.c.l.b16 %v3545
        %v4315 = vunpack.c.l.b16 %v3546
        %v4316 = vunpack.c.l.b16 %v3547
        %v4317 = vunpack.c.l.b16 %v3548
        %v4318 = vunpack.c.l.b16 %v3549
        %v4319 = vunpack.c.l.b16 %v3550
        %v4320 = vunpack.c.l.b16 %v3551
        %v4321 = vunpack.c.l.b16 %v3552
        %v4322 = vunpack.c.l.b16 %v3553
        %v4323 = vunpack.c.l.b16 %v3554
        %v4324 = vunpack.c.l.b16 %v3555
        %v4325 = vunpack.c.l.b16 %v3556
        %v4326 = vunpack.c.l.b16 %v3557
        %v4327 = vunpack.c.l.b16 %v3558
        %v4328 = vunpack.c.l.b16 %v3559
        %v4329 = vunpack.c.l.b16 %v3560
        %v4330 = vunpack.c.l.b16 %v3561
        %v4331 = vunpack.c.l.b16 %v3562
        %v4332 = vunpack.c.l.b16 %v3563
        %v4333 = vunpack.c.l.b16 %v3564
        %v4334 = vunpack.c.l.b16 %v3565
        %v4335 = vunpack.c.l.b16 %v3566
        %v4336 = vunpack.c.l.b16 %v3567
        %v4337 = vunpack.c.l.b16 %v3568
        %v4338 = vunpack.c.l.b16 %v3569
        %v4339 = vunpack.c.l.b16 %v3570
        %v4340 = vunpack.c.l.b16 %v3571
        %v4341 = vunpack.c.l.b16 %v3572
        %v4342 = vunpack.c.l.b16 %v3573
        %v4343 = vunpack.c.l.b16 %v3574
        %v4344 = vunpack.c.l.b16 %v3575
        %v4345 = vunpack.c.l.b16 %v3576
        %v4346 = vunpack.c.l.b16 %v3577
        %v4347 = vunpack.c.l.b16 %v3578
        %v4348 = vunpack.c.l.b16 %v3579
        %v4349 = vunpack.c.l.b16 %v3580
        %v4350 = vunpack.c.l.b16 %v3581
        %v4351 = vunpack.c.l.b16 %v3582
        %v4352 = vunpack.c.l.b16 %v3583
        %v4353 = vunpack.c.l.b16 %v3584
        %v4354 = vunpack.c.l.b16 %v3585
        %v4355 = vunpack.c.l.b16 %v3586
        %v4356 = vunpack.c.l.b16 %v3587
        %v4357 = vunpack.c.l.b16 %v3588
        %v4358 = vunpack.c.l.b16 %v3589
        %v4359 = vunpack.c.l.b16 %v3590
        %v4360 = vunpack.c.l.b16 %v3591
        %v4361 = vunpack.c.l.b16 %v3592
        %v4362 = vunpack.c.l.b16 %v3593
        %v4363 = vunpack.c.l.b16 %v3594
        %v4364 = vunpack.c.l.b16 %v3595
        %v4365 = vunpack.c.l.b16 %v3596
        %v4366 = vunpack.c.l.b16 %v3597
        %v4367 = vunpack.c.l.b16 %v3598
        %v4368 = vunpack.c.l.b16 %v3599
        %v4369 = vunpack.c.l.b16 %v3600
        %v4370 = vunpack.c.l.b16 %v3601
        %v4371 = vunpack.c.l.b16 %v3602
        %v4372 = vunpack.c.l.b16 %v3603
        %v4373 = vunpack.c.l.b16 %v3604
        %v4374 = vunpack.c.l.b16 %v3605
        %v4375 = vunpack.c.l.b16 %v3606
        %v4376 = vunpack.c.l.b16 %v3607
        %v4377 = vunpack.c.l.b16 %v3608
        %v4378 = vunpack.c.l.b16 %v3609
        %v4379 = vunpack.c.l.b16 %v3610
        %v4380 = vunpack.c.l.b16 %v3611
        %v4381 = vunpack.c.l.b16 %v3612
        %v4382 = vunpack.c.l.b16 %v3613
        %v4383 = vunpack.c.l.b16 %v3614
        %v4384 = vunpack.c.l.b16 %v3615
        %v4385 = vunpack.c.l.b16 %v3616
        %v4386 = vunpack.c.l.b16 %v3617
        %v4387 = vunpack.c.l.b16 %v3618
        %v4388 = vunpack.c.l.b16 %v3619
        %v4389 = vunpack.c.l.b16 %v3620
        %v4390 = vunpack.c.l.b16 %v3621
        %v4391 = vunpack.c.l.b16 %v3622
        %v4392 = vunpack.c.l.b16 %v3623
        %v4393 = vunpack.c.l.b16 %v3624
        %v4394 = vunpack.c.l.b16 %v3625
        %v4395 = vunpack.c.l.b16 %v3626
        %v4396 = vunpack.c.l.b16 %v3627
        %v4397 = vunpack.c.l.b16 %v3628
        %v4398 = vunpack.c.l.b16 %v3629
        %v4399 = vunpack.c.l.b16 %v3630
        %v4400 = vunpack.c.l.b16 %v3631
        %v4401 = vunpack.c.l.b16 %v3632
        %v4402 = vunpack.c.l.b16 %v3633
        %v4403 = vunpack.c.l.b16 %v3634
        %v4404 = vunpack.c.l.b16 %v3635
        %v4405 = vunpack.c.l.b16 %v3636
        %v4406 = vunpack.c.l.b16 %v3637
        %v4407 = vunpack.c.l.b16 %v3638
        %v4408 = vunpack.c.l.b16 %v3639
        %v4409 = vunpack.c.l.b16 %v3640
        %v4410 = vunpack.c.l.b16 %v3641
        %v4411 = vunpack.c.l.b16 %v3642
        %v4412 = vunpack.c.l.b16 %v3643
        %v4413 = vunpack.c.l.b16 %v3644
        %v4414 = vunpack.c.l.b16 %v3645
        %v4415 = vunpack.c.l.b16 %v3646
        %v4416 = vunpack.c.l.b16 %v3647
        %v4417 = vunpack.c.l.b16 %v3648
        %v4418 = vunpack.c.l.b16 %v3649
        %v4419 = vunpack.c.l.b16 %v3650
        %v4420 = vunpack.c.l.b16 %v3651
        %v4421 = vunpack.c.l.b16 %v3652
        %v4422 = vunpack.c.l.b16 %v3653
        %v4423 = vunpack.c.l.b16 %v3654
        %v4424 = vunpack.c.l.b16 %v3655
        %v4425 = vunpack.c.l.b16 %v3656
        %v4426 = vunpack.c.l.b16 %v3657
        %v4427 = vunpack.c.l.b16 %v3658
        %v4428 = vunpack.c.l.b16 %v3659
        %v4429 = vunpack.c.l.b16 %v3660
        %v4430 = vunpack.c.l.b16 %v3661
        %v4431 = vunpack.c.l.b16 %v3662
        %v4432 = vunpack.c.l.b16 %v3663
        %v4433 = vunpack.c.l.b16 %v3664
        %v4434 = vunpack.c.l.b16 %v3665
        %v4435 = vunpack.c.l.b16 %v3666
        %v4436 = vunpack.c.l.b16 %v3667
        %v4437 = vunpack.c.l.b16 %v3668
        %v4438 = vunpack.c.l.b16 %v3669
        %v4439 = vunpack.c.l.b16 %v3670
        %v4440 = vunpack.c.l.b16 %v3671
        %v4441 = vunpack.c.l.b16 %v3672
        %v4442 = vunpack.c.l.b16 %v3673
        %v4443 = vunpack.c.l.b16 %v3674
        %v4444 = vunpack.c.l.b16 %v3675
        %v4445 = vunpack.c.l.b16 %v3676
        %v4446 = vunpack.c.l.b16 %v3677
        %v4447 = vunpack.c.l.b16 %v3678
        %v4448 = vunpack.c.l.b16 %v3679
        %v4449 = vunpack.c.l.b16 %v3680
        %v4450 = vunpack.c.l.b16 %v3681
        %v4451 = vunpack.c.l.b16 %v3682
        %v4452 = vunpack.c.l.b16 %v3683
        %v4453 = vunpack.c.l.b16 %v3684
        %v4454 = vunpack.c.l.b16 %v3685
        %v4455 = vunpack.c.l.b16 %v3686
        %v4456 = vunpack.c.l.b16 %v3687
        %v4457 = vunpack.c.l.b16 %v3688
        %v4458 = vunpack.c.l.b16 %v3689
        %v4459 = vunpack.c.l.b16 %v3690
        %v4460 = vunpack.c.l.b16 %v3691
        %v4461 = vunpack.c.l.b16 %v3692
        %v4462 = vunpack.c.l.b16 %v3693
        %v4463 = vunpack.c.l.b16 %v3694
        %v4464 = vunpack.c.l.b16 %v3695
        %v4465 = vunpack.c.l.b16 %v3696
        %v4466 = vunpack.c.l.b16 %v3697
        %v4467 = vunpack.c.l.b16 %v3698
        %v4468 = vunpack.c.l.b16 %v3699
        %v4469 = vunpack.c.l.b16 %v3700
        %v4470 = vunpack.c.l.b16 %v3701
        %v4471 = vunpack.c.l.b16 %v3702
        %v4472 = vunpack.c.l.b16 %v3703
        %v4473 = vunpack.c.l.b16 %v3704
        %v4474 = vunpack.c.l.b16 %v3705
        %v4475 = vunpack.c.l.b16 %v3706
        %v4476 = vunpack.c.l.b16 %v3707
        %v4477 = vunpack.c.l.b16 %v3708
        %v4478 = vunpack.c.l.b16 %v3709
        %v4479 = vunpack.c.l.b16 %v3710
        %v4480 = vunpack.c.l.b16 %v3711
        %v4481 = vunpack.c.l.b16 %v3712
        %v4482 = vunpack.c.l.b16 %v3713
        %v4483 = vunpack.c.l.b16 %v3714
        %v4484 = vunpack.c.l.b16 %v3715
        %v4485 = vunpack.c.l.b16 %v3716
        %v4486 = vunpack.c.l.b16 %v3717
        %v4487 = vunpack.c.l.b16 %v3718
        %v4488 = vunpack.c.l.b16 %v3719
        %v4489 = vunpack.c.l.b16 %v3720
        %v4490 = vunpack.c.l.b16 %v3721
        %v4491 = vunpack.c.l.b16 %v3722
        %v4492 = vunpack.c.l.b16 %v3723
        %v4493 = vunpack.c.l.b16 %v3724
        %v4494 = vunpack.c.l.b16 %v3725
        %v4495 = vunpack.c.l.b16 %v3726
        %v4496 = vunpack.c.l.b16 %v3727
        %v4497 = vunpack.c.l.b16 %v3728
        %v4498 = vunpack.c.l.b16 %v3729
        %v4499 = vunpack.c.l.b16 %v3730
        %v4500 = vunpack.c.l.b16 %v3731
        %v4501 = vunpack.c.l.b16 %v3732
        %v4502 = vunpack.c.l.b16 %v3733
        %v4503 = vunpack.c.l.b16 %v3734
        %v4504 = vunpack.c.l.b16 %v3735
        %v4505 = vunpack.c.l.b16 %v3736
        %v4506 = vunpack.c.l.b16 %v3737
        %v4507 = vunpack.c.l.b16 %v3738
        %v4508 = vunpack.c.l.b16 %v3739
        %v4509 = vunpack.c.l.b16 %v3740
        %v4510 = vunpack.c.l.b16 %v3741
        %v4511 = vunpack.c.l.b16 %v3742
        %v4512 = vunpack.c.l.b16 %v3743
        %v4513 = vunpack.c.l.b16 %v3744
        %v4514 = vunpack.c.l.b16 %v3745
        %v4515 = vunpack.c.l.b16 %v3746
        %v4516 = vunpack.c.l.b16 %v3747
        %v4517 = vunpack.c.l.b16 %v3748
        %v4518 = vunpack.c.l.b16 %v3749
        %v4519 = vunpack.c.l.b16 %v3750
        %v4520 = vunpack.c.l.b16 %v3751
        %v4521 = vunpack.c.l.b16 %v3752
        %v4522 = vunpack.c.l.b16 %v3753
        %v4523 = vunpack.c.l.b16 %v3754
        %v4524 = vunpack.c.l.b16 %v3755
        %v4525 = vunpack.c.l.b16 %v3756
        %v4526 = vunpack.c.l.b16 %v3757
        %v4527 = vunpack.c.l.b16 %v3758
        %v4528 = vunpack.c.l.b16 %v3759
        %v4529 = vunpack.c.l.b16 %v3760
        %v4530 = vunpack.c.l.b16 %v3761
        %v4531 = vunpack.c.l.b16 %v3762
        %v4532 = vunpack.c.l.b16 %v3763
        %v4533 = vunpack.c.l.b16 %v3764
        %v4534 = vunpack.c.l.b16 %v3765
        %v4535 = vunpack.c.l.b16 %v3766
        %v4536 = vunpack.c.l.b16 %v3767
        %v4537 = vunpack.c.l.b16 %v3768
        %v4538 = vunpack.c.l.b16 %v3769
        %v4539 = vunpack.c.l.b16 %v3770
        %v4540 = vunpack.c.l.b16 %v3771
        %v4541 = vunpack.c.l.b16 %v3772
        %v4542 = vunpack.c.l.b16 %v3773
        %v4543 = vunpack.c.l.b16 %v3774
        %v4544 = vunpack.c.l.b16 %v3775
        %v4545 = vunpack.c.l.b16 %v3776
        %v4546 = vunpack.c.l.b16 %v3777
        %v4547 = vunpack.c.l.b16 %v3778
        %v4548 = vunpack.c.l.b16 %v3779
        %v4549 = vunpack.c.l.b16 %v3780
        %v4550 = vunpack.c.l.b16 %v3781
        %v4551 = vunpack.c.l.b16 %v3782
        %v4552 = vunpack.c.l.b16 %v3783
        %v4553 = vunpack.c.l.b16 %v3784
        %v4554 = vunpack.c.l.b16 %v3785
        %v4555 = vunpack.c.l.b16 %v3786
        %v4556 = vunpack.c.l.b16 %v3787
        %v4557 = vunpack.c.l.b16 %v3788
        %v4558 = vunpack.c.l.b16 %v3789
        %v4559 = vunpack.c.l.b16 %v3790
        %v4560 = vunpack.c.l.b16 %v3791
        %v4561 = vunpack.c.l.b16 %v3792
        %v4562 = vunpack.c.l.b16 %v3793
        %v4563 = vunpack.c.l.b16 %v3794
        %v4564 = vunpack.c.l.b16 %v3795
        %v4565 = vunpack.c.l.b16 %v3796
        %v4566 = vunpack.c.l.b16 %v3797
        %v4567 = vunpack.c.l.b16 %v3798
        %v4568 = vunpack.c.l.b16 %v3799
        %v4569 = vunpack.c.l.b16 %v3800
        %v4570 = vunpack.c.l.b16 %v3801
        %v4571 = vunpack.c.l.b16 %v3802
        %v4572 = vunpack.c.l.b16 %v3803
        %v4573 = vunpack.c.l.b16 %v3804
        %v4574 = vunpack.c.l.b16 %v3805
        %v4575 = vunpack.c.l.b16 %v3806
        %v4576 = vunpack.c.l.b16 %v3807
        %v4577 = vunpack.c.l.b16 %v3808
        %v4578 = vunpack.c.l.b16 %v3809
        %v4579 = vunpack.c.l.b16 %v3810
        %v4580 = vunpack.c.l.b16 %v3811
        %v4581 = vunpack.c.l.b16 %v3812
        %v4582 = vunpack.c.l.b16 %v3813
        %v4583 = vunpack.c.l.b16 %v3814
        %v4584 = vunpack.c.l.b16 %v3815
        %v4585 = vunpack.c.l.b16 %v3816
        %v4586 = vunpack.c.l.b16 %v3817
        %v4587 = vunpack.c.l.b16 %v3818
        %v4588 = vunpack.c.l.b16 %v3819
        %v4589 = vunpack.c.l.b16 %v3820
        %v4590 = vunpack.c.l.b16 %v3821
        %v4591 = vunpack.c.l.b16 %v3822
        %v4592 = vunpack.c.l.b16 %v3823
        %v4593 = vunpack.c.l.b16 %v3824
        %v4594 = vunpack.c.l.b16 %v3825
        %v4595 = vunpack.c.l.b16 %v3826
        %v4596 = vunpack.c.l.b16 %v3827
        %v4597 = vunpack.c.l.b16 %v3828
        %v4598 = vunpack.c.l.b16 %v3829
        %v4599 = vunpack.c.l.b16 %v3830
        %v4600 = vunpack.c.l.b16 %v3831
        %v4601 = vunpack.c.l.b16 %v3832
        %v4602 = vunpack.c.l.b16 %v3833
        %v4603 = vunpack.c.l.b16 %v3834
        %v4604 = vunpack.c.l.b16 %v3835
        %v4605 = vunpack.c.l.b16 %v3836
        %v4606 = vunpack.c.l.b16 %v3837
        %v4607 = vunpack.c.l.b16 %v3838
        %v4608 = vunpack.c.l.b16 %v3839
        %v4609 = vunpack.c.l.b16 %v3840
        %v4610 = vunpack.c.l.b16 %v3841
        %v4611 = vunpack.c.l.b16 %v3842
        %v4612 = vunpack.c.l.b16 %v3843
        %v4613 = vunpack.c.l.b16 %v3844
        %v4614 = vunpack.c.l.b16 %v3845
        %v4615 = vunpack.c.l.b16 %v3846
        %v4616 = vunpack.c.l.b16 %v3847
        %v4617 = vunpack.c.l.b16 %v3848
        %v4618 = vunpack.c.l.b16 %v3849
        %v4619 = vunpack.c.l.b16 %v3850
        %v4620 = vunpack.c.l.b16 %v3851
        %v4621 = vunpack.c.l.b16 %v3852
        %v4622 = vunpack.c.l.b16 %v3853
        %v4623 = vunpack.c.l.b16 %v3854
        %v4624 = vunpack.c.l.b16 %v3855
        %v4625 = vunpack.c.l.b16 %v3856
        %v4626 = vunpack.c.l.b16 %v3857
        %v4627 = vunpack.c.l.b16 %v3858
        %v4628 = vunpack.c.l.b16 %v3859
        %v4629 = vunpack.c.l.b16 %v3860
        %v4630 = vunpack.c.l.b16 %v3861
        %v4631 = vunpack.c.l.b16 %v3862
        %v4632 = vunpack.c.l.b16 %v3863
        %v4633 = vunpack.c.l.b16 %v3864
        %v4634 = vunpack.c.l.b16 %v3865
        %v4635 = vunpack.c.l.b16 %v3866
        %v4636 = vunpack.c.l.b16 %v3867
        %v4637 = vunpack.c.l.b16 %v3868
        %v4638 = vunpack.c.l.b16 %v3869
        %v4639 = vunpack.c.l.b16 %v3870
        %v4640 = vunpack.c.l.b16 %v3871
        %v4641 = vunpack.c.l.b16 %v3872
        %v4642 = vunpack.c.l.b16 %v3873
        %v4643 = vunpack.c.l.b16 %v3874
        %v4644 = vunpack.c.l.b16 %v3875
        %v4645 = vunpack.c.l.b16 %v3876
        %v4646 = vunpack.c.l.b16 %v3877
        %v4647 = vunpack.c.l.b16 %v3878
        %v4648 = vunpack.c.l.b16 %v3879
        %v4649 = vunpack.c.l.b16 %v3880
        %v4650 = vunpack.c.l.b16 %v3881
        %v4651 = vunpack.c.l.b16 %v3882
        %v4652 = vunpack.c.l.b16 %v3883
        %v4653 = vunpack.c.l.b16 %v3884
        %v4654 = vunpack.c.l.b16 %v3885
        %v4655 = vunpack.c.l.b16 %v3886
        %v4656 = vunpack.c.l.b16 %v3887
        %v4657 = vunpack.c.l.b16 %v3888
        %v4658 = vunpack.c.l.b16 %v3889
        %v4659 = vunpack.c.l.b16 %v3890
        %v4660 = vunpack.c.l.b16 %v3891
        %v4661 = vunpack.c.l.b16 %v3892
        %v4662 = vunpack.c.l.b16 %v3893
        %v4663 = vunpack.c.l.b16 %v3894
        %v4664 = vunpack.c.l.b16 %v3895
        %v4665 = vunpack.c.l.b16 %v3896
        %v4666 = vunpack.c.l.b16 %v3897
        %v4667 = vunpack.c.l.b16 %v3898
        %v4668 = vunpack.c.l.b16 %v3899
        %v4669 = vunpack.c.l.b16 %v3900
        %v4670 = vunpack.c.l.b16 %v3901
        %v4671 = vpack.c.b16 %v4288, %v4287
        %v4672 = vpack.c.b16 %v4290, %v4289
        %v4673 = vpack.c.b16 %v4292, %v4291
        %v4674 = vpack.c.b16 %v4294, %v4293
        %v4675 = vpack.c.b16 %v4296, %v4295
        %v4676 = vpack.c.b16 %v4298, %v4297
        %v4677 = vpack.c.b16 %v4300, %v4299
        %v4678 = vpack.c.b16 %v4302, %v4301
        %v4679 = vpack.c.b16 %v4304, %v4303
        %v4680 = vpack.c.b16 %v4306, %v4305
        %v4681 = vpack.c.b16 %v4308, %v4307
        %v4682 = vpack.c.b16 %v4310, %v4309
        %v4683 = vpack.c.b16 %v4312, %v4311
        %v4684 = vpack.c.b16 %v4314, %v4313
        %v4685 = vpack.c.b16 %v4316, %v4315
        %v4686 = vpack.c.b16 %v4318, %v4317
        %v4687 = vpack.c.b16 %v4320, %v4319
        %v4688 = vpack.c.b16 %v4322, %v4321
        %v4689 = vpack.c.b16 %v4324, %v4323
        %v4690 = vpack.c.b16 %v4326, %v4325
        %v4691 = vpack.c.b16 %v4328, %v4327
        %v4692 = vpack.c.b16 %v4330, %v4329
        %v4693 = vpack.c.b16 %v4332, %v4331
        %v4694 = vpack.c.b16 %v4334, %v4333
        %v4695 = vpack.c.b16 %v4336, %v4335
        %v4696 = vpack.c.b16 %v4338, %v4337
        %v4697 = vpack.c.b16 %v4340, %v4339
        %v4698 = vpack.c.b16 %v4342, %v4341
        %v4699 = vpack.c.b16 %v4344, %v4343
        %v4700 = vpack.c.b16 %v4346, %v4345
        %v4701 = vpack.c.b16 %v4348, %v4347
        %v4702 = vpack.c.b16 %v4350, %v4349
        %v4703 = vpack.c.b16 %v4352, %v4351
        %v4704 = vpack.c.b16 %v4354, %v4353
        %v4705 = vpack.c.b16 %v4356, %v4355
        %v4706 = vpack.c.b16 %v4358, %v4357
        %v4707 = vpack.c.b16 %v4360, %v4359
        %v4708 = vpack.c.b16 %v4362, %v4361
        %v4709 = vpack.c.b16 %v4364, %v4363
        %v4710 = vpack.c.b16 %v4366, %v4365
        %v4711 = vpack.c.b16 %v4368, %v4367
        %v4712 = vpack.c.b16 %v4370, %v4369
        %v4713 = vpack.c.b16 %v4372, %v4371
        %v4714 = vpack.c.b16 %v4374, %v4373
        %v4715 = vpack.c.b16 %v4376, %v4375
        %v4716 = vpack.c.b16 %v4378, %v4377
        %v4717 = vpack.c.b16 %v4380, %v4379
        %v4718 = vpack.c.b16 %v4382, %v4381
        %v4719 = vpack.c.b16 %v4384, %v4383
        %v4720 = vpack.c.b16 %v4386, %v4385
        %v4721 = vpack.c.b16 %v4388, %v4387
        %v4722 = vpack.c.b16 %v4390, %v4389
        %v4723 = vpack.c.b16 %v4392, %v4391
        %v4724 = vpack.c.b16 %v4394, %v4393
        %v4725 = vpack.c.b16 %v4396, %v4395
        %v4726 = vpack.c.b16 %v4398, %v4397
        %v4727 = vpack.c.b16 %v4400, %v4399
        %v4728 = vpack.c.b16 %v4402, %v4401
        %v4729 = vpack.c.b16 %v4404, %v4403
        %v4730 = vpack.c.b16 %v4406, %v4405
        %v4731 = vpack.c.b16 %v4408, %v4407
        %v4732 = vpack.c.b16 %v4410, %v4409
        %v4733 = vpack.c.b16 %v4412, %v4411
        %v4734 = vpack.c.b16 %v4414, %v4413
        %v4735 = vpack.c.b16 %v4416, %v4415
        %v4736 = vpack.c.b16 %v4418, %v4417
        %v4737 = vpack.c.b16 %v4420, %v4419
        %v4738 = vpack.c.b16 %v4422, %v4421
        %v4739 = vpack.c.b16 %v4424, %v4423
        %v4740 = vpack.c.b16 %v4426, %v4425
        %v4741 = vpack.c.b16 %v4428, %v4427
        %v4742 = vpack.c.b16 %v4430, %v4429
        %v4743 = vpack.c.b16 %v4432, %v4431
        %v4744 = vpack.c.b16 %v4434, %v4433
        %v4745 = vpack.c.b16 %v4436, %v4435
        %v4746 = vpack.c.b16 %v4438, %v4437
        %v4747 = vpack.c.b16 %v4440, %v4439
        %v4748 = vpack.c.b16 %v4442, %v4441
        %v4749 = vpack.c.b16 %v4444, %v4443
        %v4750 = vpack.c.b16 %v4446, %v4445
        %v4751 = vpack.c.b16 %v4448, %v4447
        %v4752 = vpack.c.b16 %v4450, %v4449
        %v4753 = vpack.c.b16 %v4452, %v4451
        %v4754 = vpack.c.b16 %v4454, %v4453
        %v4755 = vpack.c.b16 %v4456, %v4455
        %v4756 = vpack.c.b16 %v4458, %v4457
        %v4757 = vpack.c.b16 %v4460, %v4459
        %v4758 = vpack.c.b16 %v4462, %v4461
        %v4759 = vpack.c.b16 %v4464, %v4463
        %v4760 = vpack.c.b16 %v4466, %v4465
        %v4761 = vpack.c.b16 %v4468, %v4467
        %v4762 = vpack.c.b16 %v4470, %v4469
        %v4763 = vpack.c.b16 %v4472, %v4471
        %v4764 = vpack.c.b16 %v4474, %v4473
        %v4765 = vpack.c.b16 %v4476, %v4475
        %v4766 = vpack.c.b16 %v4478, %v4477
        %v4767 = vpack.c.b16 %v4480, %v4479
        %v4768 = vpack.c.b16 %v4482, %v4481
        %v4769 = vpack.c.b16 %v4484, %v4483
        %v4770 = vpack.c.b16 %v4486, %v4485
        %v4771 = vpack.c.b16 %v4488, %v4487
        %v4772 = vpack.c.b16 %v4490, %v4489
        %v4773 = vpack.c.b16 %v4492, %v4491
        %v4774 = vpack.c.b16 %v4494, %v4493
        %v4775 = vpack.c.b16 %v4496, %v4495
        %v4776 = vpack.c.b16 %v4498, %v4497
        %v4777 = vpack.c.b16 %v4500, %v4499
        %v4778 = vpack.c.b16 %v4502, %v4501
        %v4779 = vpack.c.b16 %v4504, %v4503
        %v4780 = vpack.c.b16 %v4506, %v4505
        %v4781 = vpack.c.b16 %v4508, %v4507
        %v4782 = vpack.c.b16 %v4510, %v4509
        %v4783 = vpack.c.b16 %v4512, %v4511
        %v4784 = vpack.c.b16 %v4514, %v4513
        %v4785 = vpack.c.b16 %v4516, %v4515
        %v4786 = vpack.c.b16 %v4518, %v4517
        %v4787 = vpack.c.b16 %v4520, %v4519
        %v4788 = vpack.c.b16 %v4522, %v4521
        %v4789 = vpack.c.b16 %v4524, %v4523
        %v4790 = vpack.c.b16 %v4526, %v4525
        %v4791 = vpack.c.b16 %v4528, %v4527
        %v4792 = vpack.c.b16 %v4530, %v4529
        %v4793 = vpack.c.b16 %v4532, %v4531
        %v4794 = vpack.c.b16 %v4534, %v4533
        %v4795 = vpack.c.b16 %v4536, %v4535
        %v4796 = vpack.c.b16 %v4538, %v4537
        %v4797 = vpack.c.b16 %v4540, %v4539
        %v4798 = vpack.c.b16 %v4542, %v4541
        %v4799 = vpack.c.b16 %v4544, %v4543
        %v4800 = vpack.c.b16 %v4546, %v4545
        %v4801 = vpack.c.b16 %v4548, %v4547
        %v4802 = vpack.c.b16 %v4550, %v4549
        %v4803 = vpack.c.b16 %v4552, %v4551
        %v4804 = vpack.c.b16 %v4554, %v4553
        %v4805 = vpack.c.b16 %v4556, %v4555
        %v4806 = vpack.c.b16 %v4558, %v4557
        %v4807 = vpack.c.b16 %v4560, %v4559
        %v4808 = vpack.c.b16 %v4562, %v4561
        %v4809 = vpack.c.b16 %v4564, %v4563
        %v4810 = vpack.c.b16 %v4566, %v4565
        %v4811 = vpack.c.b16 %v4568, %v4567
        %v4812 = vpack.c.b16 %v4570, %v4569
        %v4813 = vpack.c.b16 %v4572, %v4571
        %v4814 = vpack.c.b16 %v4574, %v4573
        %v4815 = vpack.c.b16 %v4576, %v4575
        %v4816 = vpack.c.b16 %v4578, %v4577
        %v4817 = vpack.c.b16 %v4580, %v4579
        %v4818 = vpack.c.b16 %v4582, %v4581
        %v4819 = vpack.c.b16 %v4584, %v4583
        %v4820 = vpack.c.b16 %v4586, %v4585
        %v4821 = vpack.c.b16 %v4588, %v4587
        %v4822 = vpack.c.b16 %v4590, %v4589
        %v4823 = vpack.c.b16 %v4592, %v4591
        %v4824 = vpack.c.b16 %v4594, %v4593
        %v4825 = vpack.c.b16 %v4596, %v4595
        %v4826 = vpack.c.b16 %v4598, %v4597
        %v4827 = vpack.c.b16 %v4600, %v4599
        %v4828 = vpack.c.b16 %v4602, %v4601
        %v4829 = vpack.c.b16 %v4604, %v4603
        %v4830 = vpack.c.b16 %v4606, %v4605
        %v4831 = vpack.c.b16 %v4608, %v4607
        %v4832 = vpack.c.b16 %v4610, %v4609
        %v4833 = vpack.c.b16 %v4612, %v4611
        %v4834 = vpack.c.b16 %v4614, %v4613
        %v4835 = vpack.c.b16 %v4616, %v4615
        %v4836 = vpack.c.b16 %v4618, %v4617
        %v4837 = vpack.c.b16 %v4620, %v4619
        %v4838 = vpack.c.b16 %v4622, %v4621
        %v4839 = vpack.c.b16 %v4624, %v4623
        %v4840 = vpack.c.b16 %v4626, %v4625
        %v4841 = vpack.c.b16 %v4628, %v4627
        %v4842 = vpack.c.b16 %v4630, %v4629
        %v4843 = vpack.c.b16 %v4632, %v4631
        %v4844 = vpack.c.b16 %v4634, %v4633
        %v4845 = vpack.c.b16 %v4636, %v4635
        %v4846 = vpack.c.b16 %v4638, %v4637
        %v4847 = vpack.c.b16 %v4640, %v4639
        %v4848 = vpack.c.b16 %v4642, %v4641
        %v4849 = vpack.c.b16 %v4644, %v4643
        %v4850 = vpack.c.b16 %v4646, %v4645
        %v4851 = vpack.c.b16 %v4648, %v4647
        %v4852 = vpack.c.b16 %v4650, %v4649
        %v4853 = vpack.c.b16 %v4652, %v4651
        %v4854 = vpack.c.b16 %v4654, %v4653
        %v4855 = vpack.c.b16 %v4656, %v4655
        %v4856 = vpack.c.b16 %v4658, %v4657
        %v4857 = vpack.c.b16 %v4660, %v4659
        %v4858 = vpack.c.b16 %v4662, %v4661
        %v4859 = vpack.c.b16 %v4664, %v4663
        %v4860 = vpack.c.b16 %v4666, %v4665
        %v4861 = vpack.c.b16 %v4668, %v4667
        %v4862 = vpack.c.b16 %v4670, %v4669
        %5055 = vmatprep.subr.bf16.mxu0 0
        %5056 = vmatpush1.bf16.msra.mxu0 %v4671
        %5057 = vmatprep.subr.bf16.mxu0 0
        %5058 = vmatpush1.bf16.msra.mxu0 %v4672
        %5059 = vmatprep.subr.bf16.mxu0 0
        %5060 = vmatpush1.bf16.msra.mxu0 %v4673
        %5061 = vmatprep.subr.bf16.mxu0 0
        %5062 = vmatpush1.bf16.msra.mxu0 %v4674
        %5063 = vmatprep.subr.bf16.mxu0 0
        %5064 = vmatpush1.bf16.msra.mxu0 %v4675
        %5065 = vmatprep.subr.bf16.mxu0 0
        %5066 = vmatpush1.bf16.msra.mxu0 %v4676
        %5067 = vmatprep.subr.bf16.mxu0 0
        %5068 = vmatpush1.bf16.msra.mxu0 %v4677
        %5069 = vmatprep.subr.bf16.mxu0 0
        %5070 = vmatpush1.bf16.msra.mxu0 %v4678
        %5071 = vmatprep.subr.bf16.mxu0 0
        %5072 = vmatpush1.bf16.msra.mxu0 %v4679
        %5073 = vmatprep.subr.bf16.mxu0 0
        %5074 = vmatpush1.bf16.msra.mxu0 %v4680
        %5075 = vmatprep.subr.bf16.mxu0 0
        %5076 = vmatpush1.bf16.msra.mxu0 %v4681
        %5077 = vmatprep.subr.bf16.mxu0 0
        %5078 = vmatpush1.bf16.msra.mxu0 %v4682
        %5079 = vmatprep.subr.bf16.mxu0 0
        %5080 = vmatpush1.bf16.msra.mxu0 %v4683
        %5081 = vmatprep.subr.bf16.mxu0 0
        %5082 = vmatpush1.bf16.msra.mxu0 %v4684
        %5083 = vmatprep.subr.bf16.mxu0 0
        %5084 = vmatpush1.bf16.msra.mxu0 %v4685
        %5085 = vmatprep.subr.bf16.mxu0 0
        %5086 = vmatpush1.bf16.msra.mxu0 %v4686
        %5087 = vmatprep.mubr.bf16.mxu0 %v3495
        %5088 = vmatmul.mubr.bf16.gmra.mrb[0].mxu0 %v3494
        %v5089 = vpop.f32.mrb[0].mxu0
        %v5090 = vadd.f32 %v3902, %v5089
        %v5091 = vpop.f32.mrb[0].mxu0
        %v5092 = vpop.f32.mrb[0].mxu0
        %v5093 = vpop.f32.mrb[0].mxu0
        %5094 = vdwg.mxu0
        %5095 = vmatprep.subr.bf16.mxu0 0
        %5096 = vmatpush1.bf16.msra.mxu0 %v4687
        %5097 = vmatprep.subr.bf16.mxu0 0
        %5098 = vmatpush1.bf16.msra.mxu0 %v4688
        %5099 = vmatprep.subr.bf16.mxu0 0
        %5100 = vmatpush1.bf16.msra.mxu0 %v4689
        %5101 = vmatprep.subr.bf16.mxu0 0
        %5102 = vmatpush1.bf16.msra.mxu0 %v4690
        %5103 = vmatprep.subr.bf16.mxu0 0
        %5104 = vmatpush1.bf16.msra.mxu0 %v4691
        %5105 = vmatprep.subr.bf16.mxu0 0
        %5106 = vmatpush1.bf16.msra.mxu0 %v4692
        %5107 = vmatprep.subr.bf16.mxu0 0
        %5108 = vmatpush1.bf16.msra.mxu0 %v4693
        %5109 = vmatprep.subr.bf16.mxu0 0
        %5110 = vmatpush1.bf16.msra.mxu0 %v4694
        %5111 = vmatprep.subr.bf16.mxu0 0
        %5112 = vmatpush1.bf16.msra.mxu0 %v4695
        %5113 = vmatprep.subr.bf16.mxu0 0
        %5114 = vmatpush1.bf16.msra.mxu0 %v4696
        %5115 = vmatprep.subr.bf16.mxu0 0
        %5116 = vmatpush1.bf16.msra.mxu0 %v4697
        %5117 = vmatprep.subr.bf16.mxu0 0
        %5118 = vmatpush1.bf16.msra.mxu0 %v4698
        %5119 = vmatprep.subr.bf16.mxu0 0
        %5120 = vmatpush1.bf16.msra.mxu0 %v4699
        %5121 = vmatprep.subr.bf16.mxu0 0
        %5122 = vmatpush1.bf16.msra.mxu0 %v4700
        %5123 = vmatprep.subr.bf16.mxu0 0
        %5124 = vmatpush1.bf16.msra.mxu0 %v4701
        %5125 = vmatprep.subr.bf16.mxu0 0
        %5126 = vmatpush1.bf16.msra.mxu0 %v4702
        %5127 = vmatprep.mubr.bf16.mxu0 %v3497
        %5128 = vmatmul.mubr.bf16.gmra.mrb[0].mxu0 %v3496
        %v5129 = vpop.f32.mrb[0].mxu0
        %v5130 = vadd.f32 %v5090, %v5129
        %v5131 = vpop.f32.mrb[0].mxu0
        %v5132 = vpop.f32.mrb[0].mxu0
        %v5133 = vpop.f32.mrb[0].mxu0
        %5134 = vdwg.mxu0
        %5135 = vmatprep.subr.bf16.mxu0 0
        %5136 = vmatpush1.bf16.msra.mxu0 %v4703
        %5137 = vmatprep.subr.bf16.mxu0 0
        %5138 = vmatpush1.bf16.msra.mxu0 %v4704
        %5139 = vmatprep.subr.bf16.mxu0 0
        %5140 = vmatpush1.bf16.msra.mxu0 %v4705
        %5141 = vmatprep.subr.bf16.mxu0 0
        %5142 = vmatpush1.bf16.msra.mxu0 %v4706
        %5143 = vmatprep.subr.bf16.mxu0 0
        %5144 = vmatpush1.bf16.msra.mxu0 %v4707
        %5145 = vmatprep.subr.bf16.mxu0 0
        %5146 = vmatpush1.bf16.msra.mxu0 %v4708
        %5147 = vmatprep.subr.bf16.mxu0 0
        %5148 = vmatpush1.bf16.msra.mxu0 %v4709
        %5149 = vmatprep.subr.bf16.mxu0 0
        %5150 = vmatpush1.bf16.msra.mxu0 %v4710
        %5151 = vmatprep.subr.bf16.mxu0 0
        %5152 = vmatpush1.bf16.msra.mxu0 %v4711
        %5153 = vmatprep.subr.bf16.mxu0 0
        %5154 = vmatpush1.bf16.msra.mxu0 %v4712
        %5155 = vmatprep.subr.bf16.mxu0 0
        %5156 = vmatpush1.bf16.msra.mxu0 %v4713
        %5157 = vmatprep.subr.bf16.mxu0 0
        %5158 = vmatpush1.bf16.msra.mxu0 %v4714
        %5159 = vmatprep.subr.bf16.mxu0 0
        %5160 = vmatpush1.bf16.msra.mxu0 %v4715
        %5161 = vmatprep.subr.bf16.mxu0 0
        %5162 = vmatpush1.bf16.msra.mxu0 %v4716
        %5163 = vmatprep.subr.bf16.mxu0 0
        %5164 = vmatpush1.bf16.msra.mxu0 %v4717
        %5165 = vmatprep.subr.bf16.mxu0 0
        %5166 = vmatpush1.bf16.msra.mxu0 %v4718
        %5167 = vmatprep.mubr.bf16.mxu0 %v3499
        %5168 = vmatmul.mubr.bf16.gmra.mrb[0].mxu0 %v3498
        %v5169 = vpop.f32.mrb[0].mxu0
        %v5170 = vadd.f32 %v5130, %v5169
        %v5171 = vpop.f32.mrb[0].mxu0
        %v5172 = vpop.f32.mrb[0].mxu0
        %v5173 = vpop.f32.mrb[0].mxu0
        %5174 = vdwg.mxu0
        %5175 = vmatprep.subr.bf16.mxu0 0
        %5176 = vmatpush1.bf16.msra.mxu0 %v4719
        %5177 = vmatprep.subr.bf16.mxu0 0
        %5178 = vmatpush1.bf16.msra.mxu0 %v4720
        %5179 = vmatprep.subr.bf16.mxu0 0
        %5180 = vmatpush1.bf16.msra.mxu0 %v4721
        %5181 = vmatprep.subr.bf16.mxu0 0
        %5182 = vmatpush1.bf16.msra.mxu0 %v4722
        %5183 = vmatprep.subr.bf16.mxu0 0
        %5184 = vmatpush1.bf16.msra.mxu0 %v4723
        %5185 = vmatprep.subr.bf16.mxu0 0
        %5186 = vmatpush1.bf16.msra.mxu0 %v4724
        %5187 = vmatprep.subr.bf16.mxu0 0
        %5188 = vmatpush1.bf16.msra.mxu0 %v4725
        %5189 = vmatprep.subr.bf16.mxu0 0
        %5190 = vmatpush1.bf16.msra.mxu0 %v4726
        %5191 = vmatprep.subr.bf16.mxu0 0
        %5192 = vmatpush1.bf16.msra.mxu0 %v4727
        %5193 = vmatprep.subr.bf16.mxu0 0
        %5194 = vmatpush1.bf16.msra.mxu0 %v4728
        %5195 = vmatprep.subr.bf16.mxu0 0
        %5196 = vmatpush1.bf16.msra.mxu0 %v4729
        %5197 = vmatprep.subr.bf16.mxu0 0
        %5198 = vmatpush1.bf16.msra.mxu0 %v4730
        %5199 = vmatprep.subr.bf16.mxu0 0
        %5200 = vmatpush1.bf16.msra.mxu0 %v4731
        %5201 = vmatprep.subr.bf16.mxu0 0
        %5202 = vmatpush1.bf16.msra.mxu0 %v4732
        %5203 = vmatprep.subr.bf16.mxu0 0
        %5204 = vmatpush1.bf16.msra.mxu0 %v4733
        %5205 = vmatprep.subr.bf16.mxu0 0
        %5206 = vmatpush1.bf16.msra.mxu0 %v4734
        %5207 = vmatprep.mubr.bf16.mxu0 %v3501
        %5208 = vmatmul.mubr.bf16.gmra.mrb[0].mxu0 %v3500
        %v5209 = vpop.f32.mrb[0].mxu0
        %v5210 = vadd.f32 %v5170, %v5209
        %v5211 = vpop.f32.mrb[0].mxu0
        %v5212 = vpop.f32.mrb[0].mxu0
        %v5213 = vpop.f32.mrb[0].mxu0
        %5214 = vdwg.mxu0
        %5215 = vmatprep.subr.bf16.mxu0 0
        %5216 = vmatpush1.bf16.msra.mxu0 %v4735
        %5217 = vmatprep.subr.bf16.mxu0 0
        %5218 = vmatpush1.bf16.msra.mxu0 %v4736
        %5219 = vmatprep.subr.bf16.mxu0 0
        %5220 = vmatpush1.bf16.msra.mxu0 %v4737
        %5221 = vmatprep.subr.bf16.mxu0 0
        %5222 = vmatpush1.bf16.msra.mxu0 %v4738
        %5223 = vmatprep.subr.bf16.mxu0 0
        %5224 = vmatpush1.bf16.msra.mxu0 %v4739
        %5225 = vmatprep.subr.bf16.mxu0 0
        %5226 = vmatpush1.bf16.msra.mxu0 %v4740
        %5227 = vmatprep.subr.bf16.mxu0 0
        %5228 = vmatpush1.bf16.msra.mxu0 %v4741
        %5229 = vmatprep.subr.bf16.mxu0 0
        %5230 = vmatpush1.bf16.msra.mxu0 %v4742
        %5231 = vmatprep.subr.bf16.mxu0 0
        %5232 = vmatpush1.bf16.msra.mxu0 %v4743
        %5233 = vmatprep.subr.bf16.mxu0 0
        %5234 = vmatpush1.bf16.msra.mxu0 %v4744
        %5235 = vmatprep.subr.bf16.mxu0 0
        %5236 = vmatpush1.bf16.msra.mxu0 %v4745
        %5237 = vmatprep.subr.bf16.mxu0 0
        %5238 = vmatpush1.bf16.msra.mxu0 %v4746
        %5239 = vmatprep.subr.bf16.mxu0 0
        %5240 = vmatpush1.bf16.msra.mxu0 %v4747
        %5241 = vmatprep.subr.bf16.mxu0 0
        %5242 = vmatpush1.bf16.msra.mxu0 %v4748
        %5243 = vmatprep.subr.bf16.mxu0 0
        %5244 = vmatpush1.bf16.msra.mxu0 %v4749
        %5245 = vmatprep.subr.bf16.mxu0 0
        %5246 = vmatpush1.bf16.msra.mxu0 %v4750
        %5247 = vmatprep.mubr.bf16.mxu0 %v3503
        %5248 = vmatmul.mubr.bf16.gmra.mrb[0].mxu0 %v3502
        %v5249 = vpop.f32.mrb[0].mxu0
        %v5250 = vadd.f32 %v5210, %v5249
        %v5251 = vpop.f32.mrb[0].mxu0
        %v5252 = vpop.f32.mrb[0].mxu0
        %v5253 = vpop.f32.mrb[0].mxu0
        %5254 = vdwg.mxu0
        %5255 = vmatprep.subr.bf16.mxu0 0
        %5256 = vmatpush1.bf16.msra.mxu0 %v4751
        %5257 = vmatprep.subr.bf16.mxu0 0
        %5258 = vmatpush1.bf16.msra.mxu0 %v4752
        %5259 = vmatprep.subr.bf16.mxu0 0
        %5260 = vmatpush1.bf16.msra.mxu0 %v4753
        %5261 = vmatprep.subr.bf16.mxu0 0
        %5262 = vmatpush1.bf16.msra.mxu0 %v4754
        %5263 = vmatprep.subr.bf16.mxu0 0
        %5264 = vmatpush1.bf16.msra.mxu0 %v4755
        %5265 = vmatprep.subr.bf16.mxu0 0
        %5266 = vmatpush1.bf16.msra.mxu0 %v4756
        %5267 = vmatprep.subr.bf16.mxu0 0
        %5268 = vmatpush1.bf16.msra.mxu0 %v4757
        %5269 = vmatprep.subr.bf16.mxu0 0
        %5270 = vmatpush1.bf16.msra.mxu0 %v4758
        %5271 = vmatprep.subr.bf16.mxu0 0
        %5272 = vmatpush1.bf16.msra.mxu0 %v4759
        %5273 = vmatprep.subr.bf16.mxu0 0
        %5274 = vmatpush1.bf16.msra.mxu0 %v4760
        %5275 = vmatprep.subr.bf16.mxu0 0
        %5276 = vmatpush1.bf16.msra.mxu0 %v4761
        %5277 = vmatprep.subr.bf16.mxu0 0
        %5278 = vmatpush1.bf16.msra.mxu0 %v4762
        %5279 = vmatprep.subr.bf16.mxu0 0
        %5280 = vmatpush1.bf16.msra.mxu0 %v4763
        %5281 = vmatprep.subr.bf16.mxu0 0
        %5282 = vmatpush1.bf16.msra.mxu0 %v4764
        %5283 = vmatprep.subr.bf16.mxu0 0
        %5284 = vmatpush1.bf16.msra.mxu0 %v4765
        %5285 = vmatprep.subr.bf16.mxu0 0
        %5286 = vmatpush1.bf16.msra.mxu0 %v4766
        %5287 = vmatprep.mubr.bf16.mxu0 %v3505
        %5288 = vmatmul.mubr.bf16.gmra.mrb[0].mxu0 %v3504
        %v5289 = vpop.f32.mrb[0].mxu0
        %v5290 = vadd.f32 %v5250, %v5289
        %v5291 = vpop.f32.mrb[0].mxu0
        %v5292 = vpop.f32.mrb[0].mxu0
        %v5293 = vpop.f32.mrb[0].mxu0
        %5294 = vdwg.mxu0
        %5295 = vmatprep.subr.bf16.mxu0 0
        %5296 = vmatpush1.bf16.msra.mxu0 %v4767
        %5297 = vmatprep.subr.bf16.mxu0 0
        %5298 = vmatpush1.bf16.msra.mxu0 %v4768
        %5299 = vmatprep.subr.bf16.mxu0 0
        %5300 = vmatpush1.bf16.msra.mxu0 %v4769
        %5301 = vmatprep.subr.bf16.mxu0 0
        %5302 = vmatpush1.bf16.msra.mxu0 %v4770
        %5303 = vmatprep.subr.bf16.mxu0 0
        %5304 = vmatpush1.bf16.msra.mxu0 %v4771
        %5305 = vmatprep.subr.bf16.mxu0 0
        %5306 = vmatpush1.bf16.msra.mxu0 %v4772
        %5307 = vmatprep.subr.bf16.mxu0 0
        %5308 = vmatpush1.bf16.msra.mxu0 %v4773
        %5309 = vmatprep.subr.bf16.mxu0 0
        %5310 = vmatpush1.bf16.msra.mxu0 %v4774
        %5311 = vmatprep.subr.bf16.mxu0 0
        %5312 = vmatpush1.bf16.msra.mxu0 %v4775
        %5313 = vmatprep.subr.bf16.mxu0 0
        %5314 = vmatpush1.bf16.msra.mxu0 %v4776
        %5315 = vmatprep.subr.bf16.mxu0 0
        %5316 = vmatpush1.bf16.msra.mxu0 %v4777
        %5317 = vmatprep.subr.bf16.mxu0 0
        %5318 = vmatpush1.bf16.msra.mxu0 %v4778
        %5319 = vmatprep.subr.bf16.mxu0 0
        %5320 = vmatpush1.bf16.msra.mxu0 %v4779
        %5321 = vmatprep.subr.bf16.mxu0 0
        %5322 = vmatpush1.bf16.msra.mxu0 %v4780
        %5323 = vmatprep.subr.bf16.mxu0 0
        %5324 = vmatpush1.bf16.msra.mxu0 %v4781
        %5325 = vmatprep.subr.bf16.mxu0 0
        %5326 = vmatpush1.bf16.msra.mxu0 %v4782
        %5327 = vmatprep.mubr.bf16.mxu0 %v3507
        %5328 = vmatmul.mubr.bf16.gmra.mrb[0].mxu0 %v3506
        %v5329 = vpop.f32.mrb[0].mxu0
        %v5330 = vadd.f32 %v5290, %v5329
        %v5331 = vpop.f32.mrb[0].mxu0
        %v5332 = vpop.f32.mrb[0].mxu0
        %v5333 = vpop.f32.mrb[0].mxu0
        %5334 = vdwg.mxu0
        %5335 = vmatprep.subr.bf16.mxu0 0
        %5336 = vmatpush1.bf16.msra.mxu0 %v4783
        %5337 = vmatprep.subr.bf16.mxu0 0
        %5338 = vmatpush1.bf16.msra.mxu0 %v4784
        %5339 = vmatprep.subr.bf16.mxu0 0
        %5340 = vmatpush1.bf16.msra.mxu0 %v4785
        %5341 = vmatprep.subr.bf16.mxu0 0
        %5342 = vmatpush1.bf16.msra.mxu0 %v4786
        %5343 = vmatprep.subr.bf16.mxu0 0
        %5344 = vmatpush1.bf16.msra.mxu0 %v4787
        %5345 = vmatprep.subr.bf16.mxu0 0
        %5346 = vmatpush1.bf16.msra.mxu0 %v4788
        %5347 = vmatprep.subr.bf16.mxu0 0
        %5348 = vmatpush1.bf16.msra.mxu0 %v4789
        %5349 = vmatprep.subr.bf16.mxu0 0
        %5350 = vmatpush1.bf16.msra.mxu0 %v4790
        %5351 = vmatprep.subr.bf16.mxu0 0
        %5352 = vmatpush1.bf16.msra.mxu0 %v4791
        %5353 = vmatprep.subr.bf16.mxu0 0
        %5354 = vmatpush1.bf16.msra.mxu0 %v4792
        %5355 = vmatprep.subr.bf16.mxu0 0
        %5356 = vmatpush1.bf16.msra.mxu0 %v4793
        %5357 = vmatprep.subr.bf16.mxu0 0
        %5358 = vmatpush1.bf16.msra.mxu0 %v4794
        %5359 = vmatprep.subr.bf16.mxu0 0
        %5360 = vmatpush1.bf16.msra.mxu0 %v4795
        %5361 = vmatprep.subr.bf16.mxu0 0
        %5362 = vmatpush1.bf16.msra.mxu0 %v4796
        %5363 = vmatprep.subr.bf16.mxu0 0
        %5364 = vmatpush1.bf16.msra.mxu0 %v4797
        %5365 = vmatprep.subr.bf16.mxu0 0
        %5366 = vmatpush1.bf16.msra.mxu0 %v4798
        %5367 = vmatprep.mubr.bf16.mxu0 %v3509
        %5368 = vmatmul.mubr.bf16.gmra.mrb[0].mxu0 %v3508
        %v5369 = vpop.f32.mrb[0].mxu0
        %v5370 = vadd.f32 %v5330, %v5369
        %v5371 = vpop.f32.mrb[0].mxu0
        %v5372 = vpop.f32.mrb[0].mxu0
        %v5373 = vpop.f32.mrb[0].mxu0
        %5374 = vdwg.mxu0
        %5375 = vmatprep.subr.bf16.mxu0 0
        %5376 = vmatpush1.bf16.msra.mxu0 %v4799
        %5377 = vmatprep.subr.bf16.mxu0 0
        %5378 = vmatpush1.bf16.msra.mxu0 %v4800
        %5379 = vmatprep.subr.bf16.mxu0 0
        %5380 = vmatpush1.bf16.msra.mxu0 %v4801
        %5381 = vmatprep.subr.bf16.mxu0 0
        %5382 = vmatpush1.bf16.msra.mxu0 %v4802
        %5383 = vmatprep.subr.bf16.mxu0 0
        %5384 = vmatpush1.bf16.msra.mxu0 %v4803
        %5385 = vmatprep.subr.bf16.mxu0 0
        %5386 = vmatpush1.bf16.msra.mxu0 %v4804
        %5387 = vmatprep.subr.bf16.mxu0 0
        %5388 = vmatpush1.bf16.msra.mxu0 %v4805
        %5389 = vmatprep.subr.bf16.mxu0 0
        %5390 = vmatpush1.bf16.msra.mxu0 %v4806
        %5391 = vmatprep.subr.bf16.mxu0 0
        %5392 = vmatpush1.bf16.msra.mxu0 %v4807
        %5393 = vmatprep.subr.bf16.mxu0 0
        %5394 = vmatpush1.bf16.msra.mxu0 %v4808
        %5395 = vmatprep.subr.bf16.mxu0 0
        %5396 = vmatpush1.bf16.msra.mxu0 %v4809
        %5397 = vmatprep.subr.bf16.mxu0 0
        %5398 = vmatpush1.bf16.msra.mxu0 %v4810
        %5399 = vmatprep.subr.bf16.mxu0 0
        %5400 = vmatpush1.bf16.msra.mxu0 %v4811
        %5401 = vmatprep.subr.bf16.mxu0 0
        %5402 = vmatpush1.bf16.msra.mxu0 %v4812
        %5403 = vmatprep.subr.bf16.mxu0 0
        %5404 = vmatpush1.bf16.msra.mxu0 %v4813
        %5405 = vmatprep.subr.bf16.mxu0 0
        %5406 = vmatpush1.bf16.msra.mxu0 %v4814
        %5407 = vmatprep.mubr.bf16.mxu0 %v3511
        %5408 = vmatmul.mubr.bf16.gmra.mrb[0].mxu0 %v3510
        %v5409 = vpop.f32.mrb[0].mxu0
        %v5410 = vadd.f32 %v5370, %v5409
        %v5411 = vpop.f32.mrb[0].mxu0
        %v5412 = vpop.f32.mrb[0].mxu0
        %v5413 = vpop.f32.mrb[0].mxu0
        %5414 = vdwg.mxu0
        %5415 = vmatprep.subr.bf16.mxu0 0
        %5416 = vmatpush1.bf16.msra.mxu0 %v4815
        %5417 = vmatprep.subr.bf16.mxu0 0
        %5418 = vmatpush1.bf16.msra.mxu0 %v4816
        %5419 = vmatprep.subr.bf16.mxu0 0
        %5420 = vmatpush1.bf16.msra.mxu0 %v4817
        %5421 = vmatprep.subr.bf16.mxu0 0
        %5422 = vmatpush1.bf16.msra.mxu0 %v4818
        %5423 = vmatprep.subr.bf16.mxu0 0
        %5424 = vmatpush1.bf16.msra.mxu0 %v4819
        %5425 = vmatprep.subr.bf16.mxu0 0
        %5426 = vmatpush1.bf16.msra.mxu0 %v4820
        %5427 = vmatprep.subr.bf16.mxu0 0
        %5428 = vmatpush1.bf16.msra.mxu0 %v4821
        %5429 = vmatprep.subr.bf16.mxu0 0
        %5430 = vmatpush1.bf16.msra.mxu0 %v4822
        %5431 = vmatprep.subr.bf16.mxu0 0
        %5432 = vmatpush1.bf16.msra.mxu0 %v4823
        %5433 = vmatprep.subr.bf16.mxu0 0
        %5434 = vmatpush1.bf16.msra.mxu0 %v4824
        %5435 = vmatprep.subr.bf16.mxu0 0
        %5436 = vmatpush1.bf16.msra.mxu0 %v4825
        %5437 = vmatprep.subr.bf16.mxu0 0
        %5438 = vmatpush1.bf16.msra.mxu0 %v4826
        %5439 = vmatprep.subr.bf16.mxu0 0
        %5440 = vmatpush1.bf16.msra.mxu0 %v4827
        %5441 = vmatprep.subr.bf16.mxu0 0
        %5442 = vmatpush1.bf16.msra.mxu0 %v4828
        %5443 = vmatprep.subr.bf16.mxu0 0
        %5444 = vmatpush1.bf16.msra.mxu0 %v4829
        %5445 = vmatprep.subr.bf16.mxu0 0
        %5446 = vmatpush1.bf16.msra.mxu0 %v4830
        %5447 = vmatprep.mubr.bf16.mxu0 %v3513
        %5448 = vmatmul.mubr.bf16.gmra.mrb[0].mxu0 %v3512
        %v5449 = vpop.f32.mrb[0].mxu0
        %v5450 = vadd.f32 %v5410, %v5449
        %v5451 = vpop.f32.mrb[0].mxu0
        %v5452 = vpop.f32.mrb[0].mxu0
        %v5453 = vpop.f32.mrb[0].mxu0
        %5454 = vdwg.mxu0
        %5455 = vmatprep.subr.bf16.mxu0 0
        %5456 = vmatpush1.bf16.msra.mxu0 %v4831
        %5457 = vmatprep.subr.bf16.mxu0 0
        %5458 = vmatpush1.bf16.msra.mxu0 %v4832
        %5459 = vmatprep.subr.bf16.mxu0 0
        %5460 = vmatpush1.bf16.msra.mxu0 %v4833
        %5461 = vmatprep.subr.bf16.mxu0 0
        %5462 = vmatpush1.bf16.msra.mxu0 %v4834
        %5463 = vmatprep.subr.bf16.mxu0 0
        %5464 = vmatpush1.bf16.msra.mxu0 %v4835
        %5465 = vmatprep.subr.bf16.mxu0 0
        %5466 = vmatpush1.bf16.msra.mxu0 %v4836
        %5467 = vmatprep.subr.bf16.mxu0 0
        %5468 = vmatpush1.bf16.msra.mxu0 %v4837
        %5469 = vmatprep.subr.bf16.mxu0 0
        %5470 = vmatpush1.bf16.msra.mxu0 %v4838
        %5471 = vmatprep.subr.bf16.mxu0 0
        %5472 = vmatpush1.bf16.msra.mxu0 %v4839
        %5473 = vmatprep.subr.bf16.mxu0 0
        %5474 = vmatpush1.bf16.msra.mxu0 %v4840
        %5475 = vmatprep.subr.bf16.mxu0 0
        %5476 = vmatpush1.bf16.msra.mxu0 %v4841
        %5477 = vmatprep.subr.bf16.mxu0 0
        %5478 = vmatpush1.bf16.msra.mxu0 %v4842
        %5479 = vmatprep.subr.bf16.mxu0 0
        %5480 = vmatpush1.bf16.msra.mxu0 %v4843
        %5481 = vmatprep.subr.bf16.mxu0 0
        %5482 = vmatpush1.bf16.msra.mxu0 %v4844
        %5483 = vmatprep.subr.bf16.mxu0 0
        %5484 = vmatpush1.bf16.msra.mxu0 %v4845
        %5485 = vmatprep.subr.bf16.mxu0 0
        %5486 = vmatpush1.bf16.msra.mxu0 %v4846
        %5487 = vmatprep.mubr.bf16.mxu0 %v3515
        %5488 = vmatmul.mubr.bf16.gmra.mrb[0].mxu0 %v3514
        %v5489 = vpop.f32.mrb[0].mxu0
        %v5490 = vadd.f32 %v5450, %v5489
        %v5491 = vpop.f32.mrb[0].mxu0
        %v5492 = vpop.f32.mrb[0].mxu0
        %v5493 = vpop.f32.mrb[0].mxu0
        %5494 = vdwg.mxu0
        %5495 = vmatprep.subr.bf16.mxu0 0
        %5496 = vmatpush1.bf16.msra.mxu0 %v4847
        %5497 = vmatprep.subr.bf16.mxu0 0
        %5498 = vmatpush1.bf16.msra.mxu0 %v4848
        %5499 = vmatprep.subr.bf16.mxu0 0
        %5500 = vmatpush1.bf16.msra.mxu0 %v4849
        %5501 = vmatprep.subr.bf16.mxu0 0
        %5502 = vmatpush1.bf16.msra.mxu0 %v4850
        %5503 = vmatprep.subr.bf16.mxu0 0
        %5504 = vmatpush1.bf16.msra.mxu0 %v4851
        %5505 = vmatprep.subr.bf16.mxu0 0
        %5506 = vmatpush1.bf16.msra.mxu0 %v4852
        %5507 = vmatprep.subr.bf16.mxu0 0
        %5508 = vmatpush1.bf16.msra.mxu0 %v4853
        %5509 = vmatprep.subr.bf16.mxu0 0
        %5510 = vmatpush1.bf16.msra.mxu0 %v4854
        %5511 = vmatprep.subr.bf16.mxu0 0
        %5512 = vmatpush1.bf16.msra.mxu0 %v4855
        %5513 = vmatprep.subr.bf16.mxu0 0
        %5514 = vmatpush1.bf16.msra.mxu0 %v4856
        %5515 = vmatprep.subr.bf16.mxu0 0
        %5516 = vmatpush1.bf16.msra.mxu0 %v4857
        %5517 = vmatprep.subr.bf16.mxu0 0
        %5518 = vmatpush1.bf16.msra.mxu0 %v4858
        %5519 = vmatprep.subr.bf16.mxu0 0
        %5520 = vmatpush1.bf16.msra.mxu0 %v4859
        %5521 = vmatprep.subr.bf16.mxu0 0
        %5522 = vmatpush1.bf16.msra.mxu0 %v4860
        %5523 = vmatprep.subr.bf16.mxu0 0
        %5524 = vmatpush1.bf16.msra.mxu0 %v4861
        %5525 = vmatprep.subr.bf16.mxu0 0
        %5526 = vmatpush1.bf16.msra.mxu0 %v4862
        %5527 = vmatprep.mubr.bf16.mxu0 %v3517
        %5528 = vmatmul.mubr.bf16.gmra.mrb[0].mxu0 %v3516
        %v5529 = vpop.f32.mrb[0].mxu0
        %v5530 = vadd.f32 %v5490, %v5529
        %v5531 = vpop.f32.mrb[0].mxu0
        %v5532 = vpop.f32.mrb[0].mxu0
        %v5533 = vpop.f32.mrb[0].mxu0
        %5534 = vdwg.mxu0
        %5535 = vst [vmem:[%s420] sm:$0x1] %v5530
        %s5536 = sand.u32 %s292, 1
        %s5537 = scalar_lea.sflag [#allocation7], %s5536
        %s5538 = sand.u32 %s292, 1
        %s5539 = scalar_lea.vmem [#allocation8], %s5538
        // Predicated region
        $region73: #{tpu_custom_call.1} parent=67 // pred_check
          %p5540 = pneg %p302
        $region74: #{tpu_custom_call.1} parent=67 // pred_check_branch
          %5542 = sbr.rel (%p5540) target = $region76
        $region75: #{tpu_custom_call.1} parent=67 // pred_region
          %s5544 = ssub.s32 16, 16
          %5545 = vsyncadd %s5537, %s5544
          %s5546 = smul.addr %s27, 16
          %s5547 = scalar_lea.hbm %s12, %s5546
          %s5549 = sshll.u32 %s5539, 4
          %s5550 = int_to_ptr.vmem [resolvable:$true] %s5549
          %5552 = dma.vmem_to_hbm [thread:$0]  %s5550, 16, %s5547, %s5537
        $region76: #{tpu_custom_call.1} parent=67 // pred_fallthru
          _
      $region68: #{tpu_custom_call.1} parent=5 // pred_fallthru
        _
      %p5553 = scmp.le.s32.totalorder 2, %s22
      // Predicated region
      $region77: #{tpu_custom_call.1} parent=5 // pred_check
        %p5554 = pneg %p5553
      $region78: #{tpu_custom_call.1} parent=5 // pred_check_branch
        %5556 = sbr.rel (%p5554) target = $region80
      $region79: #{tpu_custom_call.1} parent=5 // pred_region
        %s5557 = ssub.s32 %s22, 2
        // Predicated region
        $region81: #{tpu_custom_call.1} parent=79 // pred_check
          %p5558 = pneg %p308
        $region82: #{tpu_custom_call.1} parent=79 // pred_check_branch
          %5560 = sbr.rel (%p5558) target = $region84
        $region83: #{tpu_custom_call.1} parent=79 // pred_region
          %s5561 = sand.u32 %s293, 1
          %s5562 = scalar_lea.sflag [#allocation7], %s5561
          %s5563 = sand.u32 %s293, 1
          %s5564 = scalar_lea.vmem [#allocation8], %s5563
          %5565 = dma.done %s5562, 16
        $region84: #{tpu_custom_call.1} parent=79 // pred_fallthru
          _
      $region80: #{tpu_custom_call.1} parent=5 // pred_fallthru
        _
    $region6: #{tpu_custom_call.1} parent=1 // loop_footer
      %s26 = sadd.s32 1, %s22
    $region7: #{tpu_custom_call.1} parent=1 // loop_footer_branch
      %21 = sbr.rel target = $region3
    $region8: #{tpu_custom_call.1} parent=1 // loop_exit
      _
    %5566 = vsyncpa [#allocation6], 1
    %s5567 = scalar_lea.sflag [#allocation6], 1
    %5568 = vsyncpa %s5567, 1
    %5569 = vsyncpa [#allocation7], 1
    %s5570 = scalar_lea.sflag [#allocation7], 1
    %5571 = vsyncpa %s5570, 1

</llo_original>
